<compile_context>
chip_gen: v7x
topology: tpu7x:2x2x1
jax: 0.10.0
libtpu: 0.0.40
codegen_flags: <defaults>
</compile_context>

<pallas_src>
import functools

import jax
import jax.numpy as jnp
from jax import lax
from jax.experimental import pallas as pl
from jax.experimental.pallas import tpu as pltpu


CFG = dict(vocab=50, max_pos=16, type_vocab=2, hidden=32, heads=2,
           layers=2, intermediate=64, num_labels=6)
NPAD = 128          # lane-dense classifier output width (zero-padded)
LN_EPS = 1e-12      # BERT layernorm eps


def _round_up(x, m):
    return ((x + m - 1) // m) * m


# ----------------------------------------------------------------------------
# Fused Pallas kernel: one grid step == one batch element, full forward pass.
# ----------------------------------------------------------------------------
def _bert_fused_kernel(ids_ref, tt_ref, mask_ref,
                       wemb_ref, pemb_ref, temb_ref, emb_g_ref, emb_b_ref,
                       wqkv_ref, bqkv_ref, wo_ref, bo_ref,
                       ln1g_ref, ln1b_ref, wi_ref, bi_ref, wf_ref, bf_ref,
                       ln2g_ref, ln2b_ref,
                       poolw_ref, poolb_ref, clsw_ref, clsb_ref,
                       out_ref, *, num_layers, num_heads, eps):
    S = ids_ref.shape[1]
    Vp, H = wemb_ref.shape
    Tp = temb_ref.shape[0]
    Dh = H // num_heads
    scale = 1.0 / float(Dh) ** 0.5

    def layernorm(v, g, b):
        mu = jnp.mean(v, axis=-1, keepdims=True)
        var = jnp.mean(jnp.square(v - mu), axis=-1, keepdims=True)
        return (v - mu) * jax.lax.rsqrt(var + eps) * g + b

    # ---- embeddings: one-hot matmuls on the MXU, entirely in VMEM ----------
    ids = ids_ref[0]                                   # (S, 1) int32
    tts = tt_ref[0]                                    # (S, 1) int32
    word_oh = jnp.where(
        ids == lax.broadcasted_iota(jnp.int32, (S, Vp), 1), 1.0, 0.0)
    type_oh = jnp.where(
        tts == lax.broadcasted_iota(jnp.int32, (S, Tp), 1), 1.0, 0.0)
    x = (jnp.dot(word_oh, wemb_ref[...], preferred_element_type=jnp.float32)
         + pemb_ref[0:S, :]
         + jnp.dot(type_oh, temb_ref[...], preferred_element_type=jnp.float32))

    # Embedding LayerNorm (no residual — zero-residual add eliminated).
    x = layernorm(x, emb_g_ref[...], emb_b_ref[...])

    # Additive attention mask, computed once, shared across heads & layers.
    m = (1.0 - mask_ref[0].astype(jnp.float32)) * -1e9          # (1, S)

    # Static unroll over layers (L=2).  For deep models this would become a
    # lax.fori_loop with dynamic layer indexing into the stacked weight refs.
    for l in range(num_layers):
        # ---- fused QKV projection: one (H, 3H) matmul on the MXU ----
        qkv = jnp.dot(x, wqkv_ref[l],
                      preferred_element_type=jnp.float32) + bqkv_ref[l]
        wo = wo_ref[l]

        # ---- multi-head self-attention, all in VMEM/vregs ----
        # Output projection is folded per head:  ctx @ Wo == sum_h ctx_h @ Wo_h
        attn_acc = jnp.zeros((S, H), jnp.float32)
        for h in range(num_heads):
            q_h = qkv[:, h * Dh:(h + 1) * Dh] * scale             # scale Q, not S
            k_h = qkv[:, H + h * Dh:H + (h + 1) * Dh]             # (S, Dh)
            v_h = qkv[:, 2 * H + h * Dh:2 * H + (h + 1) * Dh]     # (S, Dh)
            s = lax.dot_general(
                q_h, k_h, (((1,), (1,)), ((), ())),
                preferred_element_type=jnp.float32) + m           # (S, S)
            mx = jnp.max(s, axis=-1, keepdims=True)
            e = jnp.exp(s - mx)
            p = e * pl.reciprocal(jnp.sum(e, axis=-1, keepdims=True),
                                  approx=True)                    # EUP vrcp
            ctx_h = jnp.dot(p, v_h, preferred_element_type=jnp.float32)
            attn_acc = attn_acc + jnp.dot(
                ctx_h, wo[h * Dh:(h + 1) * Dh, :],
                preferred_element_type=jnp.float32)
        attn_out = attn_acc + bo_ref[l]

        # ---- residual + LayerNorm 1 ----
        x = layernorm(attn_out + x, ln1g_ref[l], ln1b_ref[l])

        # ---- FFN: up-proj(gelu) + down-proj, intermediate never leaves VMEM ----
        # TODO(synk): HF BERT uses erf-GELU; tanh-approx used for a guaranteed
        # Mosaic lowering (numerically very close).
        inter = jax.nn.gelu(
            jnp.dot(x, wi_ref[l], preferred_element_type=jnp.float32)
            + bi_ref[l],
            approximate=True)
        ffn = jnp.dot(inter, wf_ref[l],
                      preferred_element_type=jnp.float32) + bf_ref[l]

        # ---- residual + LayerNorm 2 ----
        x = layernorm(ffn + x, ln2g_ref[l], ln2b_ref[l])

    # ---- BERT pooler: Linear + tanh on the [CLS] token ----
    cls = x[0:1, :]                                               # (1, H)
    pooled = jnp.tanh(
        jnp.dot(cls, poolw_ref[...], preferred_element_type=jnp.float32)
        + poolb_ref[...])

    # nn.Dropout(0.1) is identity at inference time.
    # ---- classifier Linear + Sigmoid (lane-padded to 128 for unmasked vst) ----
    logits = jnp.dot(pooled, clsw_ref[...],
                     preferred_element_type=jnp.float32) + clsb_ref[...]
    out_ref[0] = jax.nn.sigmoid(logits)


# ----------------------------------------------------------------------------
# Parameter construction (deterministic synthetic init) and packing
# ----------------------------------------------------------------------------
def init_params(key, cfg):
    H, I = cfg["hidden"], cfg["intermediate"]

    def dense(k, fan_in, fan_out):
        return (jax.random.normal(k, (fan_in, fan_out), jnp.float32) * 0.02,
                jnp.zeros((fan_out,), jnp.float32))

    keys = iter(jax.random.split(key, 64))
    params = {
        "word_emb": jax.random.normal(next(keys), (cfg["vocab"], H)) * 0.02,
        "pos_emb": jax.random.normal(next(keys), (cfg["max_pos"], H)) * 0.02,
        "type_emb": jax.random.normal(next(keys), (cfg["type_vocab"], H)) * 0.02,
        "emb_ln_g": jnp.ones((H,), jnp.float32),
        "emb_ln_b": jnp.zeros((H,), jnp.float32),
        "layers": [],
    }
    for _ in range(cfg["layers"]):
        wq, bq = dense(next(keys), H, H)
        wk, bk = dense(next(keys), H, H)
        wv, bv = dense(next(keys), H, H)
        wo, bo = dense(next(keys), H, H)
        wi, bi = dense(next(keys), H, I)
        wf, bf = dense(next(keys), I, H)
        params["layers"].append(dict(
            wq=wq, bq=bq, wk=wk, bk=bk, wv=wv, bv=bv, wo=wo, bo=bo,
            wi=wi, bi=bi, wf=wf, bf=bf,
            ln1_g=jnp.ones((H,), jnp.float32), ln1_b=jnp.zeros((H,), jnp.float32),
            ln2_g=jnp.ones((H,), jnp.float32), ln2_b=jnp.zeros((H,), jnp.float32),
        ))
    params["pool_w"], params["pool_b"] = dense(next(keys), H, H)
    params["cls_w"], params["cls_b"] = dense(next(keys), H, cfg["num_labels"])
    return params


def pack_params(params, cfg):
    """Stack per-layer params; fuse QKV; pad vocab/type tables and classifier."""
    H, NL = cfg["hidden"], cfg["num_labels"]
    ls = params["layers"]
    Vp = _round_up(cfg["vocab"], 8)        # sublane-aligned vocab contraction
    Tp = _round_up(cfg["type_vocab"], 8)

    def stack_mat(name):
        return jnp.stack([l[name] for l in ls])                 # (L, *, *)

    def stack_vec(name):
        return jnp.stack([l[name][None, :] for l in ls])        # (L, 1, *)

    w_qkv = jnp.stack([jnp.concatenate([l["wq"], l["wk"], l["wv"]], axis=1)
                       for l in ls])                            # (L, H, 3H)
    b_qkv = jnp.stack([jnp.concatenate([l["bq"], l["bk"], l["bv"]])[None, :]
                       for l in ls])                            # (L, 1, 3H)
    word_emb = jnp.zeros((Vp, H), jnp.float32).at[:cfg["vocab"]].set(
        params["word_emb"])
    type_emb = jnp.zeros((Tp, H), jnp.float32).at[:cfg["type_vocab"]].set(
        params["type_emb"])
    cls_w = jnp.zeros((H, NPAD), jnp.float32).at[:, :NL].set(params["cls_w"])
    cls_b = jnp.zeros((1, NPAD), jnp.float32).at[:, :NL].set(
        params["cls_b"][None, :])
    return dict(
        word_emb=word_emb, pos_emb=params["pos_emb"], type_emb=type_emb,
        emb_ln_g=params["emb_ln_g"][None, :], emb_ln_b=params["emb_ln_b"][None, :],
        w_qkv=w_qkv, b_qkv=b_qkv,
        w_o=stack_mat("wo"), b_o=stack_vec("bo"),
        ln1_g=stack_vec("ln1_g"), ln1_b=stack_vec("ln1_b"),
        w_i=stack_mat("wi"), b_i=stack_vec("bi"),
        w_f=stack_mat("wf"), b_f=stack_vec("bf"),
        ln2_g=stack_vec("ln2_g"), ln2_b=stack_vec("ln2_b"),
        pool_w=params["pool_w"], pool_b=params["pool_b"][None, :],
        cls_w=cls_w, cls_b=cls_b,
    )


# ----------------------------------------------------------------------------
# Forward pass (matches BertForMultiLabelClassification.forward, labels=None)
# ----------------------------------------------------------------------------
def bert_multilabel_forward(packed, input_ids, attention_mask,
                            token_type_ids=None):
    cfg = CFG
    B, S = input_ids.shape
    H, nH, L, I, NL = (cfg["hidden"], cfg["heads"], cfg["layers"],
                       cfg["intermediate"], cfg["num_labels"])
    Vp = packed["word_emb"].shape[0]
    Tp = packed["type_emb"].shape[0]
    MP = packed["pos_emb"].shape[0]
    if token_type_ids is None:
        token_type_ids = jnp.zeros_like(input_ids)

    # Integer ids/mask go straight into the kernel; the gather happens in VMEM
    # as a one-hot matmul, so no (B,S,H) embedding intermediate touches HBM.
    ids3 = input_ids.astype(jnp.int32).reshape(B, S, 1)
    tt3 = token_type_ids.astype(jnp.int32).reshape(B, S, 1)
    mask3 = attention_mask.astype(jnp.int32).reshape(B, 1, S)

    operands = (
        ids3, tt3, mask3,
        packed["word_emb"], packed["pos_emb"], packed["type_emb"],
        packed["emb_ln_g"], packed["emb_ln_b"],
        packed["w_qkv"], packed["b_qkv"], packed["w_o"], packed["b_o"],
        packed["ln1_g"], packed["ln1_b"], packed["w_i"], packed["b_i"],
        packed["w_f"], packed["b_f"], packed["ln2_g"], packed["ln2_b"],
        packed["pool_w"], packed["pool_b"], packed["cls_w"], packed["cls_b"],
    )

    # Rough cost hint for XLA's scheduler around the custom call.
    flops = B * (2 * S * Vp * H + 2 * S * Tp * H
                 + L * (2 * S * H * 3 * H + 4 * S * S * H
                        + 2 * S * H * H + 4 * S * H * I)
                 + 2 * H * H + 2 * H * NPAD)
    trans = B * (L * (nH * S * S + S * I) + H + NPAD)
    bytes_accessed = 4 * (sum(int(op.size) for op in operands) + B * NPAD)

    per_batch = lambda b: (b, 0, 0)
    shared3 = lambda b: (0, 0, 0)
    shared2 = lambda b: (0, 0)

    in_specs = [
        pl.BlockSpec((1, S, 1), per_batch),            # input_ids
        pl.BlockSpec((1, S, 1), per_batch),            # token_type_ids
        pl.BlockSpec((1, 1, S), per_batch),            # attention_mask
        pl.BlockSpec((Vp, H), shared2),                # word_emb (padded)
        pl.BlockSpec((MP, H), shared2),                # pos_emb
        pl.BlockSpec((Tp, H), shared2),                # type_emb (padded)
        pl.BlockSpec((1, H), shared2),                 # emb_ln_g
        pl.BlockSpec((1, H), shared2),                 # emb_ln_b
        pl.BlockSpec((L, H, 3 * H), shared3),          # w_qkv
        pl.BlockSpec((L, 1, 3 * H), shared3),          # b_qkv
        pl.BlockSpec((L, H, H), shared3),              # w_o
        pl.BlockSpec((L, 1, H), shared3),              # b_o
        pl.BlockSpec((L, 1, H), shared3),              # ln1_g
        pl.BlockSpec((L, 1, H), shared3),              # ln1_b
        pl.BlockSpec((L, H, I), shared3),              # w_i
        pl.BlockSpec((L, 1, I), shared3),              # b_i
        pl.BlockSpec((L, I, H), shared3),              # w_f
        pl.BlockSpec((L, 1, H), shared3),              # b_f
        pl.BlockSpec((L, 1, H), shared3),              # ln2_g
        pl.BlockSpec((L, 1, H), shared3),              # ln2_b
        pl.BlockSpec((H, H), shared2),                 # pool_w
        pl.BlockSpec((1, H), shared2),                 # pool_b
        pl.BlockSpec((H, NPAD), shared2),              # cls_w (padded)
        pl.BlockSpec((1, NPAD), shared2),              # cls_b (padded)
    ]

    out = pl.pallas_call(
        functools.partial(_bert_fused_kernel, num_layers=L,
                          num_heads=nH, eps=LN_EPS),
        out_shape=jax.ShapeDtypeStruct((B, 1, NPAD), jnp.float32),
        grid=(B,),
        in_specs=in_specs,
        out_specs=pl.BlockSpec((1, 1, NPAD), per_batch),
        compiler_params=pltpu.CompilerParams(
            dimension_semantics=("parallel",)),
        cost_estimate=pl.CostEstimate(flops=flops, transcendentals=trans,
                                      bytes_accessed=bytes_accessed),
    )(*operands)

    probs = out[:, 0, :NL]
    return {"logits": probs}


# ----------------------------------------------------------------------------
if __name__ == "__main__":
    key = jax.random.PRNGKey(0)
    kp, kids = jax.random.split(key, 2)

    params = init_params(kp, CFG)
    packed = pack_params(params, CFG)

    B, S = 2, 8
    input_ids = jax.random.randint(kids, (B, S), 0, CFG["vocab"], jnp.int32)
    attention_mask = jnp.ones((B, S), jnp.int32).at[1, 6:].set(0)  # pad tail of row 1
    token_type_ids = jnp.zeros((B, S), jnp.int32)

    fwd = jax.jit(bert_multilabel_forward)
    out = fwd(packed, input_ids, attention_mask, token_type_ids)
    logits = jax.block_until_ready(out["logits"])

    assert logits.shape == (B, CFG["num_labels"])
    assert bool(jnp.all((logits >= 0.0) & (logits <= 1.0)))
    print("KERNEL_OK")
</pallas_src>

<mosaic_0001>
module attributes {stable_mosaic.version = 11 : i64} {
  func.func @_bert_fused_kernel(%arg0: i32, %arg1: memref<1x8x1xi32, #tpu.memory_space<vmem>>, %arg2: memref<1x8x1xi32, #tpu.memory_space<vmem>>, %arg3: memref<1x1x8xi32, #tpu.memory_space<vmem>>, %arg4: memref<56x32xf32, #tpu.memory_space<vmem>>, %arg5: memref<16x32xf32, #tpu.memory_space<vmem>>, %arg6: memref<8x32xf32, #tpu.memory_space<vmem>>, %arg7: memref<1x32xf32, #tpu.memory_space<vmem>>, %arg8: memref<1x32xf32, #tpu.memory_space<vmem>>, %arg9: memref<2x32x96xf32, #tpu.memory_space<vmem>>, %arg10: memref<2x1x96xf32, #tpu.memory_space<vmem>>, %arg11: memref<2x32x32xf32, #tpu.memory_space<vmem>>, %arg12: memref<2x1x32xf32, #tpu.memory_space<vmem>>, %arg13: memref<2x1x32xf32, #tpu.memory_space<vmem>>, %arg14: memref<2x1x32xf32, #tpu.memory_space<vmem>>, %arg15: memref<2x32x64xf32, #tpu.memory_space<vmem>>, %arg16: memref<2x1x64xf32, #tpu.memory_space<vmem>>, %arg17: memref<2x64x32xf32, #tpu.memory_space<vmem>>, %arg18: memref<2x1x32xf32, #tpu.memory_space<vmem>>, %arg19: memref<2x1x32xf32, #tpu.memory_space<vmem>>, %arg20: memref<2x1x32xf32, #tpu.memory_space<vmem>>, %arg21: memref<32x32xf32, #tpu.memory_space<vmem>>, %arg22: memref<1x32xf32, #tpu.memory_space<vmem>>, %arg23: memref<32x128xf32, #tpu.memory_space<vmem>>, %arg24: memref<1x128xf32, #tpu.memory_space<vmem>>, %arg25: memref<1x1x128xf32, #tpu.memory_space<vmem>>) attributes {dimension_semantics = [#tpu.dimension_semantics<parallel>], iteration_bounds = array<i64: 2>, scalar_prefetch = 0 : i64, scratch_operands = 0 : i64, tpu.core_type = #tpu.core_type<tc>, window_params = [{transform_indices = @transform_0, window_bounds = array<i64: 1, 8, 1>}, {transform_indices = @transform_1, window_bounds = array<i64: 1, 8, 1>}, {transform_indices = @transform_2, window_bounds = array<i64: 1, 1, 8>}, {pipeline_mode = #tpu.pipeline_mode<synchronous>, transform_indices = @transform_3, window_bounds = array<i64: 56, 32>}, {pipeline_mode = #tpu.pipeline_mode<synchronous>, transform_indices = @transform_4, window_bounds = array<i64: 16, 32>}, {pipeline_mode = #tpu.pipeline_mode<synchronous>, transform_indices = @transform_5, window_bounds = array<i64: 8, 32>}, {pipeline_mode = #tpu.pipeline_mode<synchronous>, transform_indices = @transform_6, window_bounds = array<i64: 1, 32>}, {pipeline_mode = #tpu.pipeline_mode<synchronous>, transform_indices = @transform_7, window_bounds = array<i64: 1, 32>}, {pipeline_mode = #tpu.pipeline_mode<synchronous>, transform_indices = @transform_8, window_bounds = array<i64: 2, 32, 96>}, {pipeline_mode = #tpu.pipeline_mode<synchronous>, transform_indices = @transform_9, window_bounds = array<i64: 2, 1, 96>}, {pipeline_mode = #tpu.pipeline_mode<synchronous>, transform_indices = @transform_10, window_bounds = array<i64: 2, 32, 32>}, {pipeline_mode = #tpu.pipeline_mode<synchronous>, transform_indices = @transform_11, window_bounds = array<i64: 2, 1, 32>}, {pipeline_mode = #tpu.pipeline_mode<synchronous>, transform_indices = @transform_12, window_bounds = array<i64: 2, 1, 32>}, {pipeline_mode = #tpu.pipeline_mode<synchronous>, transform_indices = @transform_13, window_bounds = array<i64: 2, 1, 32>}, {pipeline_mode = #tpu.pipeline_mode<synchronous>, transform_indices = @transform_14, window_bounds = array<i64: 2, 32, 64>}, {pipeline_mode = #tpu.pipeline_mode<synchronous>, transform_indices = @transform_15, window_bounds = array<i64: 2, 1, 64>}, {pipeline_mode = #tpu.pipeline_mode<synchronous>, transform_indices = @transform_16, window_bounds = array<i64: 2, 64, 32>}, {pipeline_mode = #tpu.pipeline_mode<synchronous>, transform_indices = @transform_17, window_bounds = array<i64: 2, 1, 32>}, {pipeline_mode = #tpu.pipeline_mode<synchronous>, transform_indices = @transform_18, window_bounds = array<i64: 2, 1, 32>}, {pipeline_mode = #tpu.pipeline_mode<synchronous>, transform_indices = @transform_19, window_bounds = array<i64: 2, 1, 32>}, {pipeline_mode = #tpu.pipeline_mode<synchronous>, transform_indices = @transform_20, window_bounds = array<i64: 32, 32>}, {pipeline_mode = #tpu.pipeline_mode<synchronous>, transform_indices = @transform_21, window_bounds = array<i64: 1, 32>}, {pipeline_mode = #tpu.pipeline_mode<synchronous>, transform_indices = @transform_22, window_bounds = array<i64: 32, 128>}, {pipeline_mode = #tpu.pipeline_mode<synchronous>, transform_indices = @transform_23, window_bounds = array<i64: 1, 128>}, {transform_indices = @transform_24, window_bounds = array<i64: 1, 1, 128>}]} {
    %c0 = arith.constant 0 : index
    %c0_0 = arith.constant 0 : index
    %c0_1 = arith.constant 0 : index
    %0 = vector.load %arg1[%c0, %c0_0, %c0_1] : memref<1x8x1xi32, #tpu.memory_space<vmem>>, vector<1x8x1xi32>
    %1 = vector.shape_cast %0 : vector<1x8x1xi32> to vector<8x1xi32>
    %c0_2 = arith.constant 0 : index
    %c0_3 = arith.constant 0 : index
    %c0_4 = arith.constant 0 : index
    %2 = vector.load %arg2[%c0_2, %c0_3, %c0_4] : memref<1x8x1xi32, #tpu.memory_space<vmem>>, vector<1x8x1xi32>
    %3 = vector.shape_cast %2 : vector<1x8x1xi32> to vector<8x1xi32>
    %4 = tpu.iota {dimensions = array<i32: 1>} : vector<8x56xi32>
    %5 = vector.broadcast %1 : vector<8x1xi32> to vector<8x56xi32>
    %6 = arith.cmpi eq, %5, %4 : vector<8x56xi32>
    %cst = arith.constant 1.000000e+00 : f32
    %cst_5 = arith.constant 0.000000e+00 : f32
    %7 = vector.broadcast %cst : f32 to vector<8x56xf32>
    %8 = vector.broadcast %cst_5 : f32 to vector<8x56xf32>
    %9 = arith.select %6, %7, %8 : vector<8x56xi1>, vector<8x56xf32>
    %10 = tpu.iota {dimensions = array<i32: 1>} : vector<8x8xi32>
    %11 = vector.broadcast %3 : vector<8x1xi32> to vector<8x8xi32>
    %12 = arith.cmpi eq, %11, %10 : vector<8x8xi32>
    %cst_6 = arith.constant 1.000000e+00 : f32
    %cst_7 = arith.constant 0.000000e+00 : f32
    %13 = vector.broadcast %cst_6 : f32 to vector<8x8xf32>
    %14 = vector.broadcast %cst_7 : f32 to vector<8x8xf32>
    %15 = arith.select %12, %13, %14 : vector<8x8xi1>, vector<8x8xf32>
    %c0_8 = arith.constant 0 : index
    %c0_9 = arith.constant 0 : index
    %16 = vector.load %arg4[%c0_8, %c0_9] : memref<56x32xf32, #tpu.memory_space<vmem>>, vector<56x32xf32>
    %cst_10 = arith.constant dense<0.000000e+00> : vector<8x32xf32>
    %17 = tpu.matmul %9, %16, %cst_10 {dimension_numbers = #tpu.dot_dimension_numbers<[1], [0], [0], [1], [0, 0, 1, 1], [], []>} : vector<8x56xf32>, vector<56x32xf32>, vector<8x32xf32> -> vector<8x32xf32>
    %c0_11 = arith.constant 0 : index
    %c0_12 = arith.constant 0 : index
    %18 = vector.load %arg5[%c0_11, %c0_12] : memref<16x32xf32, #tpu.memory_space<vmem>>, vector<8x32xf32>
    %19 = arith.addf %17, %18 : vector<8x32xf32>
    %c0_13 = arith.constant 0 : index
    %c0_14 = arith.constant 0 : index
    %20 = vector.load %arg6[%c0_13, %c0_14] : memref<8x32xf32, #tpu.memory_space<vmem>>, vector<8x32xf32>
    %cst_15 = arith.constant dense<0.000000e+00> : vector<8x32xf32>
    %21 = tpu.matmul %15, %20, %cst_15 {dimension_numbers = #tpu.dot_dimension_numbers<[1], [0], [0], [1], [0, 0, 1, 1], [], []>} : vector<8x8xf32>, vector<8x32xf32>, vector<8x32xf32> -> vector<8x32xf32>
    %22 = arith.addf %19, %21 : vector<8x32xf32>
    %c0_16 = arith.constant 0 : index
    %c0_17 = arith.constant 0 : index
    %23 = vector.load %arg7[%c0_16, %c0_17] : memref<1x32xf32, #tpu.memory_space<vmem>>, vector<1x32xf32>
    %c0_18 = arith.constant 0 : index
    %c0_19 = arith.constant 0 : index
    %24 = vector.load %arg8[%c0_18, %c0_19] : memref<1x32xf32, #tpu.memory_space<vmem>>, vector<1x32xf32>
    %cst_20 = arith.constant dense<0.000000e+00> : vector<8xf32>
    %25 = vector.multi_reduction <add>, %22, %cst_20 [1] : vector<8x32xf32> to vector<8xf32>
    %26 = vector.shape_cast %25 : vector<8xf32> to vector<8x1xf32>
    %cst_21 = arith.constant 3.200000e+01 : f32
    %27 = vector.broadcast %cst_21 : f32 to vector<8x1xf32>
    %28 = arith.divf %26, %27 : vector<8x1xf32>
    %29 = vector.broadcast %28 : vector<8x1xf32> to vector<8x32xf32>
    %30 = arith.subf %22, %29 : vector<8x32xf32>
    %31 = arith.mulf %30, %30 : vector<8x32xf32>
    %cst_22 = arith.constant dense<0.000000e+00> : vector<8xf32>
    %32 = vector.multi_reduction <add>, %31, %cst_22 [1] : vector<8x32xf32> to vector<8xf32>
    %33 = vector.shape_cast %32 : vector<8xf32> to vector<8x1xf32>
    %cst_23 = arith.constant 3.200000e+01 : f32
    %34 = vector.broadcast %cst_23 : f32 to vector<8x1xf32>
    %35 = arith.divf %33, %34 : vector<8x1xf32>
    %36 = vector.broadcast %28 : vector<8x1xf32> to vector<8x32xf32>
    %37 = arith.subf %22, %36 : vector<8x32xf32>
    %cst_24 = arith.constant 9.99999996E-13 : f32
    %38 = vector.broadcast %cst_24 : f32 to vector<8x1xf32>
    %39 = arith.addf %35, %38 : vector<8x1xf32>
    %40 = math.rsqrt %39 : vector<8x1xf32>
    %41 = vector.broadcast %40 : vector<8x1xf32> to vector<8x32xf32>
    %42 = arith.mulf %37, %41 : vector<8x32xf32>
    %43 = vector.broadcast %23 : vector<1x32xf32> to vector<8x32xf32>
    %44 = arith.mulf %42, %43 : vector<8x32xf32>
    %45 = vector.broadcast %24 : vector<1x32xf32> to vector<8x32xf32>
    %46 = arith.addf %44, %45 : vector<8x32xf32>
    %c0_25 = arith.constant 0 : index
    %c0_26 = arith.constant 0 : index
    %c0_27 = arith.constant 0 : index
    %47 = vector.load %arg3[%c0_25, %c0_26, %c0_27] : memref<1x1x8xi32, #tpu.memory_space<vmem>>, vector<1x1x8xi32>
    %48 = vector.shape_cast %47 : vector<1x1x8xi32> to vector<1x8xi32>
    %49 = arith.sitofp %48 : vector<1x8xi32> to vector<1x8xf32>
    %cst_28 = arith.constant 1.000000e+00 : f32
    %50 = vector.broadcast %cst_28 : f32 to vector<1x8xf32>
    %51 = arith.subf %50, %49 : vector<1x8xf32>
    %cst_29 = arith.constant -1.000000e+09 : f32
    %52 = vector.broadcast %cst_29 : f32 to vector<1x8xf32>
    %53 = arith.mulf %51, %52 : vector<1x8xf32>
    %c0_30 = arith.constant 0 : index
    %c0_31 = arith.constant 0 : index
    %c0_32 = arith.constant 0 : index
    %54 = vector.load %arg9[%c0_30, %c0_31, %c0_32] : memref<2x32x96xf32, #tpu.memory_space<vmem>>, vector<1x32x96xf32>
    %55 = vector.shape_cast %54 : vector<1x32x96xf32> to vector<32x96xf32>
    %cst_33 = arith.constant dense<0.000000e+00> : vector<8x96xf32>
    %56 = tpu.matmul %46, %55, %cst_33 {dimension_numbers = #tpu.dot_dimension_numbers<[1], [0], [0], [1], [0, 0, 1, 1], [], []>} : vector<8x32xf32>, vector<32x96xf32>, vector<8x96xf32> -> vector<8x96xf32>
    %c0_34 = arith.constant 0 : index
    %c0_35 = arith.constant 0 : index
    %c0_36 = arith.constant 0 : index
    %57 = vector.load %arg10[%c0_34, %c0_35, %c0_36] : memref<2x1x96xf32, #tpu.memory_space<vmem>>, vector<1x1x96xf32>
    %58 = vector.shape_cast %57 : vector<1x1x96xf32> to vector<1x96xf32>
    %59 = vector.broadcast %58 : vector<1x96xf32> to vector<8x96xf32>
    %60 = arith.addf %56, %59 : vector<8x96xf32>
    %c0_37 = arith.constant 0 : index
    %c0_38 = arith.constant 0 : index
    %c0_39 = arith.constant 0 : index
    %61 = vector.load %arg11[%c0_37, %c0_38, %c0_39] : memref<2x32x32xf32, #tpu.memory_space<vmem>>, vector<1x32x32xf32>
    %62 = vector.shape_cast %61 : vector<1x32x32xf32> to vector<32x32xf32>
    %cst_40 = arith.constant 0.000000e+00 : f32
    %63 = vector.broadcast %cst_40 : f32 to vector<8x32xf32>
    %64 = vector.extract_strided_slice %60 {offsets = [0, 0], sizes = [8, 16], strides = [1, 1]} : vector<8x96xf32> to vector<8x16xf32>
    %cst_41 = arith.constant 2.500000e-01 : f32
    %65 = vector.broadcast %cst_41 : f32 to vector<8x16xf32>
    %66 = arith.mulf %64, %65 : vector<8x16xf32>
    %67 = vector.extract_strided_slice %60 {offsets = [0, 32], sizes = [8, 16], strides = [1, 1]} : vector<8x96xf32> to vector<8x16xf32>
    %68 = vector.extract_strided_slice %60 {offsets = [0, 64], sizes = [8, 16], strides = [1, 1]} : vector<8x96xf32> to vector<8x16xf32>
    %cst_42 = arith.constant dense<0.000000e+00> : vector<8x8xf32>
    %69 = tpu.matmul %66, %67, %cst_42 {dimension_numbers = #tpu.dot_dimension_numbers<[1], [1], [0], [0], [0, 0, 1, 0], [], []>} : vector<8x16xf32>, vector<8x16xf32>, vector<8x8xf32> -> vector<8x8xf32>
    %70 = vector.broadcast %53 : vector<1x8xf32> to vector<8x8xf32>
    %71 = arith.addf %69, %70 : vector<8x8xf32>
    %cst_43 = arith.constant dense<0xFF800000> : vector<8xf32>
    %72 = vector.multi_reduction <maximumf>, %71, %cst_43 [1] : vector<8x8xf32> to vector<8xf32>
    %73 = vector.shape_cast %72 : vector<8xf32> to vector<8x1xf32>
    %74 = vector.broadcast %73 : vector<8x1xf32> to vector<8x8xf32>
    %75 = arith.subf %71, %74 : vector<8x8xf32>
    %76 = math.exp %75 : vector<8x8xf32>
    %cst_44 = arith.constant dense<0.000000e+00> : vector<8xf32>
    %77 = vector.multi_reduction <add>, %76, %cst_44 [1] : vector<8x8xf32> to vector<8xf32>
    %78 = vector.shape_cast %77 : vector<8xf32> to vector<8x1xf32>
    %79 = tpu.reciprocal %78 {approx = true} : vector<8x1xf32> -> vector<8x1xf32>
    %80 = vector.broadcast %79 : vector<8x1xf32> to vector<8x8xf32>
    %81 = arith.mulf %76, %80 : vector<8x8xf32>
    %cst_45 = arith.constant dense<0.000000e+00> : vector<8x16xf32>
    %82 = tpu.matmul %81, %68, %cst_45 {dimension_numbers = #tpu.dot_dimension_numbers<[1], [0], [0], [1], [0, 0, 1, 1], [], []>} : vector<8x8xf32>, vector<8x16xf32>, vector<8x16xf32> -> vector<8x16xf32>
    %83 = vector.extract_strided_slice %62 {offsets = [0, 0], sizes = [16, 32], strides = [1, 1]} : vector<32x32xf32> to vector<16x32xf32>
    %cst_46 = arith.constant dense<0.000000e+00> : vector<8x32xf32>
    %84 = tpu.matmul %82, %83, %cst_46 {dimension_numbers = #tpu.dot_dimension_numbers<[1], [0], [0], [1], [0, 0, 1, 1], [], []>} : vector<8x16xf32>, vector<16x32xf32>, vector<8x32xf32> -> vector<8x32xf32>
    %85 = arith.addf %63, %84 : vector<8x32xf32>
    %86 = vector.extract_strided_slice %60 {offsets = [0, 16], sizes = [8, 16], strides = [1, 1]} : vector<8x96xf32> to vector<8x16xf32>
    %cst_47 = arith.constant 2.500000e-01 : f32
    %87 = vector.broadcast %cst_47 : f32 to vector<8x16xf32>
    %88 = arith.mulf %86, %87 : vector<8x16xf32>
    %89 = vector.extract_strided_slice %60 {offsets = [0, 48], sizes = [8, 16], strides = [1, 1]} : vector<8x96xf32> to vector<8x16xf32>
    %90 = vector.extract_strided_slice %60 {offsets = [0, 80], sizes = [8, 16], strides = [1, 1]} : vector<8x96xf32> to vector<8x16xf32>
    %cst_48 = arith.constant dense<0.000000e+00> : vector<8x8xf32>
    %91 = tpu.matmul %88, %89, %cst_48 {dimension_numbers = #tpu.dot_dimension_numbers<[1], [1], [0], [0], [0, 0, 1, 0], [], []>} : vector<8x16xf32>, vector<8x16xf32>, vector<8x8xf32> -> vector<8x8xf32>
    %92 = vector.broadcast %53 : vector<1x8xf32> to vector<8x8xf32>
    %93 = arith.addf %91, %92 : vector<8x8xf32>
    %cst_49 = arith.constant dense<0xFF800000> : vector<8xf32>
    %94 = vector.multi_reduction <maximumf>, %93, %cst_49 [1] : vector<8x8xf32> to vector<8xf32>
    %95 = vector.shape_cast %94 : vector<8xf32> to vector<8x1xf32>
    %96 = vector.broadcast %95 : vector<8x1xf32> to vector<8x8xf32>
    %97 = arith.subf %93, %96 : vector<8x8xf32>
    %98 = math.exp %97 : vector<8x8xf32>
    %cst_50 = arith.constant dense<0.000000e+00> : vector<8xf32>
    %99 = vector.multi_reduction <add>, %98, %cst_50 [1] : vector<8x8xf32> to vector<8xf32>
    %100 = vector.shape_cast %99 : vector<8xf32> to vector<8x1xf32>
    %101 = tpu.reciprocal %100 {approx = true} : vector<8x1xf32> -> vector<8x1xf32>
    %102 = vector.broadcast %101 : vector<8x1xf32> to vector<8x8xf32>
    %103 = arith.mulf %98, %102 : vector<8x8xf32>
    %cst_51 = arith.constant dense<0.000000e+00> : vector<8x16xf32>
    %104 = tpu.matmul %103, %90, %cst_51 {dimension_numbers = #tpu.dot_dimension_numbers<[1], [0], [0], [1], [0, 0, 1, 1], [], []>} : vector<8x8xf32>, vector<8x16xf32>, vector<8x16xf32> -> vector<8x16xf32>
    %105 = vector.extract_strided_slice %62 {offsets = [16, 0], sizes = [16, 32], strides = [1, 1]} : vector<32x32xf32> to vector<16x32xf32>
    %cst_52 = arith.constant dense<0.000000e+00> : vector<8x32xf32>
    %106 = tpu.matmul %104, %105, %cst_52 {dimension_numbers = #tpu.dot_dimension_numbers<[1], [0], [0], [1], [0, 0, 1, 1], [], []>} : vector<8x16xf32>, vector<16x32xf32>, vector<8x32xf32> -> vector<8x32xf32>
    %107 = arith.addf %85, %106 : vector<8x32xf32>
    %c0_53 = arith.constant 0 : index
    %c0_54 = arith.constant 0 : index
    %c0_55 = arith.constant 0 : index
    %108 = vector.load %arg12[%c0_53, %c0_54, %c0_55] : memref<2x1x32xf32, #tpu.memory_space<vmem>>, vector<1x1x32xf32>
    %109 = vector.shape_cast %108 : vector<1x1x32xf32> to vector<1x32xf32>
    %110 = vector.broadcast %109 : vector<1x32xf32> to vector<8x32xf32>
    %111 = arith.addf %107, %110 : vector<8x32xf32>
    %112 = arith.addf %111, %46 : vector<8x32xf32>
    %c0_56 = arith.constant 0 : index
    %c0_57 = arith.constant 0 : index
    %c0_58 = arith.constant 0 : index
    %113 = vector.load %arg13[%c0_56, %c0_57, %c0_58] : memref<2x1x32xf32, #tpu.memory_space<vmem>>, vector<1x1x32xf32>
    %114 = vector.shape_cast %113 : vector<1x1x32xf32> to vector<1x32xf32>
    %c0_59 = arith.constant 0 : index
    %c0_60 = arith.constant 0 : index
    %c0_61 = arith.constant 0 : index
    %115 = vector.load %arg14[%c0_59, %c0_60, %c0_61] : memref<2x1x32xf32, #tpu.memory_space<vmem>>, vector<1x1x32xf32>
    %116 = vector.shape_cast %115 : vector<1x1x32xf32> to vector<1x32xf32>
    %cst_62 = arith.constant dense<0.000000e+00> : vector<8xf32>
    %117 = vector.multi_reduction <add>, %112, %cst_62 [1] : vector<8x32xf32> to vector<8xf32>
    %118 = vector.shape_cast %117 : vector<8xf32> to vector<8x1xf32>
    %cst_63 = arith.constant 3.200000e+01 : f32
    %119 = vector.broadcast %cst_63 : f32 to vector<8x1xf32>
    %120 = arith.divf %118, %119 : vector<8x1xf32>
    %121 = vector.broadcast %120 : vector<8x1xf32> to vector<8x32xf32>
    %122 = arith.subf %112, %121 : vector<8x32xf32>
    %123 = arith.mulf %122, %122 : vector<8x32xf32>
    %cst_64 = arith.constant dense<0.000000e+00> : vector<8xf32>
    %124 = vector.multi_reduction <add>, %123, %cst_64 [1] : vector<8x32xf32> to vector<8xf32>
    %125 = vector.shape_cast %124 : vector<8xf32> to vector<8x1xf32>
    %cst_65 = arith.constant 3.200000e+01 : f32
    %126 = vector.broadcast %cst_65 : f32 to vector<8x1xf32>
    %127 = arith.divf %125, %126 : vector<8x1xf32>
    %128 = vector.broadcast %120 : vector<8x1xf32> to vector<8x32xf32>
    %129 = arith.subf %112, %128 : vector<8x32xf32>
    %cst_66 = arith.constant 9.99999996E-13 : f32
    %130 = vector.broadcast %cst_66 : f32 to vector<8x1xf32>
    %131 = arith.addf %127, %130 : vector<8x1xf32>
    %132 = math.rsqrt %131 : vector<8x1xf32>
    %133 = vector.broadcast %132 : vector<8x1xf32> to vector<8x32xf32>
    %134 = arith.mulf %129, %133 : vector<8x32xf32>
    %135 = vector.broadcast %114 : vector<1x32xf32> to vector<8x32xf32>
    %136 = arith.mulf %134, %135 : vector<8x32xf32>
    %137 = vector.broadcast %116 : vector<1x32xf32> to vector<8x32xf32>
    %138 = arith.addf %136, %137 : vector<8x32xf32>
    %c0_67 = arith.constant 0 : index
    %c0_68 = arith.constant 0 : index
    %c0_69 = arith.constant 0 : index
    %139 = vector.load %arg15[%c0_67, %c0_68, %c0_69] : memref<2x32x64xf32, #tpu.memory_space<vmem>>, vector<1x32x64xf32>
    %140 = vector.shape_cast %139 : vector<1x32x64xf32> to vector<32x64xf32>
    %cst_70 = arith.constant dense<0.000000e+00> : vector<8x64xf32>
    %141 = tpu.matmul %138, %140, %cst_70 {dimension_numbers = #tpu.dot_dimension_numbers<[1], [0], [0], [1], [0, 0, 1, 1], [], []>} : vector<8x32xf32>, vector<32x64xf32>, vector<8x64xf32> -> vector<8x64xf32>
    %c0_71 = arith.constant 0 : index
    %c0_72 = arith.constant 0 : index
    %c0_73 = arith.constant 0 : index
    %142 = vector.load %arg16[%c0_71, %c0_72, %c0_73] : memref<2x1x64xf32, #tpu.memory_space<vmem>>, vector<1x1x64xf32>
    %143 = vector.shape_cast %142 : vector<1x1x64xf32> to vector<1x64xf32>
    %144 = vector.broadcast %143 : vector<1x64xf32> to vector<8x64xf32>
    %145 = arith.addf %141, %144 : vector<8x64xf32>
    %146 = arith.mulf %145, %145 : vector<8x64xf32>
    %147 = arith.mulf %145, %146 : vector<8x64xf32>
    %cst_74 = arith.constant 4.471500e-02 : f32
    %148 = vector.broadcast %cst_74 : f32 to vector<8x64xf32>
    %149 = arith.mulf %148, %147 : vector<8x64xf32>
    %150 = arith.addf %145, %149 : vector<8x64xf32>
    %cst_75 = arith.constant 0.797884583 : f32
    %151 = vector.broadcast %cst_75 : f32 to vector<8x64xf32>
    %152 = arith.mulf %151, %150 : vector<8x64xf32>
    %153 = math.tanh %152 : vector<8x64xf32>
    %cst_76 = arith.constant 1.000000e+00 : f32
    %154 = vector.broadcast %cst_76 : f32 to vector<8x64xf32>
    %155 = arith.addf %154, %153 : vector<8x64xf32>
    %cst_77 = arith.constant 5.000000e-01 : f32
    %156 = vector.broadcast %cst_77 : f32 to vector<8x64xf32>
    %157 = arith.mulf %156, %155 : vector<8x64xf32>
    %158 = arith.mulf %145, %157 : vector<8x64xf32>
    %c0_78 = arith.constant 0 : index
    %c0_79 = arith.constant 0 : index
    %c0_80 = arith.constant 0 : index
    %159 = vector.load %arg17[%c0_78, %c0_79, %c0_80] : memref<2x64x32xf32, #tpu.memory_space<vmem>>, vector<1x64x32xf32>
    %160 = vector.shape_cast %159 : vector<1x64x32xf32> to vector<64x32xf32>
    %cst_81 = arith.constant dense<0.000000e+00> : vector<8x32xf32>
    %161 = tpu.matmul %158, %160, %cst_81 {dimension_numbers = #tpu.dot_dimension_numbers<[1], [0], [0], [1], [0, 0, 1, 1], [], []>} : vector<8x64xf32>, vector<64x32xf32>, vector<8x32xf32> -> vector<8x32xf32>
    %c0_82 = arith.constant 0 : index
    %c0_83 = arith.constant 0 : index
    %c0_84 = arith.constant 0 : index
    %162 = vector.load %arg18[%c0_82, %c0_83, %c0_84] : memref<2x1x32xf32, #tpu.memory_space<vmem>>, vector<1x1x32xf32>
    %163 = vector.shape_cast %162 : vector<1x1x32xf32> to vector<1x32xf32>
    %164 = vector.broadcast %163 : vector<1x32xf32> to vector<8x32xf32>
    %165 = arith.addf %161, %164 : vector<8x32xf32>
    %166 = arith.addf %165, %138 : vector<8x32xf32>
    %c0_85 = arith.constant 0 : index
    %c0_86 = arith.constant 0 : index
    %c0_87 = arith.constant 0 : index
    %167 = vector.load %arg19[%c0_85, %c0_86, %c0_87] : memref<2x1x32xf32, #tpu.memory_space<vmem>>, vector<1x1x32xf32>
    %168 = vector.shape_cast %167 : vector<1x1x32xf32> to vector<1x32xf32>
    %c0_88 = arith.constant 0 : index
    %c0_89 = arith.constant 0 : index
    %c0_90 = arith.constant 0 : index
    %169 = vector.load %arg20[%c0_88, %c0_89, %c0_90] : memref<2x1x32xf32, #tpu.memory_space<vmem>>, vector<1x1x32xf32>
    %170 = vector.shape_cast %169 : vector<1x1x32xf32> to vector<1x32xf32>
    %cst_91 = arith.constant dense<0.000000e+00> : vector<8xf32>
    %171 = vector.multi_reduction <add>, %166, %cst_91 [1] : vector<8x32xf32> to vector<8xf32>
    %172 = vector.shape_cast %171 : vector<8xf32> to vector<8x1xf32>
    %cst_92 = arith.constant 3.200000e+01 : f32
    %173 = vector.broadcast %cst_92 : f32 to vector<8x1xf32>
    %174 = arith.divf %172, %173 : vector<8x1xf32>
    %175 = vector.broadcast %174 : vector<8x1xf32> to vector<8x32xf32>
    %176 = arith.subf %166, %175 : vector<8x32xf32>
    %177 = arith.mulf %176, %176 : vector<8x32xf32>
    %cst_93 = arith.constant dense<0.000000e+00> : vector<8xf32>
    %178 = vector.multi_reduction <add>, %177, %cst_93 [1] : vector<8x32xf32> to vector<8xf32>
    %179 = vector.shape_cast %178 : vector<8xf32> to vector<8x1xf32>
    %cst_94 = arith.constant 3.200000e+01 : f32
    %180 = vector.broadcast %cst_94 : f32 to vector<8x1xf32>
    %181 = arith.divf %179, %180 : vector<8x1xf32>
    %182 = vector.broadcast %174 : vector<8x1xf32> to vector<8x32xf32>
    %183 = arith.subf %166, %182 : vector<8x32xf32>
    %cst_95 = arith.constant 9.99999996E-13 : f32
    %184 = vector.broadcast %cst_95 : f32 to vector<8x1xf32>
    %185 = arith.addf %181, %184 : vector<8x1xf32>
    %186 = math.rsqrt %185 : vector<8x1xf32>
    %187 = vector.broadcast %186 : vector<8x1xf32> to vector<8x32xf32>
    %188 = arith.mulf %183, %187 : vector<8x32xf32>
    %189 = vector.broadcast %168 : vector<1x32xf32> to vector<8x32xf32>
    %190 = arith.mulf %188, %189 : vector<8x32xf32>
    %191 = vector.broadcast %170 : vector<1x32xf32> to vector<8x32xf32>
    %192 = arith.addf %190, %191 : vector<8x32xf32>
    %c1 = arith.constant 1 : index
    %c0_96 = arith.constant 0 : index
    %c0_97 = arith.constant 0 : index
    %193 = vector.load %arg9[%c1, %c0_96, %c0_97] : memref<2x32x96xf32, #tpu.memory_space<vmem>>, vector<1x32x96xf32>
    %194 = vector.shape_cast %193 : vector<1x32x96xf32> to vector<32x96xf32>
    %cst_98 = arith.constant dense<0.000000e+00> : vector<8x96xf32>
    %195 = tpu.matmul %192, %194, %cst_98 {dimension_numbers = #tpu.dot_dimension_numbers<[1], [0], [0], [1], [0, 0, 1, 1], [], []>} : vector<8x32xf32>, vector<32x96xf32>, vector<8x96xf32> -> vector<8x96xf32>
    %c1_99 = arith.constant 1 : index
    %c0_100 = arith.constant 0 : index
    %c0_101 = arith.constant 0 : index
    %196 = vector.load %arg10[%c1_99, %c0_100, %c0_101] : memref<2x1x96xf32, #tpu.memory_space<vmem>>, vector<1x1x96xf32>
    %197 = vector.shape_cast %196 : vector<1x1x96xf32> to vector<1x96xf32>
    %198 = vector.broadcast %197 : vector<1x96xf32> to vector<8x96xf32>
    %199 = arith.addf %195, %198 : vector<8x96xf32>
    %c1_102 = arith.constant 1 : index
    %c0_103 = arith.constant 0 : index
    %c0_104 = arith.constant 0 : index
    %200 = vector.load %arg11[%c1_102, %c0_103, %c0_104] : memref<2x32x32xf32, #tpu.memory_space<vmem>>, vector<1x32x32xf32>
    %201 = vector.shape_cast %200 : vector<1x32x32xf32> to vector<32x32xf32>
    %cst_105 = arith.constant 0.000000e+00 : f32
    %202 = vector.broadcast %cst_105 : f32 to vector<8x32xf32>
    %203 = vector.extract_strided_slice %199 {offsets = [0, 0], sizes = [8, 16], strides = [1, 1]} : vector<8x96xf32> to vector<8x16xf32>
    %cst_106 = arith.constant 2.500000e-01 : f32
    %204 = vector.broadcast %cst_106 : f32 to vector<8x16xf32>
    %205 = arith.mulf %203, %204 : vector<8x16xf32>
    %206 = vector.extract_strided_slice %199 {offsets = [0, 32], sizes = [8, 16], strides = [1, 1]} : vector<8x96xf32> to vector<8x16xf32>
    %207 = vector.extract_strided_slice %199 {offsets = [0, 64], sizes = [8, 16], strides = [1, 1]} : vector<8x96xf32> to vector<8x16xf32>
    %cst_107 = arith.constant dense<0.000000e+00> : vector<8x8xf32>
    %208 = tpu.matmul %205, %206, %cst_107 {dimension_numbers = #tpu.dot_dimension_numbers<[1], [1], [0], [0], [0, 0, 1, 0], [], []>} : vector<8x16xf32>, vector<8x16xf32>, vector<8x8xf32> -> vector<8x8xf32>
    %209 = vector.broadcast %53 : vector<1x8xf32> to vector<8x8xf32>
    %210 = arith.addf %208, %209 : vector<8x8xf32>
    %cst_108 = arith.constant dense<0xFF800000> : vector<8xf32>
    %211 = vector.multi_reduction <maximumf>, %210, %cst_108 [1] : vector<8x8xf32> to vector<8xf32>
    %212 = vector.shape_cast %211 : vector<8xf32> to vector<8x1xf32>
    %213 = vector.broadcast %212 : vector<8x1xf32> to vector<8x8xf32>
    %214 = arith.subf %210, %213 : vector<8x8xf32>
    %215 = math.exp %214 : vector<8x8xf32>
    %cst_109 = arith.constant dense<0.000000e+00> : vector<8xf32>
    %216 = vector.multi_reduction <add>, %215, %cst_109 [1] : vector<8x8xf32> to vector<8xf32>
    %217 = vector.shape_cast %216 : vector<8xf32> to vector<8x1xf32>
    %218 = tpu.reciprocal %217 {approx = true} : vector<8x1xf32> -> vector<8x1xf32>
    %219 = vector.broadcast %218 : vector<8x1xf32> to vector<8x8xf32>
    %220 = arith.mulf %215, %219 : vector<8x8xf32>
    %cst_110 = arith.constant dense<0.000000e+00> : vector<8x16xf32>
    %221 = tpu.matmul %220, %207, %cst_110 {dimension_numbers = #tpu.dot_dimension_numbers<[1], [0], [0], [1], [0, 0, 1, 1], [], []>} : vector<8x8xf32>, vector<8x16xf32>, vector<8x16xf32> -> vector<8x16xf32>
    %222 = vector.extract_strided_slice %201 {offsets = [0, 0], sizes = [16, 32], strides = [1, 1]} : vector<32x32xf32> to vector<16x32xf32>
    %cst_111 = arith.constant dense<0.000000e+00> : vector<8x32xf32>
    %223 = tpu.matmul %221, %222, %cst_111 {dimension_numbers = #tpu.dot_dimension_numbers<[1], [0], [0], [1], [0, 0, 1, 1], [], []>} : vector<8x16xf32>, vector<16x32xf32>, vector<8x32xf32> -> vector<8x32xf32>
    %224 = arith.addf %202, %223 : vector<8x32xf32>
    %225 = vector.extract_strided_slice %199 {offsets = [0, 16], sizes = [8, 16], strides = [1, 1]} : vector<8x96xf32> to vector<8x16xf32>
    %cst_112 = arith.constant 2.500000e-01 : f32
    %226 = vector.broadcast %cst_112 : f32 to vector<8x16xf32>
    %227 = arith.mulf %225, %226 : vector<8x16xf32>
    %228 = vector.extract_strided_slice %199 {offsets = [0, 48], sizes = [8, 16], strides = [1, 1]} : vector<8x96xf32> to vector<8x16xf32>
    %229 = vector.extract_strided_slice %199 {offsets = [0, 80], sizes = [8, 16], strides = [1, 1]} : vector<8x96xf32> to vector<8x16xf32>
    %cst_113 = arith.constant dense<0.000000e+00> : vector<8x8xf32>
    %230 = tpu.matmul %227, %228, %cst_113 {dimension_numbers = #tpu.dot_dimension_numbers<[1], [1], [0], [0], [0, 0, 1, 0], [], []>} : vector<8x16xf32>, vector<8x16xf32>, vector<8x8xf32> -> vector<8x8xf32>
    %231 = vector.broadcast %53 : vector<1x8xf32> to vector<8x8xf32>
    %232 = arith.addf %230, %231 : vector<8x8xf32>
    %cst_114 = arith.constant dense<0xFF800000> : vector<8xf32>
    %233 = vector.multi_reduction <maximumf>, %232, %cst_114 [1] : vector<8x8xf32> to vector<8xf32>
    %234 = vector.shape_cast %233 : vector<8xf32> to vector<8x1xf32>
    %235 = vector.broadcast %234 : vector<8x1xf32> to vector<8x8xf32>
    %236 = arith.subf %232, %235 : vector<8x8xf32>
    %237 = math.exp %236 : vector<8x8xf32>
    %cst_115 = arith.constant dense<0.000000e+00> : vector<8xf32>
    %238 = vector.multi_reduction <add>, %237, %cst_115 [1] : vector<8x8xf32> to vector<8xf32>
    %239 = vector.shape_cast %238 : vector<8xf32> to vector<8x1xf32>
    %240 = tpu.reciprocal %239 {approx = true} : vector<8x1xf32> -> vector<8x1xf32>
    %241 = vector.broadcast %240 : vector<8x1xf32> to vector<8x8xf32>
    %242 = arith.mulf %237, %241 : vector<8x8xf32>
    %cst_116 = arith.constant dense<0.000000e+00> : vector<8x16xf32>
    %243 = tpu.matmul %242, %229, %cst_116 {dimension_numbers = #tpu.dot_dimension_numbers<[1], [0], [0], [1], [0, 0, 1, 1], [], []>} : vector<8x8xf32>, vector<8x16xf32>, vector<8x16xf32> -> vector<8x16xf32>
    %244 = vector.extract_strided_slice %201 {offsets = [16, 0], sizes = [16, 32], strides = [1, 1]} : vector<32x32xf32> to vector<16x32xf32>
    %cst_117 = arith.constant dense<0.000000e+00> : vector<8x32xf32>
    %245 = tpu.matmul %243, %244, %cst_117 {dimension_numbers = #tpu.dot_dimension_numbers<[1], [0], [0], [1], [0, 0, 1, 1], [], []>} : vector<8x16xf32>, vector<16x32xf32>, vector<8x32xf32> -> vector<8x32xf32>
    %246 = arith.addf %224, %245 : vector<8x32xf32>
    %c1_118 = arith.constant 1 : index
    %c0_119 = arith.constant 0 : index
    %c0_120 = arith.constant 0 : index
    %247 = vector.load %arg12[%c1_118, %c0_119, %c0_120] : memref<2x1x32xf32, #tpu.memory_space<vmem>>, vector<1x1x32xf32>
    %248 = vector.shape_cast %247 : vector<1x1x32xf32> to vector<1x32xf32>
    %249 = vector.broadcast %248 : vector<1x32xf32> to vector<8x32xf32>
    %250 = arith.addf %246, %249 : vector<8x32xf32>
    %251 = arith.addf %250, %192 : vector<8x32xf32>
    %c1_121 = arith.constant 1 : index
    %c0_122 = arith.constant 0 : index
    %c0_123 = arith.constant 0 : index
    %252 = vector.load %arg13[%c1_121, %c0_122, %c0_123] : memref<2x1x32xf32, #tpu.memory_space<vmem>>, vector<1x1x32xf32>
    %253 = vector.shape_cast %252 : vector<1x1x32xf32> to vector<1x32xf32>
    %c1_124 = arith.constant 1 : index
    %c0_125 = arith.constant 0 : index
    %c0_126 = arith.constant 0 : index
    %254 = vector.load %arg14[%c1_124, %c0_125, %c0_126] : memref<2x1x32xf32, #tpu.memory_space<vmem>>, vector<1x1x32xf32>
    %255 = vector.shape_cast %254 : vector<1x1x32xf32> to vector<1x32xf32>
    %cst_127 = arith.constant dense<0.000000e+00> : vector<8xf32>
    %256 = vector.multi_reduction <add>, %251, %cst_127 [1] : vector<8x32xf32> to vector<8xf32>
    %257 = vector.shape_cast %256 : vector<8xf32> to vector<8x1xf32>
    %cst_128 = arith.constant 3.200000e+01 : f32
    %258 = vector.broadcast %cst_128 : f32 to vector<8x1xf32>
    %259 = arith.divf %257, %258 : vector<8x1xf32>
    %260 = vector.broadcast %259 : vector<8x1xf32> to vector<8x32xf32>
    %261 = arith.subf %251, %260 : vector<8x32xf32>
    %262 = arith.mulf %261, %261 : vector<8x32xf32>
    %cst_129 = arith.constant dense<0.000000e+00> : vector<8xf32>
    %263 = vector.multi_reduction <add>, %262, %cst_129 [1] : vector<8x32xf32> to vector<8xf32>
    %264 = vector.shape_cast %263 : vector<8xf32> to vector<8x1xf32>
    %cst_130 = arith.constant 3.200000e+01 : f32
    %265 = vector.broadcast %cst_130 : f32 to vector<8x1xf32>
    %266 = arith.divf %264, %265 : vector<8x1xf32>
    %267 = vector.broadcast %259 : vector<8x1xf32> to vector<8x32xf32>
    %268 = arith.subf %251, %267 : vector<8x32xf32>
    %cst_131 = arith.constant 9.99999996E-13 : f32
    %269 = vector.broadcast %cst_131 : f32 to vector<8x1xf32>
    %270 = arith.addf %266, %269 : vector<8x1xf32>
    %271 = math.rsqrt %270 : vector<8x1xf32>
    %272 = vector.broadcast %271 : vector<8x1xf32> to vector<8x32xf32>
    %273 = arith.mulf %268, %272 : vector<8x32xf32>
    %274 = vector.broadcast %253 : vector<1x32xf32> to vector<8x32xf32>
    %275 = arith.mulf %273, %274 : vector<8x32xf32>
    %276 = vector.broadcast %255 : vector<1x32xf32> to vector<8x32xf32>
    %277 = arith.addf %275, %276 : vector<8x32xf32>
    %c1_132 = arith.constant 1 : index
    %c0_133 = arith.constant 0 : index
    %c0_134 = arith.constant 0 : index
    %278 = vector.load %arg15[%c1_132, %c0_133, %c0_134] : memref<2x32x64xf32, #tpu.memory_space<vmem>>, vector<1x32x64xf32>
    %279 = vector.shape_cast %278 : vector<1x32x64xf32> to vector<32x64xf32>
    %cst_135 = arith.constant dense<0.000000e+00> : vector<8x64xf32>
    %280 = tpu.matmul %277, %279, %cst_135 {dimension_numbers = #tpu.dot_dimension_numbers<[1], [0], [0], [1], [0, 0, 1, 1], [], []>} : vector<8x32xf32>, vector<32x64xf32>, vector<8x64xf32> -> vector<8x64xf32>
    %c1_136 = arith.constant 1 : index
    %c0_137 = arith.constant 0 : index
    %c0_138 = arith.constant 0 : index
    %281 = vector.load %arg16[%c1_136, %c0_137, %c0_138] : memref<2x1x64xf32, #tpu.memory_space<vmem>>, vector<1x1x64xf32>
    %282 = vector.shape_cast %281 : vector<1x1x64xf32> to vector<1x64xf32>
    %283 = vector.broadcast %282 : vector<1x64xf32> to vector<8x64xf32>
    %284 = arith.addf %280, %283 : vector<8x64xf32>
    %285 = arith.mulf %284, %284 : vector<8x64xf32>
    %286 = arith.mulf %284, %285 : vector<8x64xf32>
    %cst_139 = arith.constant 4.471500e-02 : f32
    %287 = vector.broadcast %cst_139 : f32 to vector<8x64xf32>
    %288 = arith.mulf %287, %286 : vector<8x64xf32>
    %289 = arith.addf %284, %288 : vector<8x64xf32>
    %cst_140 = arith.constant 0.797884583 : f32
    %290 = vector.broadcast %cst_140 : f32 to vector<8x64xf32>
    %291 = arith.mulf %290, %289 : vector<8x64xf32>
    %292 = math.tanh %291 : vector<8x64xf32>
    %cst_141 = arith.constant 1.000000e+00 : f32
    %293 = vector.broadcast %cst_141 : f32 to vector<8x64xf32>
    %294 = arith.addf %293, %292 : vector<8x64xf32>
    %cst_142 = arith.constant 5.000000e-01 : f32
    %295 = vector.broadcast %cst_142 : f32 to vector<8x64xf32>
    %296 = arith.mulf %295, %294 : vector<8x64xf32>
    %297 = arith.mulf %284, %296 : vector<8x64xf32>
    %c1_143 = arith.constant 1 : index
    %c0_144 = arith.constant 0 : index
    %c0_145 = arith.constant 0 : index
    %298 = vector.load %arg17[%c1_143, %c0_144, %c0_145] : memref<2x64x32xf32, #tpu.memory_space<vmem>>, vector<1x64x32xf32>
    %299 = vector.shape_cast %298 : vector<1x64x32xf32> to vector<64x32xf32>
    %cst_146 = arith.constant dense<0.000000e+00> : vector<8x32xf32>
    %300 = tpu.matmul %297, %299, %cst_146 {dimension_numbers = #tpu.dot_dimension_numbers<[1], [0], [0], [1], [0, 0, 1, 1], [], []>} : vector<8x64xf32>, vector<64x32xf32>, vector<8x32xf32> -> vector<8x32xf32>
    %c1_147 = arith.constant 1 : index
    %c0_148 = arith.constant 0 : index
    %c0_149 = arith.constant 0 : index
    %301 = vector.load %arg18[%c1_147, %c0_148, %c0_149] : memref<2x1x32xf32, #tpu.memory_space<vmem>>, vector<1x1x32xf32>
    %302 = vector.shape_cast %301 : vector<1x1x32xf32> to vector<1x32xf32>
    %303 = vector.broadcast %302 : vector<1x32xf32> to vector<8x32xf32>
    %304 = arith.addf %300, %303 : vector<8x32xf32>
    %305 = arith.addf %304, %277 : vector<8x32xf32>
    %c1_150 = arith.constant 1 : index
    %c0_151 = arith.constant 0 : index
    %c0_152 = arith.constant 0 : index
    %306 = vector.load %arg19[%c1_150, %c0_151, %c0_152] : memref<2x1x32xf32, #tpu.memory_space<vmem>>, vector<1x1x32xf32>
    %307 = vector.shape_cast %306 : vector<1x1x32xf32> to vector<1x32xf32>
    %c1_153 = arith.constant 1 : index
    %c0_154 = arith.constant 0 : index
    %c0_155 = arith.constant 0 : index
    %308 = vector.load %arg20[%c1_153, %c0_154, %c0_155] : memref<2x1x32xf32, #tpu.memory_space<vmem>>, vector<1x1x32xf32>
    %309 = vector.shape_cast %308 : vector<1x1x32xf32> to vector<1x32xf32>
    %cst_156 = arith.constant dense<0.000000e+00> : vector<8xf32>
    %310 = vector.multi_reduction <add>, %305, %cst_156 [1] : vector<8x32xf32> to vector<8xf32>
    %311 = vector.shape_cast %310 : vector<8xf32> to vector<8x1xf32>
    %cst_157 = arith.constant 3.200000e+01 : f32
    %312 = vector.broadcast %cst_157 : f32 to vector<8x1xf32>
    %313 = arith.divf %311, %312 : vector<8x1xf32>
    %314 = vector.broadcast %313 : vector<8x1xf32> to vector<8x32xf32>
    %315 = arith.subf %305, %314 : vector<8x32xf32>
    %316 = arith.mulf %315, %315 : vector<8x32xf32>
    %cst_158 = arith.constant dense<0.000000e+00> : vector<8xf32>
    %317 = vector.multi_reduction <add>, %316, %cst_158 [1] : vector<8x32xf32> to vector<8xf32>
    %318 = vector.shape_cast %317 : vector<8xf32> to vector<8x1xf32>
    %cst_159 = arith.constant 3.200000e+01 : f32
    %319 = vector.broadcast %cst_159 : f32 to vector<8x1xf32>
    %320 = arith.divf %318, %319 : vector<8x1xf32>
    %321 = vector.broadcast %313 : vector<8x1xf32> to vector<8x32xf32>
    %322 = arith.subf %305, %321 : vector<8x32xf32>
    %cst_160 = arith.constant 9.99999996E-13 : f32
    %323 = vector.broadcast %cst_160 : f32 to vector<8x1xf32>
    %324 = arith.addf %320, %323 : vector<8x1xf32>
    %325 = math.rsqrt %324 : vector<8x1xf32>
    %326 = vector.broadcast %325 : vector<8x1xf32> to vector<8x32xf32>
    %327 = arith.mulf %322, %326 : vector<8x32xf32>
    %328 = vector.broadcast %307 : vector<1x32xf32> to vector<8x32xf32>
    %329 = arith.mulf %327, %328 : vector<8x32xf32>
    %330 = vector.broadcast %309 : vector<1x32xf32> to vector<8x32xf32>
    %331 = arith.addf %329, %330 : vector<8x32xf32>
    %332 = vector.extract_strided_slice %331 {offsets = [0, 0], sizes = [1, 32], strides = [1, 1]} : vector<8x32xf32> to vector<1x32xf32>
    %c0_161 = arith.constant 0 : index
    %c0_162 = arith.constant 0 : index
    %333 = vector.load %arg21[%c0_161, %c0_162] : memref<32x32xf32, #tpu.memory_space<vmem>>, vector<32x32xf32>
    %cst_163 = arith.constant dense<0.000000e+00> : vector<1x32xf32>
    %334 = tpu.matmul %332, %333, %cst_163 {dimension_numbers = #tpu.dot_dimension_numbers<[1], [0], [0], [1], [0, 0, 1, 1], [], []>} : vector<1x32xf32>, vector<32x32xf32>, vector<1x32xf32> -> vector<1x32xf32>
    %c0_164 = arith.constant 0 : index
    %c0_165 = arith.constant 0 : index
    %335 = vector.load %arg22[%c0_164, %c0_165] : memref<1x32xf32, #tpu.memory_space<vmem>>, vector<1x32xf32>
    %336 = arith.addf %334, %335 : vector<1x32xf32>
    %337 = math.tanh %336 : vector<1x32xf32>
    %c0_166 = arith.constant 0 : index
    %c0_167 = arith.constant 0 : index
    %338 = vector.load %arg23[%c0_166, %c0_167] : memref<32x128xf32, #tpu.memory_space<vmem>>, vector<32x128xf32>
    %cst_168 = arith.constant dense<0.000000e+00> : vector<1x128xf32>
    %339 = tpu.matmul %337, %338, %cst_168 {dimension_numbers = #tpu.dot_dimension_numbers<[1], [0], [0], [1], [0, 0, 1, 1], [], []>} : vector<1x32xf32>, vector<32x128xf32>, vector<1x128xf32> -> vector<1x128xf32>
    %c0_169 = arith.constant 0 : index
    %c0_170 = arith.constant 0 : index
    %340 = vector.load %arg24[%c0_169, %c0_170] : memref<1x128xf32, #tpu.memory_space<vmem>>, vector<1x128xf32>
    %341 = arith.addf %339, %340 : vector<1x128xf32>
    %342 = arith.negf %341 : vector<1x128xf32>
    %343 = math.exp %342 : vector<1x128xf32>
    %cst_171 = arith.constant 1.000000e+00 : f32
    %344 = vector.broadcast %cst_171 : f32 to vector<1x128xf32>
    %345 = arith.addf %344, %343 : vector<1x128xf32>
    %346 = arith.divf %344, %345 : vector<1x128xf32>
    %c0_172 = arith.constant 0 : index
    %c0_173 = arith.constant 0 : index
    %c0_174 = arith.constant 0 : index
    %347 = vector.load %arg25[%c0_172, %c0_173, %c0_174] : memref<1x1x128xf32, #tpu.memory_space<vmem>>, vector<1x1x128xf32>
    %348 = vector.shape_cast %347 : vector<1x1x128xf32> to vector<1x128xf32>
    %349 = vector.shape_cast %346 : vector<1x128xf32> to vector<1x1x128xf32>
    tpu.vector_store %arg25[%c0_172, %c0_173, %c0_174], %349 {strides = array<i32>} : memref<1x1x128xf32, #tpu.memory_space<vmem>>, vector<1x1x128xf32>,
    return
  }
  func.func @transform_0(%arg0: i32) -> (i32, i32, i32) {
    %c0_i32 = arith.constant 0 : i32
    %c0_i32_0 = arith.constant 0 : i32
    %c0_i32_1 = arith.constant 0 : i32
    return %arg0, %c0_i32, %c0_i32_0 : i32, i32, i32
  }
  func.func @transform_1(%arg0: i32) -> (i32, i32, i32) {
    %c0_i32 = arith.constant 0 : i32
    %c0_i32_0 = arith.constant 0 : i32
    %c0_i32_1 = arith.constant 0 : i32
    return %arg0, %c0_i32, %c0_i32_0 : i32, i32, i32
  }
  func.func @transform_2(%arg0: i32) -> (i32, i32, i32) {
    %c0_i32 = arith.constant 0 : i32
    %c0_i32_0 = arith.constant 0 : i32
    %c0_i32_1 = arith.constant 0 : i32
    return %arg0, %c0_i32, %c0_i32_0 : i32, i32, i32
  }
  func.func @transform_3(%arg0: i32) -> (i32, i32) {
    %c0_i32 = arith.constant 0 : i32
    %c0_i32_0 = arith.constant 0 : i32
    %c0_i32_1 = arith.constant 0 : i32
    return %c0_i32, %c0_i32_0 : i32, i32
  }
  func.func @transform_4(%arg0: i32) -> (i32, i32) {
    %c0_i32 = arith.constant 0 : i32
    %c0_i32_0 = arith.constant 0 : i32
    %c0_i32_1 = arith.constant 0 : i32
    return %c0_i32, %c0_i32_0 : i32, i32
  }
  func.func @transform_5(%arg0: i32) -> (i32, i32) {
    %c0_i32 = arith.constant 0 : i32
    %c0_i32_0 = arith.constant 0 : i32
    %c0_i32_1 = arith.constant 0 : i32
    return %c0_i32, %c0_i32_0 : i32, i32
  }
  func.func @transform_6(%arg0: i32) -> (i32, i32) {
    %c0_i32 = arith.constant 0 : i32
    %c0_i32_0 = arith.constant 0 : i32
    %c0_i32_1 = arith.constant 0 : i32
    return %c0_i32, %c0_i32_0 : i32, i32
  }
  func.func @transform_7(%arg0: i32) -> (i32, i32) {
    %c0_i32 = arith.constant 0 : i32
    %c0_i32_0 = arith.constant 0 : i32
    %c0_i32_1 = arith.constant 0 : i32
    return %c0_i32, %c0_i32_0 : i32, i32
  }
  func.func @transform_8(%arg0: i32) -> (i32, i32, i32) {
    %c0_i32 = arith.constant 0 : i32
    %c0_i32_0 = arith.constant 0 : i32
    %c0_i32_1 = arith.constant 0 : i32
    %c0_i32_2 = arith.constant 0 : i32
    return %c0_i32, %c0_i32_0, %c0_i32_1 : i32, i32, i32
  }
  func.func @transform_9(%arg0: i32) -> (i32, i32, i32) {
    %c0_i32 = arith.constant 0 : i32
    %c0_i32_0 = arith.constant 0 : i32
    %c0_i32_1 = arith.constant 0 : i32
    %c0_i32_2 = arith.constant 0 : i32
    return %c0_i32, %c0_i32_0, %c0_i32_1 : i32, i32, i32
  }
  func.func @transform_10(%arg0: i32) -> (i32, i32, i32) {
    %c0_i32 = arith.constant 0 : i32
    %c0_i32_0 = arith.constant 0 : i32
    %c0_i32_1 = arith.constant 0 : i32
    %c0_i32_2 = arith.constant 0 : i32
    return %c0_i32, %c0_i32_0, %c0_i32_1 : i32, i32, i32
  }
  func.func @transform_11(%arg0: i32) -> (i32, i32, i32) {
    %c0_i32 = arith.constant 0 : i32
    %c0_i32_0 = arith.constant 0 : i32
    %c0_i32_1 = arith.constant 0 : i32
    %c0_i32_2 = arith.constant 0 : i32
    return %c0_i32, %c0_i32_0, %c0_i32_1 : i32, i32, i32
  }
  func.func @transform_12(%arg0: i32) -> (i32, i32, i32) {
    %c0_i32 = arith.constant 0 : i32
    %c0_i32_0 = arith.constant 0 : i32
    %c0_i32_1 = arith.constant 0 : i32
    %c0_i32_2 = arith.constant 0 : i32
    return %c0_i32, %c0_i32_0, %c0_i32_1 : i32, i32, i32
  }
  func.func @transform_13(%arg0: i32) -> (i32, i32, i32) {
    %c0_i32 = arith.constant 0 : i32
    %c0_i32_0 = arith.constant 0 : i32
    %c0_i32_1 = arith.constant 0 : i32
    %c0_i32_2 = arith.constant 0 : i32
    return %c0_i32, %c0_i32_0, %c0_i32_1 : i32, i32, i32
  }
  func.func @transform_14(%arg0: i32) -> (i32, i32, i32) {
    %c0_i32 = arith.constant 0 : i32
    %c0_i32_0 = arith.constant 0 : i32
    %c0_i32_1 = arith.constant 0 : i32
    %c0_i32_2 = arith.constant 0 : i32
    return %c0_i32, %c0_i32_0, %c0_i32_1 : i32, i32, i32
  }
  func.func @transform_15(%arg0: i32) -> (i32, i32, i32) {
    %c0_i32 = arith.constant 0 : i32
    %c0_i32_0 = arith.constant 0 : i32
    %c0_i32_1 = arith.constant 0 : i32
    %c0_i32_2 = arith.constant 0 : i32
    return %c0_i32, %c0_i32_0, %c0_i32_1 : i32, i32, i32
  }
  func.func @transform_16(%arg0: i32) -> (i32, i32, i32) {
    %c0_i32 = arith.constant 0 : i32
    %c0_i32_0 = arith.constant 0 : i32
    %c0_i32_1 = arith.constant 0 : i32
    %c0_i32_2 = arith.constant 0 : i32
    return %c0_i32, %c0_i32_0, %c0_i32_1 : i32, i32, i32
  }
  func.func @transform_17(%arg0: i32) -> (i32, i32, i32) {
    %c0_i32 = arith.constant 0 : i32
    %c0_i32_0 = arith.constant 0 : i32
    %c0_i32_1 = arith.constant 0 : i32
    %c0_i32_2 = arith.constant 0 : i32
    return %c0_i32, %c0_i32_0, %c0_i32_1 : i32, i32, i32
  }
  func.func @transform_18(%arg0: i32) -> (i32, i32, i32) {
    %c0_i32 = arith.constant 0 : i32
    %c0_i32_0 = arith.constant 0 : i32
    %c0_i32_1 = arith.constant 0 : i32
    %c0_i32_2 = arith.constant 0 : i32
    return %c0_i32, %c0_i32_0, %c0_i32_1 : i32, i32, i32
  }
  func.func @transform_19(%arg0: i32) -> (i32, i32, i32) {
    %c0_i32 = arith.constant 0 : i32
    %c0_i32_0 = arith.constant 0 : i32
    %c0_i32_1 = arith.constant 0 : i32
    %c0_i32_2 = arith.constant 0 : i32
    return %c0_i32, %c0_i32_0, %c0_i32_1 : i32, i32, i32
  }
  func.func @transform_20(%arg0: i32) -> (i32, i32) {
    %c0_i32 = arith.constant 0 : i32
    %c0_i32_0 = arith.constant 0 : i32
    %c0_i32_1 = arith.constant 0 : i32
    return %c0_i32, %c0_i32_0 : i32, i32
  }
  func.func @transform_21(%arg0: i32) -> (i32, i32) {
    %c0_i32 = arith.constant 0 : i32
    %c0_i32_0 = arith.constant 0 : i32
    %c0_i32_1 = arith.constant 0 : i32
    return %c0_i32, %c0_i32_0 : i32, i32
  }
  func.func @transform_22(%arg0: i32) -> (i32, i32) {
    %c0_i32 = arith.constant 0 : i32
    %c0_i32_0 = arith.constant 0 : i32
    %c0_i32_1 = arith.constant 0 : i32
    return %c0_i32, %c0_i32_0 : i32, i32
  }
  func.func @transform_23(%arg0: i32) -> (i32, i32) {
    %c0_i32 = arith.constant 0 : i32
    %c0_i32_0 = arith.constant 0 : i32
    %c0_i32_1 = arith.constant 0 : i32
    return %c0_i32, %c0_i32_0 : i32, i32
  }
  func.func @transform_24(%arg0: i32) -> (i32, i32, i32) {
    %c0_i32 = arith.constant 0 : i32
    %c0_i32_0 = arith.constant 0 : i32
    %c0_i32_1 = arith.constant 0 : i32
    return %arg0, %c0_i32, %c0_i32_0 : i32, i32, i32
  }
}

</mosaic_0001>

<llo_original>
// kernel: bert_multilabel_forward.1
$region0: #{bert_multilabel_forward.1}
  #allocation0 [shape = 'u32[]', space=smem, size = 0x4, offset = 0x4, fixed_abs, tag = 'smem constant byte address 0x4 - core index']
  #allocation1 [shape = 'u32[144,128]{1,0:T(1,128)}', space=vmem, size = 0x12000, scoped, tag = 'internal scratch']
  %s0 = inlined_call_operand.vmem [shape: s32[2,8,1], index: 0, kind: input, shape index: {}]
  %s1 = inlined_call_operand.vmem [shape: s32[2,8,1], index: 1, kind: input, shape index: {}]
  %s2 = inlined_call_operand.vmem [shape: s32[2,1,8], index: 2, kind: input, shape index: {}]
  %s3 = inlined_call_operand.vmem [shape: f32[56,32], index: 3, kind: input, shape index: {}]
  %s4 = inlined_call_operand.vmem [shape: f32[16,32], index: 4, kind: input, shape index: {}]
  %s5 = inlined_call_operand.vmem [shape: f32[8,32], index: 5, kind: input, shape index: {}]
  %s6 = inlined_call_operand.hbm [shape: f32[1,32], index: 6, kind: input, shape index: {}]
  %s7 = inlined_call_operand.hbm [shape: f32[1,32], index: 7, kind: input, shape index: {}]
  %s8 = inlined_call_operand.vmem [shape: f32[2,32,96], index: 8, kind: input, shape index: {}]
  %s9 = inlined_call_operand.hbm [shape: f32[2,1,96], index: 9, kind: input, shape index: {}]
  %s10 = inlined_call_operand.vmem [shape: f32[2,32,32], index: 10, kind: input, shape index: {}]
  %s11 = inlined_call_operand.hbm [shape: f32[2,1,32], index: 11, kind: input, shape index: {}]
  %s12 = inlined_call_operand.hbm [shape: f32[2,1,32], index: 12, kind: input, shape index: {}]
  %s13 = inlined_call_operand.hbm [shape: f32[2,1,32], index: 13, kind: input, shape index: {}]
  %s14 = inlined_call_operand.vmem [shape: f32[2,32,64], index: 14, kind: input, shape index: {}]
  %s15 = inlined_call_operand.hbm [shape: f32[2,1,64], index: 15, kind: input, shape index: {}]
  %s16 = inlined_call_operand.vmem [shape: f32[2,64,32], index: 16, kind: input, shape index: {}]
  %s17 = inlined_call_operand.hbm [shape: f32[2,1,32], index: 17, kind: input, shape index: {}]
  %s18 = inlined_call_operand.hbm [shape: f32[2,1,32], index: 18, kind: input, shape index: {}]
  %s19 = inlined_call_operand.hbm [shape: f32[2,1,32], index: 19, kind: input, shape index: {}]
  %s20 = inlined_call_operand.vmem [shape: f32[32,32], index: 20, kind: input, shape index: {}]
  %s21 = inlined_call_operand.hbm [shape: f32[1,32], index: 21, kind: input, shape index: {}]
  %s22 = inlined_call_operand.vmem [shape: f32[32,128], index: 22, kind: input, shape index: {}]
  %s23 = inlined_call_operand.hbm [shape: f32[1,128], index: 23, kind: input, shape index: {}]
  %s24 = inlined_call_operand.hbm [shape: f32[2,1,128], index: 24, kind: output, shape index: {}]
  %s25 = sld [smem:[#allocation0]]
  $region177: #{bert_multilabel_forward.1} parent=0
    _
  %s27 = ssub.s32 1, %s25
  %s28 = scalar_select 0, %s27, %s25
  $region1: #{bert_multilabel_forward.1} parent=0
    #allocation2 [shape = 'u8[512]{0}', space=vmem, size = 0x400, scoped, tag = 'input window, operand 6, single buffered']
    #allocation3 [shape = 's32[2]{0}', space=sflag, size = 0x8, scoped, tag = 'scoped memory for bert_multilabel_forward.1']
    #allocation4 [shape = 's32[2]{0}', space=sflag, size = 0x8, scoped, tag = 'scoped memory for bert_multilabel_forward.1']
    #allocation5 [shape = 'u8[512]{0}', space=vmem, size = 0x400, scoped, tag = 'input window, operand 7, single buffered']
    #allocation6 [shape = 's32[1]{0}', space=sflag, size = 0x4, scoped, tag = 'scoped memory for bert_multilabel_forward.1']
    #allocation7 [shape = 'u8[1024]{0}', space=vmem, size = 0x400, scoped, tag = 'input window, operand 9, single buffered']
    #allocation8 [shape = 'u8[1024]{0}', space=vmem, size = 0x400, scoped, tag = 'input window, operand 11, single buffered']
    #allocation9 [shape = 's32[1]{0}', space=sflag, size = 0x4, scoped, tag = 'scoped memory for bert_multilabel_forward.1']
    #allocation10 [shape = 'u8[1024]{0}', space=vmem, size = 0x400, scoped, tag = 'input window, operand 12, single buffered']
    #allocation11 [shape = 'u8[1024]{0}', space=vmem, size = 0x400, scoped, tag = 'input window, operand 13, single buffered']
    #allocation12 [shape = 's32[1]{0}', space=sflag, size = 0x4, scoped, tag = 'scoped memory for bert_multilabel_forward.1']
    #allocation13 [shape = 'u8[1024]{0}', space=vmem, size = 0x400, scoped, tag = 'input window, operand 15, single buffered']
    #allocation14 [shape = 'u8[1024]{0}', space=vmem, size = 0x400, scoped, tag = 'input window, operand 17, single buffered']
    #allocation15 [shape = 's32[1]{0}', space=sflag, size = 0x4, scoped, tag = 'scoped memory for bert_multilabel_forward.1']
    #allocation16 [shape = 'u8[1024]{0}', space=vmem, size = 0x400, scoped, tag = 'input window, operand 18, single buffered']
    #allocation17 [shape = 'u8[1024]{0}', space=vmem, size = 0x400, scoped, tag = 'input window, operand 19, single buffered']
    #allocation18 [shape = 's32[1]{0}', space=sflag, size = 0x4, scoped, tag = 'scoped memory for bert_multilabel_forward.1']
    #allocation19 [shape = 'u8[512]{0}', space=vmem, size = 0x400, scoped, tag = 'input window, operand 21, single buffered']
    #allocation20 [shape = 'u8[512]{0}', space=vmem, size = 0x400, scoped, tag = 'input window, operand 23, single buffered']
    #allocation21 [shape = 's32[1]{0}', space=sflag, size = 0x4, scoped, tag = 'scoped memory for bert_multilabel_forward.1']
    #allocation22 [shape = 'u8[1024]{0}', space=vmem, size = 0x400, scoped, tag = 'output window, operand 0']
    %29 = vsyncpa [#allocation3], 0
    %30 = vsyncpa [#allocation6], 0
    %31 = vsyncpa [#allocation9], 0
    %32 = vsyncpa [#allocation12], 0
    %33 = vsyncpa [#allocation15], 0
    %34 = vsyncpa [#allocation18], 0
    %35 = vsyncpa [#allocation21], 0
    %36 = vsyncpa [#allocation4], 0
    %s37 = scalar_lea.sflag [#allocation4], 1
    %38 = vsyncpa %s37, 0
    loop: start=0, step=1, limit=4
    $region2: #{bert_multilabel_forward.1} parent=1 // loop_pre_header
      _
    $region3: #{bert_multilabel_forward.1} parent=1 // loop_header
      %s40 = sphi 0, %s44
      %p41 = scmp.ge.s32.totalorder %s40, 4
      %s50 = sphi 0, %s52
      %s53 = sphi 0, %s50
      %s54 = sphi 0, %s53
      %s70 = sphi 0, %s54
      %s76 = sphi 0, %s78
      %s79 = sphi 0, %s76
      %s80 = sphi 0, %s79
      %s96 = sphi 0, %s80
      %s102 = sphi 0, %s104
      %s105 = sphi 0, %s102
      %s106 = sphi 0, %s105
      %s122 = sphi 0, %s106
      %s126 = sphi 0, %s126
      %s128 = sphi 0, %s126
      %s129 = sphi 0, %s128
      %s143 = sphi 0, %s129
      %s147 = sphi 0, %s147
      %s149 = sphi 0, %s147
      %s150 = sphi 0, %s149
      %s164 = sphi 0, %s150
      %s168 = sphi 0, %s168
      %s170 = sphi 0, %s168
      %s171 = sphi 0, %s170
      %s185 = sphi 0, %s171
      %s189 = sphi 0, %s189
      %s191 = sphi 0, %s189
      %s192 = sphi 0, %s191
      %s206 = sphi 0, %s192
      %s210 = sphi 0, %s210
      %s212 = sphi 0, %s210
      %s213 = sphi 0, %s212
      %s227 = sphi 0, %s213
      %s231 = sphi 0, %s231
      %s233 = sphi 0, %s231
      %s234 = sphi 0, %s233
      %s248 = sphi 0, %s234
      %s252 = sphi 0, %s252
      %s254 = sphi 0, %s252
      %s255 = sphi 0, %s254
      %s269 = sphi 0, %s255
      %s273 = sphi 0, %s273
      %s275 = sphi 0, %s273
      %s276 = sphi 0, %s275
      %s290 = sphi 0, %s276
      %s294 = sphi 0, %s294
      %s296 = sphi 0, %s294
      %s297 = sphi 0, %s296
      %s311 = sphi 0, %s297
      %s315 = sphi 0, %s315
      %s317 = sphi 0, %s315
      %s318 = sphi 0, %s317
      %s332 = sphi 0, %s318
      %s336 = sphi 0, %s336
      %s338 = sphi 0, %s336
      %s339 = sphi 0, %s338
      %s353 = sphi 0, %s339
      %s357 = sphi 0, %s357
      %s359 = sphi 0, %s357
      %s360 = sphi 0, %s359
      %s374 = sphi 0, %s360
      %s378 = sphi 0, %s378
      %s380 = sphi 0, %s378
      %s381 = sphi 0, %s380
      %s395 = sphi 0, %s381
      %s399 = sphi 0, %s399
      %s401 = sphi 0, %s399
      %s402 = sphi 0, %s401
      %s416 = sphi 0, %s402
      %s420 = sphi 0, %s420
      %s422 = sphi 0, %s420
      %s423 = sphi 0, %s422
      %s437 = sphi 0, %s423
      %s441 = sphi 0, %s441
      %s443 = sphi 0, %s441
      %s444 = sphi 0, %s443
      %s458 = sphi 0, %s444
      %s462 = sphi 0, %s462
      %s464 = sphi 0, %s462
      %s465 = sphi 0, %s464
      %s479 = sphi 0, %s465
      %s483 = sphi 0, %s483
      %s485 = sphi 0, %s483
      %s486 = sphi 0, %s485
      %s500 = sphi 0, %s486
      %s504 = sphi 0, %s504
      %s506 = sphi 0, %s504
      %s507 = sphi 0, %s506
      %s521 = sphi 0, %s507
      %s525 = sphi 0, %s525
      %s527 = sphi 0, %s525
      %s528 = sphi 0, %s527
      %s542 = sphi 0, %s528
      %s546 = sphi 0, %s546
      %s548 = sphi 0, %s546
      %s549 = sphi 0, %s548
      %s563 = sphi 0, %s549
      %s569 = sphi 0, %s571
      %s572 = sphi 0, %s569
      %s573 = sphi 0, %s572
      %s589 = sphi 0, %s573
    $region4: #{bert_multilabel_forward.1} parent=1 // loop_header_branch
      %43 = sbr.rel (%p41) target = $region8
    $region5: #{bert_multilabel_forward.1} parent=1 // loop_body
      %s45 = ssub.s32 %s40, 1
      %s46 = ssub.s32 %s40, 2
      %s47 = sadd.s32 %s40, 1
      %s48 = ssub.s32 %s40, %s47
      %p49 = scmp.eq.s32.totalorder %s48, 0
      %s51 = sadd.s32 %s50, 1
      %s52 = scalar_select %p49, %s50, %s51
      %p55 = pneg %p49
      %p56 = scmp.eq.s32.totalorder %s40, 1
      %p57 = por %p55, %p56
      %p58 = scmp.ne.s32.totalorder %s50, %s53
      %p59 = scmp.eq.s32.totalorder %s40, 0
      %p60 = por %p58, %p59
      %p61 = scmp.ne.s32.totalorder %s50, %s53
      %p62 = scmp.eq.s32.totalorder %s45, 1
      %p63 = por %p61, %p62
      %p64 = scmp.ne.s32.totalorder %s53, %s54
      %p65 = scmp.eq.s32.totalorder %s45, 0
      %p66 = por %p64, %p65
      %p67 = scmp.ne.s32.totalorder %s53, %s54
      %p68 = scmp.eq.s32.totalorder %s46, 1
      %p69 = por %p67, %p68
      %p71 = scmp.ne.s32.totalorder %s54, %s70
      %p72 = scmp.eq.s32.totalorder %s46, 0
      %p73 = por %p71, %p72
      %s74 = ssub.s32 %s40, %s47
      %p75 = scmp.eq.s32.totalorder %s74, 0
      %s77 = sadd.s32 %s76, 1
      %s78 = scalar_select %p75, %s76, %s77
      %p81 = pneg %p75
      %p82 = scmp.eq.s32.totalorder %s40, 1
      %p83 = por %p81, %p82
      %p84 = scmp.ne.s32.totalorder %s76, %s79
      %p85 = scmp.eq.s32.totalorder %s40, 0
      %p86 = por %p84, %p85
      %p87 = scmp.ne.s32.totalorder %s76, %s79
      %p88 = scmp.eq.s32.totalorder %s45, 1
      %p89 = por %p87, %p88
      %p90 = scmp.ne.s32.totalorder %s79, %s80
      %p91 = scmp.eq.s32.totalorder %s45, 0
      %p92 = por %p90, %p91
      %p93 = scmp.ne.s32.totalorder %s79, %s80
      %p94 = scmp.eq.s32.totalorder %s46, 1
      %p95 = por %p93, %p94
      %p97 = scmp.ne.s32.totalorder %s80, %s96
      %p98 = scmp.eq.s32.totalorder %s46, 0
      %p99 = por %p97, %p98
      %s100 = ssub.s32 %s40, %s47
      %p101 = scmp.eq.s32.totalorder %s100, 0
      %s103 = sadd.s32 %s102, 1
      %s104 = scalar_select %p101, %s102, %s103
      %p107 = pneg %p101
      %p108 = scmp.eq.s32.totalorder %s40, 1
      %p109 = por %p107, %p108
      %p110 = scmp.ne.s32.totalorder %s102, %s105
      %p111 = scmp.eq.s32.totalorder %s40, 0
      %p112 = por %p110, %p111
      %p113 = scmp.ne.s32.totalorder %s102, %s105
      %p114 = scmp.eq.s32.totalorder %s45, 1
      %p115 = por %p113, %p114
      %p116 = scmp.ne.s32.totalorder %s105, %s106
      %p117 = scmp.eq.s32.totalorder %s45, 0
      %p118 = por %p116, %p117
      %p119 = scmp.ne.s32.totalorder %s105, %s106
      %p120 = scmp.eq.s32.totalorder %s46, 1
      %p121 = por %p119, %p120
      %p123 = scmp.ne.s32.totalorder %s106, %s122
      %p124 = scmp.eq.s32.totalorder %s46, 0
      %p125 = por %p123, %p124
      %s127 = sadd.s32 %s126, 1
      %p130 = scmp.eq.s32.totalorder %s40, 1
      %p131 = scmp.ne.s32.totalorder %s126, %s128
      %p132 = scmp.eq.s32.totalorder %s40, 0
      %p133 = por %p131, %p132
      %p134 = scmp.ne.s32.totalorder %s126, %s128
      %p135 = scmp.eq.s32.totalorder %s45, 1
      %p136 = por %p134, %p135
      %p137 = scmp.ne.s32.totalorder %s128, %s129
      %p138 = scmp.eq.s32.totalorder %s45, 0
      %p139 = por %p137, %p138
      %p140 = scmp.ne.s32.totalorder %s128, %s129
      %p141 = scmp.eq.s32.totalorder %s46, 1
      %p142 = por %p140, %p141
      %p144 = scmp.ne.s32.totalorder %s129, %s143
      %p145 = scmp.eq.s32.totalorder %s46, 0
      %p146 = por %p144, %p145
      %s148 = sadd.s32 %s147, 1
      %p151 = scmp.eq.s32.totalorder %s40, 1
      %p152 = scmp.ne.s32.totalorder %s147, %s149
      %p153 = scmp.eq.s32.totalorder %s40, 0
      %p154 = por %p152, %p153
      %p155 = scmp.ne.s32.totalorder %s147, %s149
      %p156 = scmp.eq.s32.totalorder %s45, 1
      %p157 = por %p155, %p156
      %p158 = scmp.ne.s32.totalorder %s149, %s150
      %p159 = scmp.eq.s32.totalorder %s45, 0
      %p160 = por %p158, %p159
      %p161 = scmp.ne.s32.totalorder %s149, %s150
      %p162 = scmp.eq.s32.totalorder %s46, 1
      %p163 = por %p161, %p162
      %p165 = scmp.ne.s32.totalorder %s150, %s164
      %p166 = scmp.eq.s32.totalorder %s46, 0
      %p167 = por %p165, %p166
      %s169 = sadd.s32 %s168, 1
      %p172 = scmp.eq.s32.totalorder %s40, 1
      %p173 = scmp.ne.s32.totalorder %s168, %s170
      %p174 = scmp.eq.s32.totalorder %s40, 0
      %p175 = por %p173, %p174
      %p176 = scmp.ne.s32.totalorder %s168, %s170
      %p177 = scmp.eq.s32.totalorder %s45, 1
      %p178 = por %p176, %p177
      %p179 = scmp.ne.s32.totalorder %s170, %s171
      %p180 = scmp.eq.s32.totalorder %s45, 0
      %p181 = por %p179, %p180
      %p182 = scmp.ne.s32.totalorder %s170, %s171
      %p183 = scmp.eq.s32.totalorder %s46, 1
      %p184 = por %p182, %p183
      %p186 = scmp.ne.s32.totalorder %s171, %s185
      %p187 = scmp.eq.s32.totalorder %s46, 0
      %p188 = por %p186, %p187
      %s190 = sadd.s32 %s189, 1
      %p193 = scmp.eq.s32.totalorder %s40, 1
      %p194 = scmp.ne.s32.totalorder %s189, %s191
      %p195 = scmp.eq.s32.totalorder %s40, 0
      %p196 = por %p194, %p195
      %p197 = scmp.ne.s32.totalorder %s189, %s191
      %p198 = scmp.eq.s32.totalorder %s45, 1
      %p199 = por %p197, %p198
      %p200 = scmp.ne.s32.totalorder %s191, %s192
      %p201 = scmp.eq.s32.totalorder %s45, 0
      %p202 = por %p200, %p201
      %p203 = scmp.ne.s32.totalorder %s191, %s192
      %p204 = scmp.eq.s32.totalorder %s46, 1
      %p205 = por %p203, %p204
      %p207 = scmp.ne.s32.totalorder %s192, %s206
      %p208 = scmp.eq.s32.totalorder %s46, 0
      %p209 = por %p207, %p208
      %s211 = sadd.s32 %s210, 1
      %p214 = scmp.eq.s32.totalorder %s40, 1
      %p215 = scmp.ne.s32.totalorder %s210, %s212
      %p216 = scmp.eq.s32.totalorder %s40, 0
      %p217 = por %p215, %p216
      %p218 = scmp.ne.s32.totalorder %s210, %s212
      %p219 = scmp.eq.s32.totalorder %s45, 1
      %p220 = por %p218, %p219
      %p221 = scmp.ne.s32.totalorder %s212, %s213
      %p222 = scmp.eq.s32.totalorder %s45, 0
      %p223 = por %p221, %p222
      %p224 = scmp.ne.s32.totalorder %s212, %s213
      %p225 = scmp.eq.s32.totalorder %s46, 1
      %p226 = por %p224, %p225
      %p228 = scmp.ne.s32.totalorder %s213, %s227
      %p229 = scmp.eq.s32.totalorder %s46, 0
      %p230 = por %p228, %p229
      %s232 = sadd.s32 %s231, 1
      %p235 = scmp.eq.s32.totalorder %s40, 1
      %p236 = scmp.ne.s32.totalorder %s231, %s233
      %p237 = scmp.eq.s32.totalorder %s40, 0
      %p238 = por %p236, %p237
      %p239 = scmp.ne.s32.totalorder %s231, %s233
      %p240 = scmp.eq.s32.totalorder %s45, 1
      %p241 = por %p239, %p240
      %p242 = scmp.ne.s32.totalorder %s233, %s234
      %p243 = scmp.eq.s32.totalorder %s45, 0
      %p244 = por %p242, %p243
      %p245 = scmp.ne.s32.totalorder %s233, %s234
      %p246 = scmp.eq.s32.totalorder %s46, 1
      %p247 = por %p245, %p246
      %p249 = scmp.ne.s32.totalorder %s234, %s248
      %p250 = scmp.eq.s32.totalorder %s46, 0
      %p251 = por %p249, %p250
      %s253 = sadd.s32 %s252, 1
      %p256 = scmp.eq.s32.totalorder %s40, 1
      %p257 = scmp.ne.s32.totalorder %s252, %s254
      %p258 = scmp.eq.s32.totalorder %s40, 0
      %p259 = por %p257, %p258
      %p260 = scmp.ne.s32.totalorder %s252, %s254
      %p261 = scmp.eq.s32.totalorder %s45, 1
      %p262 = por %p260, %p261
      %p263 = scmp.ne.s32.totalorder %s254, %s255
      %p264 = scmp.eq.s32.totalorder %s45, 0
      %p265 = por %p263, %p264
      %p266 = scmp.ne.s32.totalorder %s254, %s255
      %p267 = scmp.eq.s32.totalorder %s46, 1
      %p268 = por %p266, %p267
      %p270 = scmp.ne.s32.totalorder %s255, %s269
      %p271 = scmp.eq.s32.totalorder %s46, 0
      %p272 = por %p270, %p271
      %s274 = sadd.s32 %s273, 1
      %p277 = scmp.eq.s32.totalorder %s40, 1
      %p278 = scmp.ne.s32.totalorder %s273, %s275
      %p279 = scmp.eq.s32.totalorder %s40, 0
      %p280 = por %p278, %p279
      %p281 = scmp.ne.s32.totalorder %s273, %s275
      %p282 = scmp.eq.s32.totalorder %s45, 1
      %p283 = por %p281, %p282
      %p284 = scmp.ne.s32.totalorder %s275, %s276
      %p285 = scmp.eq.s32.totalorder %s45, 0
      %p286 = por %p284, %p285
      %p287 = scmp.ne.s32.totalorder %s275, %s276
      %p288 = scmp.eq.s32.totalorder %s46, 1
      %p289 = por %p287, %p288
      %p291 = scmp.ne.s32.totalorder %s276, %s290
      %p292 = scmp.eq.s32.totalorder %s46, 0
      %p293 = por %p291, %p292
      %s295 = sadd.s32 %s294, 1
      %p298 = scmp.eq.s32.totalorder %s40, 1
      %p299 = scmp.ne.s32.totalorder %s294, %s296
      %p300 = scmp.eq.s32.totalorder %s40, 0
      %p301 = por %p299, %p300
      %p302 = scmp.ne.s32.totalorder %s294, %s296
      %p303 = scmp.eq.s32.totalorder %s45, 1
      %p304 = por %p302, %p303
      %p305 = scmp.ne.s32.totalorder %s296, %s297
      %p306 = scmp.eq.s32.totalorder %s45, 0
      %p307 = por %p305, %p306
      %p308 = scmp.ne.s32.totalorder %s296, %s297
      %p309 = scmp.eq.s32.totalorder %s46, 1
      %p310 = por %p308, %p309
      %p312 = scmp.ne.s32.totalorder %s297, %s311
      %p313 = scmp.eq.s32.totalorder %s46, 0
      %p314 = por %p312, %p313
      %s316 = sadd.s32 %s315, 1
      %p319 = scmp.eq.s32.totalorder %s40, 1
      %p320 = scmp.ne.s32.totalorder %s315, %s317
      %p321 = scmp.eq.s32.totalorder %s40, 0
      %p322 = por %p320, %p321
      %p323 = scmp.ne.s32.totalorder %s315, %s317
      %p324 = scmp.eq.s32.totalorder %s45, 1
      %p325 = por %p323, %p324
      %p326 = scmp.ne.s32.totalorder %s317, %s318
      %p327 = scmp.eq.s32.totalorder %s45, 0
      %p328 = por %p326, %p327
      %p329 = scmp.ne.s32.totalorder %s317, %s318
      %p330 = scmp.eq.s32.totalorder %s46, 1
      %p331 = por %p329, %p330
      %p333 = scmp.ne.s32.totalorder %s318, %s332
      %p334 = scmp.eq.s32.totalorder %s46, 0
      %p335 = por %p333, %p334
      %s337 = sadd.s32 %s336, 1
      %p340 = scmp.eq.s32.totalorder %s40, 1
      %p341 = scmp.ne.s32.totalorder %s336, %s338
      %p342 = scmp.eq.s32.totalorder %s40, 0
      %p343 = por %p341, %p342
      %p344 = scmp.ne.s32.totalorder %s336, %s338
      %p345 = scmp.eq.s32.totalorder %s45, 1
      %p346 = por %p344, %p345
      %p347 = scmp.ne.s32.totalorder %s338, %s339
      %p348 = scmp.eq.s32.totalorder %s45, 0
      %p349 = por %p347, %p348
      %p350 = scmp.ne.s32.totalorder %s338, %s339
      %p351 = scmp.eq.s32.totalorder %s46, 1
      %p352 = por %p350, %p351
      %p354 = scmp.ne.s32.totalorder %s339, %s353
      %p355 = scmp.eq.s32.totalorder %s46, 0
      %p356 = por %p354, %p355
      %s358 = sadd.s32 %s357, 1
      %p361 = scmp.eq.s32.totalorder %s40, 1
      %p362 = scmp.ne.s32.totalorder %s357, %s359
      %p363 = scmp.eq.s32.totalorder %s40, 0
      %p364 = por %p362, %p363
      %p365 = scmp.ne.s32.totalorder %s357, %s359
      %p366 = scmp.eq.s32.totalorder %s45, 1
      %p367 = por %p365, %p366
      %p368 = scmp.ne.s32.totalorder %s359, %s360
      %p369 = scmp.eq.s32.totalorder %s45, 0
      %p370 = por %p368, %p369
      %p371 = scmp.ne.s32.totalorder %s359, %s360
      %p372 = scmp.eq.s32.totalorder %s46, 1
      %p373 = por %p371, %p372
      %p375 = scmp.ne.s32.totalorder %s360, %s374
      %p376 = scmp.eq.s32.totalorder %s46, 0
      %p377 = por %p375, %p376
      %s379 = sadd.s32 %s378, 1
      %p382 = scmp.eq.s32.totalorder %s40, 1
      %p383 = scmp.ne.s32.totalorder %s378, %s380
      %p384 = scmp.eq.s32.totalorder %s40, 0
      %p385 = por %p383, %p384
      %p386 = scmp.ne.s32.totalorder %s378, %s380
      %p387 = scmp.eq.s32.totalorder %s45, 1
      %p388 = por %p386, %p387
      %p389 = scmp.ne.s32.totalorder %s380, %s381
      %p390 = scmp.eq.s32.totalorder %s45, 0
      %p391 = por %p389, %p390
      %p392 = scmp.ne.s32.totalorder %s380, %s381
      %p393 = scmp.eq.s32.totalorder %s46, 1
      %p394 = por %p392, %p393
      %p396 = scmp.ne.s32.totalorder %s381, %s395
      %p397 = scmp.eq.s32.totalorder %s46, 0
      %p398 = por %p396, %p397
      %s400 = sadd.s32 %s399, 1
      %p403 = scmp.eq.s32.totalorder %s40, 1
      %p404 = scmp.ne.s32.totalorder %s399, %s401
      %p405 = scmp.eq.s32.totalorder %s40, 0
      %p406 = por %p404, %p405
      %p407 = scmp.ne.s32.totalorder %s399, %s401
      %p408 = scmp.eq.s32.totalorder %s45, 1
      %p409 = por %p407, %p408
      %p410 = scmp.ne.s32.totalorder %s401, %s402
      %p411 = scmp.eq.s32.totalorder %s45, 0
      %p412 = por %p410, %p411
      %p413 = scmp.ne.s32.totalorder %s401, %s402
      %p414 = scmp.eq.s32.totalorder %s46, 1
      %p415 = por %p413, %p414
      %p417 = scmp.ne.s32.totalorder %s402, %s416
      %p418 = scmp.eq.s32.totalorder %s46, 0
      %p419 = por %p417, %p418
      %s421 = sadd.s32 %s420, 1
      %p424 = scmp.eq.s32.totalorder %s40, 1
      %p425 = scmp.ne.s32.totalorder %s420, %s422
      %p426 = scmp.eq.s32.totalorder %s40, 0
      %p427 = por %p425, %p426
      %p428 = scmp.ne.s32.totalorder %s420, %s422
      %p429 = scmp.eq.s32.totalorder %s45, 1
      %p430 = por %p428, %p429
      %p431 = scmp.ne.s32.totalorder %s422, %s423
      %p432 = scmp.eq.s32.totalorder %s45, 0
      %p433 = por %p431, %p432
      %p434 = scmp.ne.s32.totalorder %s422, %s423
      %p435 = scmp.eq.s32.totalorder %s46, 1
      %p436 = por %p434, %p435
      %p438 = scmp.ne.s32.totalorder %s423, %s437
      %p439 = scmp.eq.s32.totalorder %s46, 0
      %p440 = por %p438, %p439
      %s442 = sadd.s32 %s441, 1
      %p445 = scmp.eq.s32.totalorder %s40, 1
      %p446 = scmp.ne.s32.totalorder %s441, %s443
      %p447 = scmp.eq.s32.totalorder %s40, 0
      %p448 = por %p446, %p447
      %p449 = scmp.ne.s32.totalorder %s441, %s443
      %p450 = scmp.eq.s32.totalorder %s45, 1
      %p451 = por %p449, %p450
      %p452 = scmp.ne.s32.totalorder %s443, %s444
      %p453 = scmp.eq.s32.totalorder %s45, 0
      %p454 = por %p452, %p453
      %p455 = scmp.ne.s32.totalorder %s443, %s444
      %p456 = scmp.eq.s32.totalorder %s46, 1
      %p457 = por %p455, %p456
      %p459 = scmp.ne.s32.totalorder %s444, %s458
      %p460 = scmp.eq.s32.totalorder %s46, 0
      %p461 = por %p459, %p460
      %s463 = sadd.s32 %s462, 1
      %p466 = scmp.eq.s32.totalorder %s40, 1
      %p467 = scmp.ne.s32.totalorder %s462, %s464
      %p468 = scmp.eq.s32.totalorder %s40, 0
      %p469 = por %p467, %p468
      %p470 = scmp.ne.s32.totalorder %s462, %s464
      %p471 = scmp.eq.s32.totalorder %s45, 1
      %p472 = por %p470, %p471
      %p473 = scmp.ne.s32.totalorder %s464, %s465
      %p474 = scmp.eq.s32.totalorder %s45, 0
      %p475 = por %p473, %p474
      %p476 = scmp.ne.s32.totalorder %s464, %s465
      %p477 = scmp.eq.s32.totalorder %s46, 1
      %p478 = por %p476, %p477
      %p480 = scmp.ne.s32.totalorder %s465, %s479
      %p481 = scmp.eq.s32.totalorder %s46, 0
      %p482 = por %p480, %p481
      %s484 = sadd.s32 %s483, 1
      %p487 = scmp.eq.s32.totalorder %s40, 1
      %p488 = scmp.ne.s32.totalorder %s483, %s485
      %p489 = scmp.eq.s32.totalorder %s40, 0
      %p490 = por %p488, %p489
      %p491 = scmp.ne.s32.totalorder %s483, %s485
      %p492 = scmp.eq.s32.totalorder %s45, 1
      %p493 = por %p491, %p492
      %p494 = scmp.ne.s32.totalorder %s485, %s486
      %p495 = scmp.eq.s32.totalorder %s45, 0
      %p496 = por %p494, %p495
      %p497 = scmp.ne.s32.totalorder %s485, %s486
      %p498 = scmp.eq.s32.totalorder %s46, 1
      %p499 = por %p497, %p498
      %p501 = scmp.ne.s32.totalorder %s486, %s500
      %p502 = scmp.eq.s32.totalorder %s46, 0
      %p503 = por %p501, %p502
      %s505 = sadd.s32 %s504, 1
      %p508 = scmp.eq.s32.totalorder %s40, 1
      %p509 = scmp.ne.s32.totalorder %s504, %s506
      %p510 = scmp.eq.s32.totalorder %s40, 0
      %p511 = por %p509, %p510
      %p512 = scmp.ne.s32.totalorder %s504, %s506
      %p513 = scmp.eq.s32.totalorder %s45, 1
      %p514 = por %p512, %p513
      %p515 = scmp.ne.s32.totalorder %s506, %s507
      %p516 = scmp.eq.s32.totalorder %s45, 0
      %p517 = por %p515, %p516
      %p518 = scmp.ne.s32.totalorder %s506, %s507
      %p519 = scmp.eq.s32.totalorder %s46, 1
      %p520 = por %p518, %p519
      %p522 = scmp.ne.s32.totalorder %s507, %s521
      %p523 = scmp.eq.s32.totalorder %s46, 0
      %p524 = por %p522, %p523
      %s526 = sadd.s32 %s525, 1
      %p529 = scmp.eq.s32.totalorder %s40, 1
      %p530 = scmp.ne.s32.totalorder %s525, %s527
      %p531 = scmp.eq.s32.totalorder %s40, 0
      %p532 = por %p530, %p531
      %p533 = scmp.ne.s32.totalorder %s525, %s527
      %p534 = scmp.eq.s32.totalorder %s45, 1
      %p535 = por %p533, %p534
      %p536 = scmp.ne.s32.totalorder %s527, %s528
      %p537 = scmp.eq.s32.totalorder %s45, 0
      %p538 = por %p536, %p537
      %p539 = scmp.ne.s32.totalorder %s527, %s528
      %p540 = scmp.eq.s32.totalorder %s46, 1
      %p541 = por %p539, %p540
      %p543 = scmp.ne.s32.totalorder %s528, %s542
      %p544 = scmp.eq.s32.totalorder %s46, 0
      %p545 = por %p543, %p544
      %s547 = sadd.s32 %s546, 1
      %p550 = scmp.eq.s32.totalorder %s40, 1
      %p551 = scmp.ne.s32.totalorder %s546, %s548
      %p552 = scmp.eq.s32.totalorder %s40, 0
      %p553 = por %p551, %p552
      %p554 = scmp.ne.s32.totalorder %s546, %s548
      %p555 = scmp.eq.s32.totalorder %s45, 1
      %p556 = por %p554, %p555
      %p557 = scmp.ne.s32.totalorder %s548, %s549
      %p558 = scmp.eq.s32.totalorder %s45, 0
      %p559 = por %p557, %p558
      %p560 = scmp.ne.s32.totalorder %s548, %s549
      %p561 = scmp.eq.s32.totalorder %s46, 1
      %p562 = por %p560, %p561
      %p564 = scmp.ne.s32.totalorder %s549, %s563
      %p565 = scmp.eq.s32.totalorder %s46, 0
      %p566 = por %p564, %p565
      %s567 = ssub.s32 %s40, %s47
      %p568 = scmp.eq.s32.totalorder %s567, 0
      %s570 = sadd.s32 %s569, 1
      %s571 = scalar_select %p568, %s569, %s570
      %p574 = pneg %p568
      %p575 = scmp.eq.s32.totalorder %s40, 1
      %p576 = por %p574, %p575
      %p577 = scmp.ne.s32.totalorder %s569, %s572
      %p578 = scmp.eq.s32.totalorder %s40, 0
      %p579 = por %p577, %p578
      %p580 = scmp.ne.s32.totalorder %s569, %s572
      %p581 = scmp.eq.s32.totalorder %s45, 1
      %p582 = por %p580, %p581
      %p583 = scmp.ne.s32.totalorder %s572, %s573
      %p584 = scmp.eq.s32.totalorder %s45, 0
      %p585 = por %p583, %p584
      %p586 = scmp.ne.s32.totalorder %s572, %s573
      %p587 = scmp.eq.s32.totalorder %s46, 1
      %p588 = por %p586, %p587
      %p590 = scmp.ne.s32.totalorder %s573, %s589
      %p591 = scmp.eq.s32.totalorder %s46, 0
      %p592 = por %p590, %p591
      %p593 = scmp.le.s32.totalorder 1, %s40
      %p594 = scmp.lt.s32.totalorder %s40, 3
      %p595 = pnand %p593, %p594
      %p596 = pneg %p595
      // Predicated region
      $region9: #{bert_multilabel_forward.1} parent=5 // pred_check
        _
      $region10: #{bert_multilabel_forward.1} parent=5 // pred_check_branch
        %598 = sbr.rel (%p595) target = $region12
      $region11: #{bert_multilabel_forward.1} parent=5 // pred_region
        %s599 = ssub.s32 %s40, 1
        // Predicated region
        $region13: #{bert_multilabel_forward.1} parent=11 // pred_check
          %p600 = pneg %p139
        $region14: #{bert_multilabel_forward.1} parent=11 // pred_check_branch
          %602 = sbr.rel (%p600) target = $region16
        $region15: #{bert_multilabel_forward.1} parent=11 // pred_region
          _
        $region16: #{bert_multilabel_forward.1} parent=11 // pred_fallthru
          _
        // Predicated region
        $region17: #{bert_multilabel_forward.1} parent=11 // pred_check
          %p603 = pneg %p160
        $region18: #{bert_multilabel_forward.1} parent=11 // pred_check_branch
          %605 = sbr.rel (%p603) target = $region20
        $region19: #{bert_multilabel_forward.1} parent=11 // pred_region
          _
        $region20: #{bert_multilabel_forward.1} parent=11 // pred_fallthru
          _
        // Predicated region
        $region21: #{bert_multilabel_forward.1} parent=11 // pred_check
          %p606 = pneg %p181
        $region22: #{bert_multilabel_forward.1} parent=11 // pred_check_branch
          %608 = sbr.rel (%p606) target = $region24
        $region23: #{bert_multilabel_forward.1} parent=11 // pred_region
          _
        $region24: #{bert_multilabel_forward.1} parent=11 // pred_fallthru
          _
        // Predicated region
        $region25: #{bert_multilabel_forward.1} parent=11 // pred_check
          %p609 = pneg %p202
        $region26: #{bert_multilabel_forward.1} parent=11 // pred_check_branch
          %611 = sbr.rel (%p609) target = $region28
        $region27: #{bert_multilabel_forward.1} parent=11 // pred_region
          %s613 = ssub.s32 16, 16
          %614 = vsyncadd [#allocation3], %s613
          %s616 = sshll.u32 [#allocation2], 4
          %s617 = int_to_ptr.vmem [resolvable:$true] %s616
          %619 = dma.hbm_to_vmem [thread:$0]  %s6, 16, %s617, [#allocation3]
        $region28: #{bert_multilabel_forward.1} parent=11 // pred_fallthru
          _
        // Predicated region
        $region29: #{bert_multilabel_forward.1} parent=11 // pred_check
          %p620 = pneg %p223
        $region30: #{bert_multilabel_forward.1} parent=11 // pred_check_branch
          %622 = sbr.rel (%p620) target = $region32
        $region31: #{bert_multilabel_forward.1} parent=11 // pred_region
          %s624 = ssub.s32 16, 16
          %625 = vsyncadd [#allocation6], %s624
          %s627 = sshll.u32 [#allocation5], 4
          %s628 = int_to_ptr.vmem [resolvable:$true] %s627
          %630 = dma.hbm_to_vmem [thread:$0]  %s7, 16, %s628, [#allocation6]
        $region32: #{bert_multilabel_forward.1} parent=11 // pred_fallthru
          _
        // Predicated region
        $region33: #{bert_multilabel_forward.1} parent=11 // pred_check
          %p631 = pneg %p244
        $region34: #{bert_multilabel_forward.1} parent=11 // pred_check_branch
          %633 = sbr.rel (%p631) target = $region36
        $region35: #{bert_multilabel_forward.1} parent=11 // pred_region
          _
        $region36: #{bert_multilabel_forward.1} parent=11 // pred_fallthru
          _
        // Predicated region
        $region37: #{bert_multilabel_forward.1} parent=11 // pred_check
          %p634 = pneg %p265
        $region38: #{bert_multilabel_forward.1} parent=11 // pred_check_branch
          %636 = sbr.rel (%p634) target = $region40
        $region39: #{bert_multilabel_forward.1} parent=11 // pred_region
          %s638 = ssub.s32 32, 32
          %639 = vsyncadd [#allocation6], %s638
          %s640 = sshll.u32 [#allocation7], 4
          %s641 = int_to_ptr.vmem [resolvable:$true] %s640
          %646 = dma.hbm_to_vmem [thread:$0]  %s9, 32, %s641, [#allocation6], 16, 16, 1
        $region40: #{bert_multilabel_forward.1} parent=11 // pred_fallthru
          _
        // Predicated region
        $region41: #{bert_multilabel_forward.1} parent=11 // pred_check
          %p647 = pneg %p286
        $region42: #{bert_multilabel_forward.1} parent=11 // pred_check_branch
          %649 = sbr.rel (%p647) target = $region44
        $region43: #{bert_multilabel_forward.1} parent=11 // pred_region
          _
        $region44: #{bert_multilabel_forward.1} parent=11 // pred_fallthru
          _
        // Predicated region
        $region45: #{bert_multilabel_forward.1} parent=11 // pred_check
          %p650 = pneg %p307
        $region46: #{bert_multilabel_forward.1} parent=11 // pred_check_branch
          %652 = sbr.rel (%p650) target = $region48
        $region47: #{bert_multilabel_forward.1} parent=11 // pred_region
          %s654 = ssub.s32 32, 32
          %655 = vsyncadd [#allocation9], %s654
          %s656 = sshll.u32 [#allocation8], 4
          %s657 = int_to_ptr.vmem [resolvable:$true] %s656
          %662 = dma.hbm_to_vmem [thread:$0]  %s11, 32, %s657, [#allocation9], 16, 16, 1
        $region48: #{bert_multilabel_forward.1} parent=11 // pred_fallthru
          _
        // Predicated region
        $region49: #{bert_multilabel_forward.1} parent=11 // pred_check
          %p663 = pneg %p328
        $region50: #{bert_multilabel_forward.1} parent=11 // pred_check_branch
          %665 = sbr.rel (%p663) target = $region52
        $region51: #{bert_multilabel_forward.1} parent=11 // pred_region
          %s667 = ssub.s32 32, 32
          %668 = vsyncadd [#allocation9], %s667
          %s669 = sshll.u32 [#allocation10], 4
          %s670 = int_to_ptr.vmem [resolvable:$true] %s669
          %675 = dma.hbm_to_vmem [thread:$0]  %s12, 32, %s670, [#allocation9], 16, 16, 1
        $region52: #{bert_multilabel_forward.1} parent=11 // pred_fallthru
          _
        // Predicated region
        $region53: #{bert_multilabel_forward.1} parent=11 // pred_check
          %p676 = pneg %p349
        $region54: #{bert_multilabel_forward.1} parent=11 // pred_check_branch
          %678 = sbr.rel (%p676) target = $region56
        $region55: #{bert_multilabel_forward.1} parent=11 // pred_region
          %s680 = ssub.s32 32, 32
          %681 = vsyncadd [#allocation12], %s680
          %s682 = sshll.u32 [#allocation11], 4
          %s683 = int_to_ptr.vmem [resolvable:$true] %s682
          %688 = dma.hbm_to_vmem [thread:$0]  %s13, 32, %s683, [#allocation12], 16, 16, 1
        $region56: #{bert_multilabel_forward.1} parent=11 // pred_fallthru
          _
        // Predicated region
        $region57: #{bert_multilabel_forward.1} parent=11 // pred_check
          %p689 = pneg %p370
        $region58: #{bert_multilabel_forward.1} parent=11 // pred_check_branch
          %691 = sbr.rel (%p689) target = $region60
        $region59: #{bert_multilabel_forward.1} parent=11 // pred_region
          _
        $region60: #{bert_multilabel_forward.1} parent=11 // pred_fallthru
          _
        // Predicated region
        $region61: #{bert_multilabel_forward.1} parent=11 // pred_check
          %p692 = pneg %p391
        $region62: #{bert_multilabel_forward.1} parent=11 // pred_check_branch
          %694 = sbr.rel (%p692) target = $region64
        $region63: #{bert_multilabel_forward.1} parent=11 // pred_region
          %s696 = ssub.s32 32, 32
          %697 = vsyncadd [#allocation12], %s696
          %s698 = sshll.u32 [#allocation13], 4
          %s699 = int_to_ptr.vmem [resolvable:$true] %s698
          %704 = dma.hbm_to_vmem [thread:$0]  %s15, 32, %s699, [#allocation12], 16, 16, 1
        $region64: #{bert_multilabel_forward.1} parent=11 // pred_fallthru
          _
        // Predicated region
        $region65: #{bert_multilabel_forward.1} parent=11 // pred_check
          %p705 = pneg %p412
        $region66: #{bert_multilabel_forward.1} parent=11 // pred_check_branch
          %707 = sbr.rel (%p705) target = $region68
        $region67: #{bert_multilabel_forward.1} parent=11 // pred_region
          _
        $region68: #{bert_multilabel_forward.1} parent=11 // pred_fallthru
          _
        // Predicated region
        $region69: #{bert_multilabel_forward.1} parent=11 // pred_check
          %p708 = pneg %p433
        $region70: #{bert_multilabel_forward.1} parent=11 // pred_check_branch
          %710 = sbr.rel (%p708) target = $region72
        $region71: #{bert_multilabel_forward.1} parent=11 // pred_region
          %s712 = ssub.s32 32, 32
          %713 = vsyncadd [#allocation15], %s712
          %s714 = sshll.u32 [#allocation14], 4
          %s715 = int_to_ptr.vmem [resolvable:$true] %s714
          %720 = dma.hbm_to_vmem [thread:$0]  %s17, 32, %s715, [#allocation15], 16, 16, 1
        $region72: #{bert_multilabel_forward.1} parent=11 // pred_fallthru
          _
        // Predicated region
        $region73: #{bert_multilabel_forward.1} parent=11 // pred_check
          %p721 = pneg %p454
        $region74: #{bert_multilabel_forward.1} parent=11 // pred_check_branch
          %723 = sbr.rel (%p721) target = $region76
        $region75: #{bert_multilabel_forward.1} parent=11 // pred_region
          %s725 = ssub.s32 32, 32
          %726 = vsyncadd [#allocation15], %s725
          %s727 = sshll.u32 [#allocation16], 4
          %s728 = int_to_ptr.vmem [resolvable:$true] %s727
          %733 = dma.hbm_to_vmem [thread:$0]  %s18, 32, %s728, [#allocation15], 16, 16, 1
        $region76: #{bert_multilabel_forward.1} parent=11 // pred_fallthru
          _
        // Predicated region
        $region77: #{bert_multilabel_forward.1} parent=11 // pred_check
          %p734 = pneg %p475
        $region78: #{bert_multilabel_forward.1} parent=11 // pred_check_branch
          %736 = sbr.rel (%p734) target = $region80
        $region79: #{bert_multilabel_forward.1} parent=11 // pred_region
          %s738 = ssub.s32 32, 32
          %739 = vsyncadd [#allocation18], %s738
          %s740 = sshll.u32 [#allocation17], 4
          %s741 = int_to_ptr.vmem [resolvable:$true] %s740
          %746 = dma.hbm_to_vmem [thread:$0]  %s19, 32, %s741, [#allocation18], 16, 16, 1
        $region80: #{bert_multilabel_forward.1} parent=11 // pred_fallthru
          _
        // Predicated region
        $region81: #{bert_multilabel_forward.1} parent=11 // pred_check
          %p747 = pneg %p496
        $region82: #{bert_multilabel_forward.1} parent=11 // pred_check_branch
          %749 = sbr.rel (%p747) target = $region84
        $region83: #{bert_multilabel_forward.1} parent=11 // pred_region
          _
        $region84: #{bert_multilabel_forward.1} parent=11 // pred_fallthru
          _
        // Predicated region
        $region85: #{bert_multilabel_forward.1} parent=11 // pred_check
          %p750 = pneg %p517
        $region86: #{bert_multilabel_forward.1} parent=11 // pred_check_branch
          %752 = sbr.rel (%p750) target = $region88
        $region87: #{bert_multilabel_forward.1} parent=11 // pred_region
          %s754 = ssub.s32 16, 16
          %755 = vsyncadd [#allocation18], %s754
          %s757 = sshll.u32 [#allocation19], 4
          %s758 = int_to_ptr.vmem [resolvable:$true] %s757
          %760 = dma.hbm_to_vmem [thread:$0]  %s21, 16, %s758, [#allocation18]
        $region88: #{bert_multilabel_forward.1} parent=11 // pred_fallthru
          _
        // Predicated region
        $region89: #{bert_multilabel_forward.1} parent=11 // pred_check
          %p761 = pneg %p538
        $region90: #{bert_multilabel_forward.1} parent=11 // pred_check_branch
          %763 = sbr.rel (%p761) target = $region92
        $region91: #{bert_multilabel_forward.1} parent=11 // pred_region
          _
        $region92: #{bert_multilabel_forward.1} parent=11 // pred_fallthru
          _
        // Predicated region
        $region93: #{bert_multilabel_forward.1} parent=11 // pred_check
          %p764 = pneg %p559
        $region94: #{bert_multilabel_forward.1} parent=11 // pred_check_branch
          %766 = sbr.rel (%p764) target = $region96
        $region95: #{bert_multilabel_forward.1} parent=11 // pred_region
          %s768 = ssub.s32 16, 16
          %769 = vsyncadd [#allocation21], %s768
          %s771 = sshll.u32 [#allocation20], 4
          %s772 = int_to_ptr.vmem [resolvable:$true] %s771
          %774 = dma.hbm_to_vmem [thread:$0]  %s23, 16, %s772, [#allocation21]
        $region96: #{bert_multilabel_forward.1} parent=11 // pred_fallthru
          _
      $region12: #{bert_multilabel_forward.1} parent=5 // pred_fallthru
        _
      %p775 = scmp.lt.s32.totalorder %s40, 2
      // Predicated region
      $region97: #{bert_multilabel_forward.1} parent=5 // pred_check
        %p776 = pneg %p775
      $region98: #{bert_multilabel_forward.1} parent=5 // pred_check_branch
        %778 = sbr.rel (%p776) target = $region100
      $region99: #{bert_multilabel_forward.1} parent=5 // pred_region
        // Predicated region
        $region101: #{bert_multilabel_forward.1} parent=99 // pred_check
          %p779 = pneg %p60
        $region102: #{bert_multilabel_forward.1} parent=99 // pred_check_branch
          %781 = sbr.rel (%p779) target = $region104
        $region103: #{bert_multilabel_forward.1} parent=99 // pred_region
          %p782 = scmp.lt.s32.totalorder %s40, 1
          %s783 = scalar_select %p782, %s40, 1
          %s784 = smul.addr %s783, 8
          %s785 = scalar_lea.vmem %s0, %s784
        $region104: #{bert_multilabel_forward.1} parent=99 // pred_fallthru
          _
        // Predicated region
        $region105: #{bert_multilabel_forward.1} parent=99 // pred_check
          %p786 = pneg %p86
        $region106: #{bert_multilabel_forward.1} parent=99 // pred_check_branch
          %788 = sbr.rel (%p786) target = $region108
        $region107: #{bert_multilabel_forward.1} parent=99 // pred_region
          %p789 = scmp.lt.s32.totalorder %s40, 1
          %s790 = scalar_select %p789, %s40, 1
          %s791 = smul.addr %s790, 8
          %s792 = scalar_lea.vmem %s1, %s791
        $region108: #{bert_multilabel_forward.1} parent=99 // pred_fallthru
          _
        // Predicated region
        $region109: #{bert_multilabel_forward.1} parent=99 // pred_check
          %p793 = pneg %p112
        $region110: #{bert_multilabel_forward.1} parent=99 // pred_check_branch
          %795 = sbr.rel (%p793) target = $region112
        $region111: #{bert_multilabel_forward.1} parent=99 // pred_region
          %p796 = scmp.lt.s32.totalorder %s40, 1
          %s797 = scalar_select %p796, %s40, 1
          %s798 = scalar_lea.vmem %s2, %s797
        $region112: #{bert_multilabel_forward.1} parent=99 // pred_fallthru
          _
      $region100: #{bert_multilabel_forward.1} parent=5 // pred_fallthru
        _
      %p799 = scmp.le.s32.totalorder 1, %s40
      %p800 = scmp.lt.s32.totalorder %s40, 3
      %p801 = pnand %p799, %p800
      %p802 = pneg %p801
      // Predicated region
      $region113: #{bert_multilabel_forward.1} parent=5 // pred_check
        _
      $region114: #{bert_multilabel_forward.1} parent=5 // pred_check_branch
        %804 = sbr.rel (%p801) target = $region116
      $region115: #{bert_multilabel_forward.1} parent=5 // pred_region
        %s805 = ssub.s32 %s40, 1
        // Predicated region
        $region117: #{bert_multilabel_forward.1} parent=115 // pred_check
          %p806 = pneg %p202
        $region118: #{bert_multilabel_forward.1} parent=115 // pred_check_branch
          %808 = sbr.rel (%p806) target = $region120
        $region119: #{bert_multilabel_forward.1} parent=115 // pred_region
          %809 = dma.done [#allocation3], 16
        $region120: #{bert_multilabel_forward.1} parent=115 // pred_fallthru
          _
        // Predicated region
        $region121: #{bert_multilabel_forward.1} parent=115 // pred_check
          %p810 = pneg %p223
        $region122: #{bert_multilabel_forward.1} parent=115 // pred_check_branch
          %812 = sbr.rel (%p810) target = $region124
        $region123: #{bert_multilabel_forward.1} parent=115 // pred_region
          %813 = dma.done [#allocation6], 16
        $region124: #{bert_multilabel_forward.1} parent=115 // pred_fallthru
          _
        // Predicated region
        $region125: #{bert_multilabel_forward.1} parent=115 // pred_check
          %p814 = pneg %p265
        $region126: #{bert_multilabel_forward.1} parent=115 // pred_check_branch
          %816 = sbr.rel (%p814) target = $region128
        $region127: #{bert_multilabel_forward.1} parent=115 // pred_region
          %817 = dma.done [#allocation6], 32
        $region128: #{bert_multilabel_forward.1} parent=115 // pred_fallthru
          _
        // Predicated region
        $region129: #{bert_multilabel_forward.1} parent=115 // pred_check
          %p818 = pneg %p307
        $region130: #{bert_multilabel_forward.1} parent=115 // pred_check_branch
          %820 = sbr.rel (%p818) target = $region132
        $region131: #{bert_multilabel_forward.1} parent=115 // pred_region
          %821 = dma.done [#allocation9], 32
        $region132: #{bert_multilabel_forward.1} parent=115 // pred_fallthru
          _
        // Predicated region
        $region133: #{bert_multilabel_forward.1} parent=115 // pred_check
          %p822 = pneg %p328
        $region134: #{bert_multilabel_forward.1} parent=115 // pred_check_branch
          %824 = sbr.rel (%p822) target = $region136
        $region135: #{bert_multilabel_forward.1} parent=115 // pred_region
          %825 = dma.done [#allocation9], 32
        $region136: #{bert_multilabel_forward.1} parent=115 // pred_fallthru
          _
        // Predicated region
        $region137: #{bert_multilabel_forward.1} parent=115 // pred_check
          %p826 = pneg %p349
        $region138: #{bert_multilabel_forward.1} parent=115 // pred_check_branch
          %828 = sbr.rel (%p826) target = $region140
        $region139: #{bert_multilabel_forward.1} parent=115 // pred_region
          %829 = dma.done [#allocation12], 32
        $region140: #{bert_multilabel_forward.1} parent=115 // pred_fallthru
          _
        // Predicated region
        $region141: #{bert_multilabel_forward.1} parent=115 // pred_check
          %p830 = pneg %p391
        $region142: #{bert_multilabel_forward.1} parent=115 // pred_check_branch
          %832 = sbr.rel (%p830) target = $region144
        $region143: #{bert_multilabel_forward.1} parent=115 // pred_region
          %833 = dma.done [#allocation12], 32
        $region144: #{bert_multilabel_forward.1} parent=115 // pred_fallthru
          _
        // Predicated region
        $region145: #{bert_multilabel_forward.1} parent=115 // pred_check
          %p834 = pneg %p433
        $region146: #{bert_multilabel_forward.1} parent=115 // pred_check_branch
          %836 = sbr.rel (%p834) target = $region148
        $region147: #{bert_multilabel_forward.1} parent=115 // pred_region
          %837 = dma.done [#allocation15], 32
        $region148: #{bert_multilabel_forward.1} parent=115 // pred_fallthru
          _
        // Predicated region
        $region149: #{bert_multilabel_forward.1} parent=115 // pred_check
          %p838 = pneg %p454
        $region150: #{bert_multilabel_forward.1} parent=115 // pred_check_branch
          %840 = sbr.rel (%p838) target = $region152
        $region151: #{bert_multilabel_forward.1} parent=115 // pred_region
          %841 = dma.done [#allocation15], 32
        $region152: #{bert_multilabel_forward.1} parent=115 // pred_fallthru
          _
        // Predicated region
        $region153: #{bert_multilabel_forward.1} parent=115 // pred_check
          %p842 = pneg %p475
        $region154: #{bert_multilabel_forward.1} parent=115 // pred_check_branch
          %844 = sbr.rel (%p842) target = $region156
        $region155: #{bert_multilabel_forward.1} parent=115 // pred_region
          %845 = dma.done [#allocation18], 32
        $region156: #{bert_multilabel_forward.1} parent=115 // pred_fallthru
          _
        // Predicated region
        $region157: #{bert_multilabel_forward.1} parent=115 // pred_check
          %p846 = pneg %p517
        $region158: #{bert_multilabel_forward.1} parent=115 // pred_check_branch
          %848 = sbr.rel (%p846) target = $region160
        $region159: #{bert_multilabel_forward.1} parent=115 // pred_region
          %849 = dma.done [#allocation18], 16
        $region160: #{bert_multilabel_forward.1} parent=115 // pred_fallthru
          _
        // Predicated region
        $region161: #{bert_multilabel_forward.1} parent=115 // pred_check
          %p850 = pneg %p559
        $region162: #{bert_multilabel_forward.1} parent=115 // pred_check_branch
          %852 = sbr.rel (%p850) target = $region164
        $region163: #{bert_multilabel_forward.1} parent=115 // pred_region
          %853 = dma.done [#allocation21], 16
        $region164: #{bert_multilabel_forward.1} parent=115 // pred_fallthru
          _
        %p854 = scmp.lt.s32.totalorder %s45, 1
        %s855 = scalar_select %p854, %s45, 1
        %s856 = smul.addr %s855, 8
        %s857 = scalar_lea.vmem %s0, %s856
        %p858 = pneg %p66
        %p859 = pneg %p63
        %p860 = scmp.lt.s32.totalorder %s45, 1
        %s861 = scalar_select %p860, %s45, 1
        %s862 = smul.addr %s861, 8
        %s863 = scalar_lea.vmem %s1, %s862
        %p864 = pneg %p92
        %p865 = pneg %p89
        %p866 = scmp.lt.s32.totalorder %s45, 1
        %s867 = scalar_select %p866, %s45, 1
        %s868 = scalar_lea.vmem %s2, %s867
        %p869 = pneg %p118
        %p870 = pneg %p115
        %p871 = pneg %p139
        %p872 = pneg %p136
        %p873 = pneg %p160
        %p874 = pneg %p157
        %p875 = pneg %p181
        %p876 = pneg %p178
        %p877 = pneg %p202
        %p878 = pneg %p199
        %p879 = pneg %p223
        %p880 = pneg %p220
        %p881 = pneg %p244
        %p882 = pneg %p241
        %p883 = pneg %p265
        %p884 = pneg %p262
        %p885 = pneg %p286
        %p886 = pneg %p283
        %p887 = pneg %p307
        %p888 = pneg %p304
        %p889 = pneg %p328
        %p890 = pneg %p325
        %p891 = pneg %p349
        %p892 = pneg %p346
        %p893 = pneg %p370
        %p894 = pneg %p367
        %p895 = pneg %p391
        %p896 = pneg %p388
        %p897 = pneg %p412
        %p898 = pneg %p409
        %p899 = pneg %p433
        %p900 = pneg %p430
        %p901 = pneg %p454
        %p902 = pneg %p451
        %p903 = pneg %p475
        %p904 = pneg %p472
        %p905 = pneg %p496
        %p906 = pneg %p493
        %p907 = pneg %p517
        %p908 = pneg %p514
        %p909 = pneg %p538
        %p910 = pneg %p535
        %p911 = pneg %p559
        %p912 = pneg %p556
        %p913 = pneg %p585
        %p914 = pneg %p582
        %s915 = sand.u32 %s572, 1
        %s916 = scalar_lea.sflag [#allocation4], %s915
        %s917 = sand.u32 %s572, 1
        %s918 = scalar_lea.vmem [#allocation22], %s917
        %p919 = scmp.lt.s32.totalorder %s45, 1
        %s920 = scalar_select %p919, %s45, 1
        %s921 = smul.addr %s920, 8
        %s922 = scalar_lea.vmem %s0, %s921
        %p923 = scmp.lt.s32.totalorder %s45, 1
        %s924 = scalar_select %p923, %s45, 1
        %s925 = smul.addr %s924, 8
        %s926 = scalar_lea.vmem %s1, %s925
        %p927 = scmp.lt.s32.totalorder %s45, 1
        %s928 = scalar_select %p927, %s45, 1
        %s929 = scalar_lea.vmem %s2, %s928
        %v930 = vld [vmem:[%s922] sm:$0xff]
        %v931 = vld [vmem:[%s926] sm:$0xff]
        %v932 = vlaneseq
        %v933 = vand.u32 %v932, 127
        %934 = vset.pattern.permute.xlu0 0
        %935 = vperm.xlu0 %934, %v930
        %v936 = vpop.permute.xlu0 %935
        %vm937 = vcmp.eq.s32.totalorder %v936, %v933
        %v938 = vsel %vm937, 1.0, 0.0
        %939 = vset.pattern.permute.xlu0 0
        %940 = vperm.xlu0 %939, %v931
        %v941 = vpop.permute.xlu0 %940
        %vm942 = vcmp.eq.s32.totalorder %v941, %v933
        %v943 = vsel %vm942, 1.0, 0.0
        %v944 = vld [vmem:[%s3] sm:$0xff]
        %v945 = vld [vmem:[%s3 + $0x8] sm:$0xff]
        %v946 = vld [vmem:[%s3 + $0x10] sm:$0xff]
        %v947 = vld [vmem:[%s3 + $0x18] sm:$0xff]
        %v948 = vld [vmem:[%s3 + $0x20] sm:$0xff]
        %v949 = vld [vmem:[%s3 + $0x28] sm:$0xff]
        %v950 = vld [vmem:[%s3 + $0x30] sm:$0xff]
        %v951 = vld [vmem:[%s4] sm:$0xff]
        %vm952 = vcmask 457728
        %v954 = vsel %vm952, %v938, 0
        %956 = vmatprep.subr.mxu0 0.0
        %957 = vmatpush1.msra.mxu0 %v944
        %958 = vmatprep.subr.mxu0 0.0
        %959 = vmatpush1.msra.mxu0 %v945
        %960 = vmatprep.subr.mxu0 0.0
        %961 = vmatpush1.msra.mxu0 %v946
        %962 = vmatprep.subr.mxu0 0.0
        %963 = vmatpush1.msra.mxu0 %v947
        %964 = vmatprep.subr.mxu0 0.0
        %965 = vmatpush1.msra.mxu0 %v948
        %966 = vmatprep.subr.mxu0 0.0
        %967 = vmatpush1.msra.mxu0 %v949
        %968 = vmatprep.subr.mxu0 0.0
        %969 = vmatpush1.msra.mxu0 %v950
        %970 = vmatprep.subr.mxu0 0.0
        %971 = vmatpush1.msra.mxu0 0.0
        %972 = vmatprep.subr.mxu0 0.0
        %973 = vmatpush1.msra.mxu0 0.0
        %974 = vmatprep.subr.mxu0 0.0
        %975 = vmatpush1.msra.mxu0 0.0
        %976 = vmatprep.subr.mxu0 0.0
        %977 = vmatpush1.msra.mxu0 0.0
        %978 = vmatprep.subr.mxu0 0.0
        %979 = vmatpush1.msra.mxu0 0.0
        %980 = vmatprep.subr.mxu0 0.0
        %981 = vmatpush1.msra.mxu0 0.0
        %982 = vmatprep.subr.mxu0 0.0
        %983 = vmatpush1.msra.mxu0 0.0
        %984 = vmatprep.subr.mxu0 0.0
        %985 = vmatpush1.msra.mxu0 0.0
        %986 = vmatprep.subr.mxu0 0.0
        %987 = vmatpush1.msra.mxu0 0.0
        %988 = vmatprep.subr.mxu0 0.0
        %989 = vmatpush1.msra.mxu0 0.0
        %990 = vmatprep.subr.mxu0 0.0
        %991 = vmatpush1.msra.mxu0 0.0
        %992 = vmatprep.subr.mxu0 0.0
        %993 = vmatpush1.msra.mxu0 0.0
        %994 = vmatprep.subr.mxu0 0.0
        %995 = vmatpush1.msra.mxu0 0.0
        %996 = vmatprep.subr.mxu0 0.0
        %997 = vmatpush1.msra.mxu0 0.0
        %998 = vmatprep.subr.mxu0 0.0
        %999 = vmatpush1.msra.mxu0 0.0
        %1000 = vmatprep.subr.mxu0 0.0
        %1001 = vmatpush1.msra.mxu0 0.0
        %1002 = vmatprep.subr.mxu0 0.0
        %1003 = vmatpush1.msra.mxu0 0.0
        %1004 = vmatprep.subr.mxu0 0.0
        %1005 = vmatpush1.msra.mxu0 0.0
        %1006 = vmatprep.subr.mxu0 0.0
        %1007 = vmatpush1.msra.mxu0 0.0
        %1008 = vmatprep.subr.mxu0 0.0
        %1009 = vmatpush1.msra.mxu0 0.0
        %1010 = vmatprep.subr.mxu0 0.0
        %1011 = vmatpush1.msra.mxu0 0.0
        %1012 = vmatprep.subr.mxu0 0.0
        %1013 = vmatpush1.msra.mxu0 0.0
        %1014 = vmatprep.subr.mxu0 0.0
        %1015 = vmatpush1.msra.mxu0 0.0
        %1016 = vmatprep.subr.mxu0 0.0
        %1017 = vmatpush1.msra.mxu0 0.0
        %1018 = vmatprep.subr.mxu0 0.0
        %1019 = vmatpush1.msra.mxu0 0.0
        %1020 = vmatprep.mubr.f32.mxu0 0.0
        %1021 = vmatmul.mubr.f32.gmra.mrb[0].mxu0 %v954
        %v1022 = vpop.f32.mrb[0].mxu0
        %v1023 = vadd.f32 %v951, %v1022
        %v1024 = vpop.f32.mrb[0].mxu0
        %1025 = vdwg.mxu0
        %v1026 = vld [vmem:[%s5] sm:$0xff]
        %vm1027 = vcmask 64512
        %v1029 = vsel %vm1027, %v943, 0
        %1031 = vmatprep.subr.mxu0 0.0
        %1032 = vmatpush1.msra.mxu0 %v1026
        %1033 = vmatprep.subr.mxu0 0.0
        %1034 = vmatpush1.msra.mxu0 0.0
        %1035 = vmatprep.subr.mxu0 0.0
        %1036 = vmatpush1.msra.mxu0 0.0
        %1037 = vmatprep.subr.mxu0 0.0
        %1038 = vmatpush1.msra.mxu0 0.0
        %1039 = vmatprep.subr.mxu0 0.0
        %1040 = vmatpush1.msra.mxu0 0.0
        %1041 = vmatprep.subr.mxu0 0.0
        %1042 = vmatpush1.msra.mxu0 0.0
        %1043 = vmatprep.subr.mxu0 0.0
        %1044 = vmatpush1.msra.mxu0 0.0
        %1045 = vmatprep.subr.mxu0 0.0
        %1046 = vmatpush1.msra.mxu0 0.0
        %1047 = vmatprep.subr.mxu0 0.0
        %1048 = vmatpush1.msra.mxu0 0.0
        %1049 = vmatprep.subr.mxu0 0.0
        %1050 = vmatpush1.msra.mxu0 0.0
        %1051 = vmatprep.subr.mxu0 0.0
        %1052 = vmatpush1.msra.mxu0 0.0
        %1053 = vmatprep.subr.mxu0 0.0
        %1054 = vmatpush1.msra.mxu0 0.0
        %1055 = vmatprep.subr.mxu0 0.0
        %1056 = vmatpush1.msra.mxu0 0.0
        %1057 = vmatprep.subr.mxu0 0.0
        %1058 = vmatpush1.msra.mxu0 0.0
        %1059 = vmatprep.subr.mxu0 0.0
        %1060 = vmatpush1.msra.mxu0 0.0
        %1061 = vmatprep.subr.mxu0 0.0
        %1062 = vmatpush1.msra.mxu0 0.0
        %1063 = vmatprep.subr.mxu0 0.0
        %1064 = vmatpush1.msra.mxu0 0.0
        %1065 = vmatprep.subr.mxu0 0.0
        %1066 = vmatpush1.msra.mxu0 0.0
        %1067 = vmatprep.subr.mxu0 0.0
        %1068 = vmatpush1.msra.mxu0 0.0
        %1069 = vmatprep.subr.mxu0 0.0
        %1070 = vmatpush1.msra.mxu0 0.0
        %1071 = vmatprep.subr.mxu0 0.0
        %1072 = vmatpush1.msra.mxu0 0.0
        %1073 = vmatprep.subr.mxu0 0.0
        %1074 = vmatpush1.msra.mxu0 0.0
        %1075 = vmatprep.subr.mxu0 0.0
        %1076 = vmatpush1.msra.mxu0 0.0
        %1077 = vmatprep.subr.mxu0 0.0
        %1078 = vmatpush1.msra.mxu0 0.0
        %1079 = vmatprep.subr.mxu0 0.0
        %1080 = vmatpush1.msra.mxu0 0.0
        %1081 = vmatprep.subr.mxu0 0.0
        %1082 = vmatpush1.msra.mxu0 0.0
        %1083 = vmatprep.subr.mxu0 0.0
        %1084 = vmatpush1.msra.mxu0 0.0
        %1085 = vmatprep.subr.mxu0 0.0
        %1086 = vmatpush1.msra.mxu0 0.0
        %1087 = vmatprep.subr.mxu0 0.0
        %1088 = vmatpush1.msra.mxu0 0.0
        %1089 = vmatprep.subr.mxu0 0.0
        %1090 = vmatpush1.msra.mxu0 0.0
        %1091 = vmatprep.subr.mxu0 0.0
        %1092 = vmatpush1.msra.mxu0 0.0
        %1093 = vmatprep.subr.mxu0 0.0
        %1094 = vmatpush1.msra.mxu0 0.0
        %1095 = vmatprep.mubr.f32.mxu0 0.0
        %1096 = vmatmul.mubr.f32.gmra.mrb[0].mxu0 %v1029
        %v1097 = vpop.f32.mrb[0].mxu0
        %v1098 = vadd.f32 0.0, %v1097
        %v1099 = vpop.f32.mrb[0].mxu0
        %1100 = vdwg.mxu0
        %v1101 = vadd.f32 %v1023, %v1098
        %v1102 = vld [vmem:[#allocation2] sm:$0x1]
        %v1103 = vld [vmem:[#allocation5] sm:$0x1]
        %vm1104 = vcmask 261120
        %v1105 = vsel %vm1104, %v1101, 0.0
        %1106 = vadd.xlane.f32.xlu0 %v1105
        %v1107 = vpop.xlane.xlu0 %1106
        %v1108 = vrcp.pop 32.0
        %v1109 = vmul.f32 %v1107, %v1108
        %v1110 = vsub.f32 %v1101, %v1109
        %v1111 = vmul.f32 %v1110, %v1110
        %v1112 = vsel %vm1104, %v1111, 0.0
        %1113 = vadd.xlane.f32.xlu0 %v1112
        %v1114 = vpop.xlane.xlu0 %1113
        %v1115 = vmul.f32 %v1114, %v1108
        %v1116 = vadd.f32 %v1115, 1e-12
        %v1117 = vrsqrt.pop %v1116
        %v1118 = vmul.f32 %v1110, %v1117
        %v1120 = vlaneseq
        %v1121 = vshrl.u32 %v1120, 7
        %v1122 = vsub.s32 0, %v1121
        %v1123 = vrot.slane %v1102, %v1122
        %v1125 = vmul.f32 %v1118, %v1123
        %v1127 = vlaneseq
        %v1128 = vshrl.u32 %v1127, 7
        %v1129 = vsub.s32 0, %v1128
        %v1130 = vrot.slane %v1103, %v1129
        %v1132 = vadd.f32 %v1125, %v1130
        %v1133 = vld [vmem:[%s929] sm:$0x1]
        %v1134 = vcvt.s32.f32 %v1133
        %v1135 = vsub.f32 1.0, %v1134
        %v1136 = vmul.f32 %v1135, -1e+09
        %v1137 = vld [vmem:[%s8] sm:$0xff]
        %v1138 = vld [vmem:[%s8 + $0x8] sm:$0xff]
        %v1139 = vld [vmem:[%s8 + $0x10] sm:$0xff]
        %v1140 = vld [vmem:[%s8 + $0x18] sm:$0xff]
        %v1141 = vld [vmem:[#allocation7] sm:$0x1]
        %v1143 = vlaneseq
        %v1144 = vshrl.u32 %v1143, 7
        %v1145 = vsub.s32 0, %v1144
        %v1146 = vrot.slane %v1141, %v1145
        %v1149 = vsel %vm1104, %v1132, 0
        %1151 = vmatprep.subr.mxu0 0.0
        %1152 = vmatpush1.msra.mxu0 %v1137
        %1153 = vmatprep.subr.mxu0 0.0
        %1154 = vmatpush1.msra.mxu0 %v1138
        %1155 = vmatprep.subr.mxu0 0.0
        %1156 = vmatpush1.msra.mxu0 %v1139
        %1157 = vmatprep.subr.mxu0 0.0
        %1158 = vmatpush1.msra.mxu0 %v1140
        %1159 = vmatprep.subr.mxu0 0.0
        %1160 = vmatpush1.msra.mxu0 0.0
        %1161 = vmatprep.subr.mxu0 0.0
        %1162 = vmatpush1.msra.mxu0 0.0
        %1163 = vmatprep.subr.mxu0 0.0
        %1164 = vmatpush1.msra.mxu0 0.0
        %1165 = vmatprep.subr.mxu0 0.0
        %1166 = vmatpush1.msra.mxu0 0.0
        %1167 = vmatprep.subr.mxu0 0.0
        %1168 = vmatpush1.msra.mxu0 0.0
        %1169 = vmatprep.subr.mxu0 0.0
        %1170 = vmatpush1.msra.mxu0 0.0
        %1171 = vmatprep.subr.mxu0 0.0
        %1172 = vmatpush1.msra.mxu0 0.0
        %1173 = vmatprep.subr.mxu0 0.0
        %1174 = vmatpush1.msra.mxu0 0.0
        %1175 = vmatprep.subr.mxu0 0.0
        %1176 = vmatpush1.msra.mxu0 0.0
        %1177 = vmatprep.subr.mxu0 0.0
        %1178 = vmatpush1.msra.mxu0 0.0
        %1179 = vmatprep.subr.mxu0 0.0
        %1180 = vmatpush1.msra.mxu0 0.0
        %1181 = vmatprep.subr.mxu0 0.0
        %1182 = vmatpush1.msra.mxu0 0.0
        %1183 = vmatprep.subr.mxu0 0.0
        %1184 = vmatpush1.msra.mxu0 0.0
        %1185 = vmatprep.subr.mxu0 0.0
        %1186 = vmatpush1.msra.mxu0 0.0
        %1187 = vmatprep.subr.mxu0 0.0
        %1188 = vmatpush1.msra.mxu0 0.0
        %1189 = vmatprep.subr.mxu0 0.0
        %1190 = vmatpush1.msra.mxu0 0.0
        %1191 = vmatprep.subr.mxu0 0.0
        %1192 = vmatpush1.msra.mxu0 0.0
        %1193 = vmatprep.subr.mxu0 0.0
        %1194 = vmatpush1.msra.mxu0 0.0
        %1195 = vmatprep.subr.mxu0 0.0
        %1196 = vmatpush1.msra.mxu0 0.0
        %1197 = vmatprep.subr.mxu0 0.0
        %1198 = vmatpush1.msra.mxu0 0.0
        %1199 = vmatprep.subr.mxu0 0.0
        %1200 = vmatpush1.msra.mxu0 0.0
        %1201 = vmatprep.subr.mxu0 0.0
        %1202 = vmatpush1.msra.mxu0 0.0
        %1203 = vmatprep.subr.mxu0 0.0
        %1204 = vmatpush1.msra.mxu0 0.0
        %1205 = vmatprep.subr.mxu0 0.0
        %1206 = vmatpush1.msra.mxu0 0.0
        %1207 = vmatprep.subr.mxu0 0.0
        %1208 = vmatpush1.msra.mxu0 0.0
        %1209 = vmatprep.subr.mxu0 0.0
        %1210 = vmatpush1.msra.mxu0 0.0
        %1211 = vmatprep.subr.mxu0 0.0
        %1212 = vmatpush1.msra.mxu0 0.0
        %1213 = vmatprep.subr.mxu0 0.0
        %1214 = vmatpush1.msra.mxu0 0.0
        %1215 = vmatprep.mubr.f32.mxu0 0.0
        %1216 = vmatmul.mubr.f32.gmra.mrb[0].mxu0 %v1149
        %v1217 = vpop.f32.mrb[0].mxu0
        %v1218 = vadd.f32 %v1146, %v1217
        %v1219 = vpop.f32.mrb[0].mxu0
        %1220 = vdwg.mxu0
        %v1221 = vld [vmem:[%s10] sm:$0xff]
        %v1222 = vld [vmem:[%s10 + $0x8] sm:$0xff]
        %v1223 = vld [vmem:[%s10 + $0x10] sm:$0xff]
        %v1224 = vld [vmem:[%s10 + $0x18] sm:$0xff]
        %v1225 = vmul.f32 %v1218, 0.25
        %v1227 = vlaneseq
        %v1228 = vshrl.u32 %v1227, 7
        %v1229 = vsub.s32 0, %v1228
        %v1230 = vrot.slane %v1136, %v1229
        %1233 = vrot.lane.b32.xlu0 %v1218, 96
        %v1234 = vpop.permute.xlu0 %1233
        %vm1235 = vcmask 130048
        %v1237 = vsel %vm1235, %v1225, 0
        %v1239 = vsel %vm1235, %v1234, 0
        %1241 = vmatprep.subr.mxu0 0.0
        %1242 = vmatpush1.xpose.msra.mxu0 %v1239
        %1243 = vmatprep.subr.mxu0 0.0
        %1244 = vmatpush1.xpose.msra.mxu0 0.0
        %1245 = vmatprep.subr.mxu0 0.0
        %1246 = vmatpush1.xpose.msra.mxu0 0.0
        %1247 = vmatprep.subr.mxu0 0.0
        %1248 = vmatpush1.xpose.msra.mxu0 0.0
        %1249 = vmatprep.subr.mxu0 0.0
        %1250 = vmatpush1.xpose.msra.mxu0 0.0
        %1251 = vmatprep.subr.mxu0 0.0
        %1252 = vmatpush1.xpose.msra.mxu0 0.0
        %1253 = vmatprep.subr.mxu0 0.0
        %1254 = vmatpush1.xpose.msra.mxu0 0.0
        %1255 = vmatprep.subr.mxu0 0.0
        %1256 = vmatpush1.xpose.msra.mxu0 0.0
        %1257 = vmatprep.subr.mxu0 0.0
        %1258 = vmatpush1.xpose.msra.mxu0 0.0
        %1259 = vmatprep.subr.mxu0 0.0
        %1260 = vmatpush1.xpose.msra.mxu0 0.0
        %1261 = vmatprep.subr.mxu0 0.0
        %1262 = vmatpush1.xpose.msra.mxu0 0.0
        %1263 = vmatprep.subr.mxu0 0.0
        %1264 = vmatpush1.xpose.msra.mxu0 0.0
        %1265 = vmatprep.subr.mxu0 0.0
        %1266 = vmatpush1.xpose.msra.mxu0 0.0
        %1267 = vmatprep.subr.mxu0 0.0
        %1268 = vmatpush1.xpose.msra.mxu0 0.0
        %1269 = vmatprep.subr.mxu0 0.0
        %1270 = vmatpush1.xpose.msra.mxu0 0.0
        %1271 = vmatprep.subr.mxu0 0.0
        %1272 = vmatpush1.xpose.msra.mxu0 0.0
        %1273 = vmatprep.subr.mxu0 0.0
        %1274 = vmatpush1.xpose.msra.mxu0 0.0
        %1275 = vmatprep.subr.mxu0 0.0
        %1276 = vmatpush1.xpose.msra.mxu0 0.0
        %1277 = vmatprep.subr.mxu0 0.0
        %1278 = vmatpush1.xpose.msra.mxu0 0.0
        %1279 = vmatprep.subr.mxu0 0.0
        %1280 = vmatpush1.xpose.msra.mxu0 0.0
        %1281 = vmatprep.subr.mxu0 0.0
        %1282 = vmatpush1.xpose.msra.mxu0 0.0
        %1283 = vmatprep.subr.mxu0 0.0
        %1284 = vmatpush1.xpose.msra.mxu0 0.0
        %1285 = vmatprep.subr.mxu0 0.0
        %1286 = vmatpush1.xpose.msra.mxu0 0.0
        %1287 = vmatprep.subr.mxu0 0.0
        %1288 = vmatpush1.xpose.msra.mxu0 0.0
        %1289 = vmatprep.subr.mxu0 0.0
        %1290 = vmatpush1.xpose.msra.mxu0 0.0
        %1291 = vmatprep.subr.mxu0 0.0
        %1292 = vmatpush1.xpose.msra.mxu0 0.0
        %1293 = vmatprep.subr.mxu0 0.0
        %1294 = vmatpush1.xpose.msra.mxu0 0.0
        %1295 = vmatprep.subr.mxu0 0.0
        %1296 = vmatpush1.xpose.msra.mxu0 0.0
        %1297 = vmatprep.subr.mxu0 0.0
        %1298 = vmatpush1.xpose.msra.mxu0 0.0
        %1299 = vmatprep.subr.mxu0 0.0
        %1300 = vmatpush1.xpose.msra.mxu0 0.0
        %1301 = vmatprep.subr.mxu0 0.0
        %1302 = vmatpush1.xpose.msra.mxu0 0.0
        %1303 = vmatprep.subr.mxu0 0.0
        %1304 = vmatpush1.xpose.msra.mxu0 0.0
        %1305 = vmatprep.mubr.f32.mxu0 0.0
        %1306 = vmatmul.mubr.f32.gmra.mrb[0].mxu0 %v1237
        %v1307 = vpop.f32.mrb[0].mxu0
        %v1308 = vadd.f32 %v1230, %v1307
        %v1309 = vpop.f32.mrb[0].mxu0
        %1310 = vdwg.mxu0
        %v1311 = vsel %vm1027, %v1308, -inf
        %1312 = vmax.xlane.f32.xlu0 %v1311
        %v1313 = vpop.xlane.xlu0 %1312
        %v1314 = vsub.f32 %v1308, %v1313
        %v1315 = vmul.f32 %v1314, 1.442695
        %v1316 = vpow.pop %v1315
        %v1317 = vsel %vm1027, %v1316, 0.0
        %1318 = vadd.xlane.f32.xlu0 %v1317
        %v1319 = vpop.xlane.xlu0 %1318
        %v1320 = vrcp.pop %v1319
        %v1321 = vmul.f32 %v1316, %v1320
        %1322 = vrot.lane.b32.xlu0 %v1218, 64
        %v1323 = vpop.permute.xlu0 %1322
        %v1326 = vsel %vm1027, %v1321, 0
        %1328 = vmatprep.subr.mxu0 0.0
        %1329 = vmatpush1.msra.mxu0 %v1323
        %1330 = vmatprep.subr.mxu0 0.0
        %1331 = vmatpush1.msra.mxu0 0.0
        %1332 = vmatprep.subr.mxu0 0.0
        %1333 = vmatpush1.msra.mxu0 0.0
        %1334 = vmatprep.subr.mxu0 0.0
        %1335 = vmatpush1.msra.mxu0 0.0
        %1336 = vmatprep.subr.mxu0 0.0
        %1337 = vmatpush1.msra.mxu0 0.0
        %1338 = vmatprep.subr.mxu0 0.0
        %1339 = vmatpush1.msra.mxu0 0.0
        %1340 = vmatprep.subr.mxu0 0.0
        %1341 = vmatpush1.msra.mxu0 0.0
        %1342 = vmatprep.subr.mxu0 0.0
        %1343 = vmatpush1.msra.mxu0 0.0
        %1344 = vmatprep.subr.mxu0 0.0
        %1345 = vmatpush1.msra.mxu0 0.0
        %1346 = vmatprep.subr.mxu0 0.0
        %1347 = vmatpush1.msra.mxu0 0.0
        %1348 = vmatprep.subr.mxu0 0.0
        %1349 = vmatpush1.msra.mxu0 0.0
        %1350 = vmatprep.subr.mxu0 0.0
        %1351 = vmatpush1.msra.mxu0 0.0
        %1352 = vmatprep.subr.mxu0 0.0
        %1353 = vmatpush1.msra.mxu0 0.0
        %1354 = vmatprep.subr.mxu0 0.0
        %1355 = vmatpush1.msra.mxu0 0.0
        %1356 = vmatprep.subr.mxu0 0.0
        %1357 = vmatpush1.msra.mxu0 0.0
        %1358 = vmatprep.subr.mxu0 0.0
        %1359 = vmatpush1.msra.mxu0 0.0
        %1360 = vmatprep.subr.mxu0 0.0
        %1361 = vmatpush1.msra.mxu0 0.0
        %1362 = vmatprep.subr.mxu0 0.0
        %1363 = vmatpush1.msra.mxu0 0.0
        %1364 = vmatprep.subr.mxu0 0.0
        %1365 = vmatpush1.msra.mxu0 0.0
        %1366 = vmatprep.subr.mxu0 0.0
        %1367 = vmatpush1.msra.mxu0 0.0
        %1368 = vmatprep.subr.mxu0 0.0
        %1369 = vmatpush1.msra.mxu0 0.0
        %1370 = vmatprep.subr.mxu0 0.0
        %1371 = vmatpush1.msra.mxu0 0.0
        %1372 = vmatprep.subr.mxu0 0.0
        %1373 = vmatpush1.msra.mxu0 0.0
        %1374 = vmatprep.subr.mxu0 0.0
        %1375 = vmatpush1.msra.mxu0 0.0
        %1376 = vmatprep.subr.mxu0 0.0
        %1377 = vmatpush1.msra.mxu0 0.0
        %1378 = vmatprep.subr.mxu0 0.0
        %1379 = vmatpush1.msra.mxu0 0.0
        %1380 = vmatprep.subr.mxu0 0.0
        %1381 = vmatpush1.msra.mxu0 0.0
        %1382 = vmatprep.subr.mxu0 0.0
        %1383 = vmatpush1.msra.mxu0 0.0
        %1384 = vmatprep.subr.mxu0 0.0
        %1385 = vmatpush1.msra.mxu0 0.0
        %1386 = vmatprep.subr.mxu0 0.0
        %1387 = vmatpush1.msra.mxu0 0.0
        %1388 = vmatprep.subr.mxu0 0.0
        %1389 = vmatpush1.msra.mxu0 0.0
        %1390 = vmatprep.subr.mxu0 0.0
        %1391 = vmatpush1.msra.mxu0 0.0
        %1392 = vmatprep.mubr.f32.mxu0 0.0
        %1393 = vmatmul.mubr.f32.gmra.mrb[0].mxu0 %v1326
        %v1394 = vpop.f32.mrb[0].mxu0
        %v1395 = vadd.f32 0.0, %v1394
        %v1396 = vpop.f32.mrb[0].mxu0
        %1397 = vdwg.mxu0
        %1398 = vrot.lane.b32.xlu0 %v1225, 112
        %v1399 = vpop.permute.xlu0 %1398
        %1400 = vrot.lane.b32.xlu0 %v1218, 80
        %v1401 = vpop.permute.xlu0 %1400
        %v1402 = vsel %vm1235, %v1399, 0
        %v1404 = vsel %vm1235, %v1401, 0
        %1406 = vmatprep.subr.mxu0 0.0
        %1407 = vmatpush1.xpose.msra.mxu0 %v1404
        %1408 = vmatprep.subr.mxu0 0.0
        %1409 = vmatpush1.xpose.msra.mxu0 0.0
        %1410 = vmatprep.subr.mxu0 0.0
        %1411 = vmatpush1.xpose.msra.mxu0 0.0
        %1412 = vmatprep.subr.mxu0 0.0
        %1413 = vmatpush1.xpose.msra.mxu0 0.0
        %1414 = vmatprep.subr.mxu0 0.0
        %1415 = vmatpush1.xpose.msra.mxu0 0.0
        %1416 = vmatprep.subr.mxu0 0.0
        %1417 = vmatpush1.xpose.msra.mxu0 0.0
        %1418 = vmatprep.subr.mxu0 0.0
        %1419 = vmatpush1.xpose.msra.mxu0 0.0
        %1420 = vmatprep.subr.mxu0 0.0
        %1421 = vmatpush1.xpose.msra.mxu0 0.0
        %1422 = vmatprep.subr.mxu0 0.0
        %1423 = vmatpush1.xpose.msra.mxu0 0.0
        %1424 = vmatprep.subr.mxu0 0.0
        %1425 = vmatpush1.xpose.msra.mxu0 0.0
        %1426 = vmatprep.subr.mxu0 0.0
        %1427 = vmatpush1.xpose.msra.mxu0 0.0
        %1428 = vmatprep.subr.mxu0 0.0
        %1429 = vmatpush1.xpose.msra.mxu0 0.0
        %1430 = vmatprep.subr.mxu0 0.0
        %1431 = vmatpush1.xpose.msra.mxu0 0.0
        %1432 = vmatprep.subr.mxu0 0.0
        %1433 = vmatpush1.xpose.msra.mxu0 0.0
        %1434 = vmatprep.subr.mxu0 0.0
        %1435 = vmatpush1.xpose.msra.mxu0 0.0
        %1436 = vmatprep.subr.mxu0 0.0
        %1437 = vmatpush1.xpose.msra.mxu0 0.0
        %1438 = vmatprep.subr.mxu0 0.0
        %1439 = vmatpush1.xpose.msra.mxu0 0.0
        %1440 = vmatprep.subr.mxu0 0.0
        %1441 = vmatpush1.xpose.msra.mxu0 0.0
        %1442 = vmatprep.subr.mxu0 0.0
        %1443 = vmatpush1.xpose.msra.mxu0 0.0
        %1444 = vmatprep.subr.mxu0 0.0
        %1445 = vmatpush1.xpose.msra.mxu0 0.0
        %1446 = vmatprep.subr.mxu0 0.0
        %1447 = vmatpush1.xpose.msra.mxu0 0.0
        %1448 = vmatprep.subr.mxu0 0.0
        %1449 = vmatpush1.xpose.msra.mxu0 0.0
        %1450 = vmatprep.subr.mxu0 0.0
        %1451 = vmatpush1.xpose.msra.mxu0 0.0
        %1452 = vmatprep.subr.mxu0 0.0
        %1453 = vmatpush1.xpose.msra.mxu0 0.0
        %1454 = vmatprep.subr.mxu0 0.0
        %1455 = vmatpush1.xpose.msra.mxu0 0.0
        %1456 = vmatprep.subr.mxu0 0.0
        %1457 = vmatpush1.xpose.msra.mxu0 0.0
        %1458 = vmatprep.subr.mxu0 0.0
        %1459 = vmatpush1.xpose.msra.mxu0 0.0
        %1460 = vmatprep.subr.mxu0 0.0
        %1461 = vmatpush1.xpose.msra.mxu0 0.0
        %1462 = vmatprep.subr.mxu0 0.0
        %1463 = vmatpush1.xpose.msra.mxu0 0.0
        %1464 = vmatprep.subr.mxu0 0.0
        %1465 = vmatpush1.xpose.msra.mxu0 0.0
        %1466 = vmatprep.subr.mxu0 0.0
        %1467 = vmatpush1.xpose.msra.mxu0 0.0
        %1468 = vmatprep.subr.mxu0 0.0
        %1469 = vmatpush1.xpose.msra.mxu0 0.0
        %1470 = vmatprep.mubr.f32.mxu0 0.0
        %1471 = vmatmul.mubr.f32.gmra.mrb[0].mxu0 %v1402
        %v1472 = vpop.f32.mrb[0].mxu0
        %v1473 = vadd.f32 %v1230, %v1472
        %v1474 = vpop.f32.mrb[0].mxu0
        %1475 = vdwg.mxu0
        %v1476 = vsel %vm1027, %v1473, -inf
        %1477 = vmax.xlane.f32.xlu0 %v1476
        %v1478 = vpop.xlane.xlu0 %1477
        %v1479 = vsub.f32 %v1473, %v1478
        %v1480 = vmul.f32 %v1479, 1.442695
        %v1481 = vpow.pop %v1480
        %v1482 = vsel %vm1027, %v1481, 0.0
        %1483 = vadd.xlane.f32.xlu0 %v1482
        %v1484 = vpop.xlane.xlu0 %1483
        %v1485 = vrcp.pop %v1484
        %v1486 = vmul.f32 %v1481, %v1485
        %1487 = vrot.lane.b32.xlu0 %v1218, 48
        %v1488 = vpop.permute.xlu0 %1487
        %v1491 = vsel %vm1027, %v1486, 0
        %1493 = vmatprep.subr.mxu0 0.0
        %1494 = vmatpush1.msra.mxu0 %v1488
        %1495 = vmatprep.subr.mxu0 0.0
        %1496 = vmatpush1.msra.mxu0 0.0
        %1497 = vmatprep.subr.mxu0 0.0
        %1498 = vmatpush1.msra.mxu0 0.0
        %1499 = vmatprep.subr.mxu0 0.0
        %1500 = vmatpush1.msra.mxu0 0.0
        %1501 = vmatprep.subr.mxu0 0.0
        %1502 = vmatpush1.msra.mxu0 0.0
        %1503 = vmatprep.subr.mxu0 0.0
        %1504 = vmatpush1.msra.mxu0 0.0
        %1505 = vmatprep.subr.mxu0 0.0
        %1506 = vmatpush1.msra.mxu0 0.0
        %1507 = vmatprep.subr.mxu0 0.0
        %1508 = vmatpush1.msra.mxu0 0.0
        %1509 = vmatprep.subr.mxu0 0.0
        %1510 = vmatpush1.msra.mxu0 0.0
        %1511 = vmatprep.subr.mxu0 0.0
        %1512 = vmatpush1.msra.mxu0 0.0
        %1513 = vmatprep.subr.mxu0 0.0
        %1514 = vmatpush1.msra.mxu0 0.0
        %1515 = vmatprep.subr.mxu0 0.0
        %1516 = vmatpush1.msra.mxu0 0.0
        %1517 = vmatprep.subr.mxu0 0.0
        %1518 = vmatpush1.msra.mxu0 0.0
        %1519 = vmatprep.subr.mxu0 0.0
        %1520 = vmatpush1.msra.mxu0 0.0
        %1521 = vmatprep.subr.mxu0 0.0
        %1522 = vmatpush1.msra.mxu0 0.0
        %1523 = vmatprep.subr.mxu0 0.0
        %1524 = vmatpush1.msra.mxu0 0.0
        %1525 = vmatprep.subr.mxu0 0.0
        %1526 = vmatpush1.msra.mxu0 0.0
        %1527 = vmatprep.subr.mxu0 0.0
        %1528 = vmatpush1.msra.mxu0 0.0
        %1529 = vmatprep.subr.mxu0 0.0
        %1530 = vmatpush1.msra.mxu0 0.0
        %1531 = vmatprep.subr.mxu0 0.0
        %1532 = vmatpush1.msra.mxu0 0.0
        %1533 = vmatprep.subr.mxu0 0.0
        %1534 = vmatpush1.msra.mxu0 0.0
        %1535 = vmatprep.subr.mxu0 0.0
        %1536 = vmatpush1.msra.mxu0 0.0
        %1537 = vmatprep.subr.mxu0 0.0
        %1538 = vmatpush1.msra.mxu0 0.0
        %1539 = vmatprep.subr.mxu0 0.0
        %1540 = vmatpush1.msra.mxu0 0.0
        %1541 = vmatprep.subr.mxu0 0.0
        %1542 = vmatpush1.msra.mxu0 0.0
        %1543 = vmatprep.subr.mxu0 0.0
        %1544 = vmatpush1.msra.mxu0 0.0
        %1545 = vmatprep.subr.mxu0 0.0
        %1546 = vmatpush1.msra.mxu0 0.0
        %1547 = vmatprep.subr.mxu0 0.0
        %1548 = vmatpush1.msra.mxu0 0.0
        %1549 = vmatprep.subr.mxu0 0.0
        %1550 = vmatpush1.msra.mxu0 0.0
        %1551 = vmatprep.subr.mxu0 0.0
        %1552 = vmatpush1.msra.mxu0 0.0
        %1553 = vmatprep.subr.mxu0 0.0
        %1554 = vmatpush1.msra.mxu0 0.0
        %1555 = vmatprep.subr.mxu0 0.0
        %1556 = vmatpush1.msra.mxu0 0.0
        %1557 = vmatprep.mubr.f32.mxu0 0.0
        %1558 = vmatmul.mubr.f32.gmra.mrb[0].mxu0 %v1491
        %v1559 = vpop.f32.mrb[0].mxu0
        %v1560 = vadd.f32 0.0, %v1559
        %v1561 = vpop.f32.mrb[0].mxu0
        %1562 = vdwg.mxu0
        %v1564 = vsel %vm1235, %v1560, 0
        %1566 = vmatprep.subr.mxu0 0.0
        %1567 = vmatpush1.msra.mxu0 %v1223
        %1568 = vmatprep.subr.mxu0 0.0
        %1569 = vmatpush1.msra.mxu0 %v1224
        %1570 = vmatprep.subr.mxu0 0.0
        %1571 = vmatpush1.msra.mxu0 0.0
        %1572 = vmatprep.subr.mxu0 0.0
        %1573 = vmatpush1.msra.mxu0 0.0
        %1574 = vmatprep.subr.mxu0 0.0
        %1575 = vmatpush1.msra.mxu0 0.0
        %1576 = vmatprep.subr.mxu0 0.0
        %1577 = vmatpush1.msra.mxu0 0.0
        %1578 = vmatprep.subr.mxu0 0.0
        %1579 = vmatpush1.msra.mxu0 0.0
        %1580 = vmatprep.subr.mxu0 0.0
        %1581 = vmatpush1.msra.mxu0 0.0
        %1582 = vmatprep.subr.mxu0 0.0
        %1583 = vmatpush1.msra.mxu0 0.0
        %1584 = vmatprep.subr.mxu0 0.0
        %1585 = vmatpush1.msra.mxu0 0.0
        %1586 = vmatprep.subr.mxu0 0.0
        %1587 = vmatpush1.msra.mxu0 0.0
        %1588 = vmatprep.subr.mxu0 0.0
        %1589 = vmatpush1.msra.mxu0 0.0
        %1590 = vmatprep.subr.mxu0 0.0
        %1591 = vmatpush1.msra.mxu0 0.0
        %1592 = vmatprep.subr.mxu0 0.0
        %1593 = vmatpush1.msra.mxu0 0.0
        %1594 = vmatprep.subr.mxu0 0.0
        %1595 = vmatpush1.msra.mxu0 0.0
        %1596 = vmatprep.subr.mxu0 0.0
        %1597 = vmatpush1.msra.mxu0 0.0
        %1598 = vmatprep.subr.mxu0 0.0
        %1599 = vmatpush1.msra.mxu0 0.0
        %1600 = vmatprep.subr.mxu0 0.0
        %1601 = vmatpush1.msra.mxu0 0.0
        %1602 = vmatprep.subr.mxu0 0.0
        %1603 = vmatpush1.msra.mxu0 0.0
        %1604 = vmatprep.subr.mxu0 0.0
        %1605 = vmatpush1.msra.mxu0 0.0
        %1606 = vmatprep.subr.mxu0 0.0
        %1607 = vmatpush1.msra.mxu0 0.0
        %1608 = vmatprep.subr.mxu0 0.0
        %1609 = vmatpush1.msra.mxu0 0.0
        %1610 = vmatprep.subr.mxu0 0.0
        %1611 = vmatpush1.msra.mxu0 0.0
        %1612 = vmatprep.subr.mxu0 0.0
        %1613 = vmatpush1.msra.mxu0 0.0
        %1614 = vmatprep.subr.mxu0 0.0
        %1615 = vmatpush1.msra.mxu0 0.0
        %1616 = vmatprep.subr.mxu0 0.0
        %1617 = vmatpush1.msra.mxu0 0.0
        %1618 = vmatprep.subr.mxu0 0.0
        %1619 = vmatpush1.msra.mxu0 0.0
        %1620 = vmatprep.subr.mxu0 0.0
        %1621 = vmatpush1.msra.mxu0 0.0
        %1622 = vmatprep.subr.mxu0 0.0
        %1623 = vmatpush1.msra.mxu0 0.0
        %1624 = vmatprep.subr.mxu0 0.0
        %1625 = vmatpush1.msra.mxu0 0.0
        %1626 = vmatprep.subr.mxu0 0.0
        %1627 = vmatpush1.msra.mxu0 0.0
        %1628 = vmatprep.subr.mxu0 0.0
        %1629 = vmatpush1.msra.mxu0 0.0
        %1630 = vmatprep.mubr.f32.mxu0 0.0
        %1631 = vmatmul.mubr.f32.gmra.mrb[0].mxu0 %v1564
        %v1632 = vpop.f32.mrb[0].mxu0
        %v1633 = vadd.f32 0.0, %v1632
        %v1634 = vpop.f32.mrb[0].mxu0
        %1635 = vdwg.mxu0
        %v1637 = vsel %vm1235, %v1395, 0
        %1639 = vmatprep.subr.mxu0 0.0
        %1640 = vmatpush1.msra.mxu0 %v1221
        %1641 = vmatprep.subr.mxu0 0.0
        %1642 = vmatpush1.msra.mxu0 %v1222
        %1643 = vmatprep.subr.mxu0 0.0
        %1644 = vmatpush1.msra.mxu0 0.0
        %1645 = vmatprep.subr.mxu0 0.0
        %1646 = vmatpush1.msra.mxu0 0.0
        %1647 = vmatprep.subr.mxu0 0.0
        %1648 = vmatpush1.msra.mxu0 0.0
        %1649 = vmatprep.subr.mxu0 0.0
        %1650 = vmatpush1.msra.mxu0 0.0
        %1651 = vmatprep.subr.mxu0 0.0
        %1652 = vmatpush1.msra.mxu0 0.0
        %1653 = vmatprep.subr.mxu0 0.0
        %1654 = vmatpush1.msra.mxu0 0.0
        %1655 = vmatprep.subr.mxu0 0.0
        %1656 = vmatpush1.msra.mxu0 0.0
        %1657 = vmatprep.subr.mxu0 0.0
        %1658 = vmatpush1.msra.mxu0 0.0
        %1659 = vmatprep.subr.mxu0 0.0
        %1660 = vmatpush1.msra.mxu0 0.0
        %1661 = vmatprep.subr.mxu0 0.0
        %1662 = vmatpush1.msra.mxu0 0.0
        %1663 = vmatprep.subr.mxu0 0.0
        %1664 = vmatpush1.msra.mxu0 0.0
        %1665 = vmatprep.subr.mxu0 0.0
        %1666 = vmatpush1.msra.mxu0 0.0
        %1667 = vmatprep.subr.mxu0 0.0
        %1668 = vmatpush1.msra.mxu0 0.0
        %1669 = vmatprep.subr.mxu0 0.0
        %1670 = vmatpush1.msra.mxu0 0.0
        %1671 = vmatprep.subr.mxu0 0.0
        %1672 = vmatpush1.msra.mxu0 0.0
        %1673 = vmatprep.subr.mxu0 0.0
        %1674 = vmatpush1.msra.mxu0 0.0
        %1675 = vmatprep.subr.mxu0 0.0
        %1676 = vmatpush1.msra.mxu0 0.0
        %1677 = vmatprep.subr.mxu0 0.0
        %1678 = vmatpush1.msra.mxu0 0.0
        %1679 = vmatprep.subr.mxu0 0.0
        %1680 = vmatpush1.msra.mxu0 0.0
        %1681 = vmatprep.subr.mxu0 0.0
        %1682 = vmatpush1.msra.mxu0 0.0
        %1683 = vmatprep.subr.mxu0 0.0
        %1684 = vmatpush1.msra.mxu0 0.0
        %1685 = vmatprep.subr.mxu0 0.0
        %1686 = vmatpush1.msra.mxu0 0.0
        %1687 = vmatprep.subr.mxu0 0.0
        %1688 = vmatpush1.msra.mxu0 0.0
        %1689 = vmatprep.subr.mxu0 0.0
        %1690 = vmatpush1.msra.mxu0 0.0
        %1691 = vmatprep.subr.mxu0 0.0
        %1692 = vmatpush1.msra.mxu0 0.0
        %1693 = vmatprep.subr.mxu0 0.0
        %1694 = vmatpush1.msra.mxu0 0.0
        %1695 = vmatprep.subr.mxu0 0.0
        %1696 = vmatpush1.msra.mxu0 0.0
        %1697 = vmatprep.subr.mxu0 0.0
        %1698 = vmatpush1.msra.mxu0 0.0
        %1699 = vmatprep.subr.mxu0 0.0
        %1700 = vmatpush1.msra.mxu0 0.0
        %1701 = vmatprep.subr.mxu0 0.0
        %1702 = vmatpush1.msra.mxu0 0.0
        %1703 = vmatprep.mubr.f32.mxu0 0.0
        %1704 = vmatmul.mubr.f32.gmra.mrb[0].mxu0 %v1637
        %v1705 = vpop.f32.mrb[0].mxu0
        %v1706 = vadd.f32 %v1633, %v1705
        %v1707 = vpop.f32.mrb[0].mxu0
        %1708 = vdwg.mxu0
        %v1709 = vld [vmem:[#allocation8] sm:$0x1]
        %v1711 = vlaneseq
        %v1712 = vshrl.u32 %v1711, 7
        %v1713 = vsub.s32 0, %v1712
        %v1714 = vrot.slane %v1709, %v1713
        %v1716 = vadd.f32 %v1706, %v1714
        %v1717 = vadd.f32 %v1716, %v1132
        %v1718 = vld [vmem:[#allocation10] sm:$0x1]
        %v1719 = vld [vmem:[#allocation11] sm:$0x1]
        %v1720 = vsel %vm1104, %v1717, 0.0
        %1721 = vadd.xlane.f32.xlu0 %v1720
        %v1722 = vpop.xlane.xlu0 %1721
        %v1723 = vmul.f32 %v1722, %v1108
        %v1724 = vsub.f32 %v1717, %v1723
        %v1725 = vmul.f32 %v1724, %v1724
        %v1726 = vsel %vm1104, %v1725, 0.0
        %1727 = vadd.xlane.f32.xlu0 %v1726
        %v1728 = vpop.xlane.xlu0 %1727
        %v1729 = vmul.f32 %v1728, %v1108
        %v1730 = vadd.f32 %v1729, 1e-12
        %v1731 = vrsqrt.pop %v1730
        %v1732 = vmul.f32 %v1724, %v1731
        %v1734 = vlaneseq
        %v1735 = vshrl.u32 %v1734, 7
        %v1736 = vsub.s32 0, %v1735
        %v1737 = vrot.slane %v1718, %v1736
        %v1739 = vmul.f32 %v1732, %v1737
        %v1741 = vlaneseq
        %v1742 = vshrl.u32 %v1741, 7
        %v1743 = vsub.s32 0, %v1742
        %v1744 = vrot.slane %v1719, %v1743
        %v1746 = vadd.f32 %v1739, %v1744
        %v1747 = vld [vmem:[%s14] sm:$0xff]
        %v1748 = vld [vmem:[%s14 + $0x8] sm:$0xff]
        %v1749 = vld [vmem:[%s14 + $0x10] sm:$0xff]
        %v1750 = vld [vmem:[%s14 + $0x18] sm:$0xff]
        %v1751 = vld [vmem:[#allocation13] sm:$0x1]
        %v1753 = vlaneseq
        %v1754 = vshrl.u32 %v1753, 7
        %v1755 = vsub.s32 0, %v1754
        %v1756 = vrot.slane %v1751, %v1755
        %v1759 = vsel %vm1104, %v1746, 0
        %1761 = vmatprep.subr.mxu0 0.0
        %1762 = vmatpush1.msra.mxu0 %v1747
        %1763 = vmatprep.subr.mxu0 0.0
        %1764 = vmatpush1.msra.mxu0 %v1748
        %1765 = vmatprep.subr.mxu0 0.0
        %1766 = vmatpush1.msra.mxu0 %v1749
        %1767 = vmatprep.subr.mxu0 0.0
        %1768 = vmatpush1.msra.mxu0 %v1750
        %1769 = vmatprep.subr.mxu0 0.0
        %1770 = vmatpush1.msra.mxu0 0.0
        %1771 = vmatprep.subr.mxu0 0.0
        %1772 = vmatpush1.msra.mxu0 0.0
        %1773 = vmatprep.subr.mxu0 0.0
        %1774 = vmatpush1.msra.mxu0 0.0
        %1775 = vmatprep.subr.mxu0 0.0
        %1776 = vmatpush1.msra.mxu0 0.0
        %1777 = vmatprep.subr.mxu0 0.0
        %1778 = vmatpush1.msra.mxu0 0.0
        %1779 = vmatprep.subr.mxu0 0.0
        %1780 = vmatpush1.msra.mxu0 0.0
        %1781 = vmatprep.subr.mxu0 0.0
        %1782 = vmatpush1.msra.mxu0 0.0
        %1783 = vmatprep.subr.mxu0 0.0
        %1784 = vmatpush1.msra.mxu0 0.0
        %1785 = vmatprep.subr.mxu0 0.0
        %1786 = vmatpush1.msra.mxu0 0.0
        %1787 = vmatprep.subr.mxu0 0.0
        %1788 = vmatpush1.msra.mxu0 0.0
        %1789 = vmatprep.subr.mxu0 0.0
        %1790 = vmatpush1.msra.mxu0 0.0
        %1791 = vmatprep.subr.mxu0 0.0
        %1792 = vmatpush1.msra.mxu0 0.0
        %1793 = vmatprep.subr.mxu0 0.0
        %1794 = vmatpush1.msra.mxu0 0.0
        %1795 = vmatprep.subr.mxu0 0.0
        %1796 = vmatpush1.msra.mxu0 0.0
        %1797 = vmatprep.subr.mxu0 0.0
        %1798 = vmatpush1.msra.mxu0 0.0
        %1799 = vmatprep.subr.mxu0 0.0
        %1800 = vmatpush1.msra.mxu0 0.0
        %1801 = vmatprep.subr.mxu0 0.0
        %1802 = vmatpush1.msra.mxu0 0.0
        %1803 = vmatprep.subr.mxu0 0.0
        %1804 = vmatpush1.msra.mxu0 0.0
        %1805 = vmatprep.subr.mxu0 0.0
        %1806 = vmatpush1.msra.mxu0 0.0
        %1807 = vmatprep.subr.mxu0 0.0
        %1808 = vmatpush1.msra.mxu0 0.0
        %1809 = vmatprep.subr.mxu0 0.0
        %1810 = vmatpush1.msra.mxu0 0.0
        %1811 = vmatprep.subr.mxu0 0.0
        %1812 = vmatpush1.msra.mxu0 0.0
        %1813 = vmatprep.subr.mxu0 0.0
        %1814 = vmatpush1.msra.mxu0 0.0
        %1815 = vmatprep.subr.mxu0 0.0
        %1816 = vmatpush1.msra.mxu0 0.0
        %1817 = vmatprep.subr.mxu0 0.0
        %1818 = vmatpush1.msra.mxu0 0.0
        %1819 = vmatprep.subr.mxu0 0.0
        %1820 = vmatpush1.msra.mxu0 0.0
        %1821 = vmatprep.subr.mxu0 0.0
        %1822 = vmatpush1.msra.mxu0 0.0
        %1823 = vmatprep.subr.mxu0 0.0
        %1824 = vmatpush1.msra.mxu0 0.0
        %1825 = vmatprep.mubr.f32.mxu0 0.0
        %1826 = vmatmul.mubr.f32.gmra.mrb[0].mxu0 %v1759
        %v1827 = vpop.f32.mrb[0].mxu0
        %v1828 = vadd.f32 %v1756, %v1827
        %v1829 = vpop.f32.mrb[0].mxu0
        %1830 = vdwg.mxu0
        %v1831 = vmul.f32 %v1828, %v1828
        %v1832 = vmul.f32 %v1828, %v1831
        %v1833 = vmul.f32 %v1832, 0.044715
        %v1834 = vadd.f32 %v1828, %v1833
        %v1835 = vmul.f32 %v1834, 0.7978846
        %v1836 = vtanh.pop %v1835
        %v1837 = vadd.f32 %v1836, 1.0
        %v1838 = vmul.f32 %v1837, 0.5
        %v1839 = vmul.f32 %v1828, %v1838
        %v1840 = vld [vmem:[%s16] sm:$0xff]
        %v1841 = vld [vmem:[%s16 + $0x8] sm:$0xff]
        %v1842 = vld [vmem:[%s16 + $0x10] sm:$0xff]
        %v1843 = vld [vmem:[%s16 + $0x18] sm:$0xff]
        %v1844 = vld [vmem:[%s16 + $0x20] sm:$0xff]
        %v1845 = vld [vmem:[%s16 + $0x28] sm:$0xff]
        %v1846 = vld [vmem:[%s16 + $0x30] sm:$0xff]
        %v1847 = vld [vmem:[%s16 + $0x38] sm:$0xff]
        %v1848 = vld [vmem:[#allocation14] sm:$0x1]
        %v1850 = vlaneseq
        %v1851 = vshrl.u32 %v1850, 7
        %v1852 = vsub.s32 0, %v1851
        %v1853 = vrot.slane %v1848, %v1852
        %vm1855 = vcmask 523264
        %v1857 = vsel %vm1855, %v1839, 0
        %1859 = vmatprep.subr.mxu0 0.0
        %1860 = vmatpush1.msra.mxu0 %v1840
        %1861 = vmatprep.subr.mxu0 0.0
        %1862 = vmatpush1.msra.mxu0 %v1841
        %1863 = vmatprep.subr.mxu0 0.0
        %1864 = vmatpush1.msra.mxu0 %v1842
        %1865 = vmatprep.subr.mxu0 0.0
        %1866 = vmatpush1.msra.mxu0 %v1843
        %1867 = vmatprep.subr.mxu0 0.0
        %1868 = vmatpush1.msra.mxu0 %v1844
        %1869 = vmatprep.subr.mxu0 0.0
        %1870 = vmatpush1.msra.mxu0 %v1845
        %1871 = vmatprep.subr.mxu0 0.0
        %1872 = vmatpush1.msra.mxu0 %v1846
        %1873 = vmatprep.subr.mxu0 0.0
        %1874 = vmatpush1.msra.mxu0 %v1847
        %1875 = vmatprep.subr.mxu0 0.0
        %1876 = vmatpush1.msra.mxu0 0.0
        %1877 = vmatprep.subr.mxu0 0.0
        %1878 = vmatpush1.msra.mxu0 0.0
        %1879 = vmatprep.subr.mxu0 0.0
        %1880 = vmatpush1.msra.mxu0 0.0
        %1881 = vmatprep.subr.mxu0 0.0
        %1882 = vmatpush1.msra.mxu0 0.0
        %1883 = vmatprep.subr.mxu0 0.0
        %1884 = vmatpush1.msra.mxu0 0.0
        %1885 = vmatprep.subr.mxu0 0.0
        %1886 = vmatpush1.msra.mxu0 0.0
        %1887 = vmatprep.subr.mxu0 0.0
        %1888 = vmatpush1.msra.mxu0 0.0
        %1889 = vmatprep.subr.mxu0 0.0
        %1890 = vmatpush1.msra.mxu0 0.0
        %1891 = vmatprep.subr.mxu0 0.0
        %1892 = vmatpush1.msra.mxu0 0.0
        %1893 = vmatprep.subr.mxu0 0.0
        %1894 = vmatpush1.msra.mxu0 0.0
        %1895 = vmatprep.subr.mxu0 0.0
        %1896 = vmatpush1.msra.mxu0 0.0
        %1897 = vmatprep.subr.mxu0 0.0
        %1898 = vmatpush1.msra.mxu0 0.0
        %1899 = vmatprep.subr.mxu0 0.0
        %1900 = vmatpush1.msra.mxu0 0.0
        %1901 = vmatprep.subr.mxu0 0.0
        %1902 = vmatpush1.msra.mxu0 0.0
        %1903 = vmatprep.subr.mxu0 0.0
        %1904 = vmatpush1.msra.mxu0 0.0
        %1905 = vmatprep.subr.mxu0 0.0
        %1906 = vmatpush1.msra.mxu0 0.0
        %1907 = vmatprep.subr.mxu0 0.0
        %1908 = vmatpush1.msra.mxu0 0.0
        %1909 = vmatprep.subr.mxu0 0.0
        %1910 = vmatpush1.msra.mxu0 0.0
        %1911 = vmatprep.subr.mxu0 0.0
        %1912 = vmatpush1.msra.mxu0 0.0
        %1913 = vmatprep.subr.mxu0 0.0
        %1914 = vmatpush1.msra.mxu0 0.0
        %1915 = vmatprep.subr.mxu0 0.0
        %1916 = vmatpush1.msra.mxu0 0.0
        %1917 = vmatprep.subr.mxu0 0.0
        %1918 = vmatpush1.msra.mxu0 0.0
        %1919 = vmatprep.subr.mxu0 0.0
        %1920 = vmatpush1.msra.mxu0 0.0
        %1921 = vmatprep.subr.mxu0 0.0
        %1922 = vmatpush1.msra.mxu0 0.0
        %1923 = vmatprep.mubr.f32.mxu0 0.0
        %1924 = vmatmul.mubr.f32.gmra.mrb[0].mxu0 %v1857
        %v1925 = vpop.f32.mrb[0].mxu0
        %v1926 = vadd.f32 %v1853, %v1925
        %v1927 = vpop.f32.mrb[0].mxu0
        %1928 = vdwg.mxu0
        %v1929 = vadd.f32 %v1926, %v1746
        %v1930 = vld [vmem:[#allocation16] sm:$0x1]
        %v1931 = vld [vmem:[#allocation17] sm:$0x1]
        %v1932 = vsel %vm1104, %v1929, 0.0
        %1933 = vadd.xlane.f32.xlu0 %v1932
        %v1934 = vpop.xlane.xlu0 %1933
        %v1935 = vmul.f32 %v1934, %v1108
        %v1936 = vsub.f32 %v1929, %v1935
        %v1937 = vmul.f32 %v1936, %v1936
        %v1938 = vsel %vm1104, %v1937, 0.0
        %1939 = vadd.xlane.f32.xlu0 %v1938
        %v1940 = vpop.xlane.xlu0 %1939
        %v1941 = vmul.f32 %v1940, %v1108
        %v1942 = vadd.f32 %v1941, 1e-12
        %v1943 = vrsqrt.pop %v1942
        %v1944 = vmul.f32 %v1936, %v1943
        %v1946 = vlaneseq
        %v1947 = vshrl.u32 %v1946, 7
        %v1948 = vsub.s32 0, %v1947
        %v1949 = vrot.slane %v1930, %v1948
        %v1951 = vmul.f32 %v1944, %v1949
        %v1953 = vlaneseq
        %v1954 = vshrl.u32 %v1953, 7
        %v1955 = vsub.s32 0, %v1954
        %v1956 = vrot.slane %v1931, %v1955
        %v1958 = vadd.f32 %v1951, %v1956
        %s1959 = scalar_lea.vmem %s8, 32
        %v1960 = vld [vmem:[%s1959] sm:$0xff]
        %v1961 = vld [vmem:[%s1959 + $0x8] sm:$0xff]
        %v1962 = vld [vmem:[%s1959 + $0x10] sm:$0xff]
        %v1963 = vld [vmem:[%s1959 + $0x18] sm:$0xff]
        %s1964 = scalar_lea.vmem [#allocation7], 1
        %v1965 = vld [vmem:[%s1964] sm:$0x1]
        %v1967 = vlaneseq
        %v1968 = vshrl.u32 %v1967, 7
        %v1969 = vsub.s32 0, %v1968
        %v1970 = vrot.slane %v1965, %v1969
        %v1973 = vsel %vm1104, %v1958, 0
        %1975 = vmatprep.subr.mxu0 0.0
        %1976 = vmatpush1.msra.mxu0 %v1960
        %1977 = vmatprep.subr.mxu0 0.0
        %1978 = vmatpush1.msra.mxu0 %v1961
        %1979 = vmatprep.subr.mxu0 0.0
        %1980 = vmatpush1.msra.mxu0 %v1962
        %1981 = vmatprep.subr.mxu0 0.0
        %1982 = vmatpush1.msra.mxu0 %v1963
        %1983 = vmatprep.subr.mxu0 0.0
        %1984 = vmatpush1.msra.mxu0 0.0
        %1985 = vmatprep.subr.mxu0 0.0
        %1986 = vmatpush1.msra.mxu0 0.0
        %1987 = vmatprep.subr.mxu0 0.0
        %1988 = vmatpush1.msra.mxu0 0.0
        %1989 = vmatprep.subr.mxu0 0.0
        %1990 = vmatpush1.msra.mxu0 0.0
        %1991 = vmatprep.subr.mxu0 0.0
        %1992 = vmatpush1.msra.mxu0 0.0
        %1993 = vmatprep.subr.mxu0 0.0
        %1994 = vmatpush1.msra.mxu0 0.0
        %1995 = vmatprep.subr.mxu0 0.0
        %1996 = vmatpush1.msra.mxu0 0.0
        %1997 = vmatprep.subr.mxu0 0.0
        %1998 = vmatpush1.msra.mxu0 0.0
        %1999 = vmatprep.subr.mxu0 0.0
        %2000 = vmatpush1.msra.mxu0 0.0
        %2001 = vmatprep.subr.mxu0 0.0
        %2002 = vmatpush1.msra.mxu0 0.0
        %2003 = vmatprep.subr.mxu0 0.0
        %2004 = vmatpush1.msra.mxu0 0.0
        %2005 = vmatprep.subr.mxu0 0.0
        %2006 = vmatpush1.msra.mxu0 0.0
        %2007 = vmatprep.subr.mxu0 0.0
        %2008 = vmatpush1.msra.mxu0 0.0
        %2009 = vmatprep.subr.mxu0 0.0
        %2010 = vmatpush1.msra.mxu0 0.0
        %2011 = vmatprep.subr.mxu0 0.0
        %2012 = vmatpush1.msra.mxu0 0.0
        %2013 = vmatprep.subr.mxu0 0.0
        %2014 = vmatpush1.msra.mxu0 0.0
        %2015 = vmatprep.subr.mxu0 0.0
        %2016 = vmatpush1.msra.mxu0 0.0
        %2017 = vmatprep.subr.mxu0 0.0
        %2018 = vmatpush1.msra.mxu0 0.0
        %2019 = vmatprep.subr.mxu0 0.0
        %2020 = vmatpush1.msra.mxu0 0.0
        %2021 = vmatprep.subr.mxu0 0.0
        %2022 = vmatpush1.msra.mxu0 0.0
        %2023 = vmatprep.subr.mxu0 0.0
        %2024 = vmatpush1.msra.mxu0 0.0
        %2025 = vmatprep.subr.mxu0 0.0
        %2026 = vmatpush1.msra.mxu0 0.0
        %2027 = vmatprep.subr.mxu0 0.0
        %2028 = vmatpush1.msra.mxu0 0.0
        %2029 = vmatprep.subr.mxu0 0.0
        %2030 = vmatpush1.msra.mxu0 0.0
        %2031 = vmatprep.subr.mxu0 0.0
        %2032 = vmatpush1.msra.mxu0 0.0
        %2033 = vmatprep.subr.mxu0 0.0
        %2034 = vmatpush1.msra.mxu0 0.0
        %2035 = vmatprep.subr.mxu0 0.0
        %2036 = vmatpush1.msra.mxu0 0.0
        %2037 = vmatprep.subr.mxu0 0.0
        %2038 = vmatpush1.msra.mxu0 0.0
        %2039 = vmatprep.mubr.f32.mxu0 0.0
        %2040 = vmatmul.mubr.f32.gmra.mrb[0].mxu0 %v1973
        %v2041 = vpop.f32.mrb[0].mxu0
        %v2042 = vadd.f32 %v1970, %v2041
        %v2043 = vpop.f32.mrb[0].mxu0
        %2044 = vdwg.mxu0
        %s2045 = scalar_lea.vmem %s10, 32
        %v2046 = vld [vmem:[%s2045] sm:$0xff]
        %v2047 = vld [vmem:[%s2045 + $0x8] sm:$0xff]
        %v2048 = vld [vmem:[%s2045 + $0x10] sm:$0xff]
        %v2049 = vld [vmem:[%s2045 + $0x18] sm:$0xff]
        %v2050 = vmul.f32 %v2042, 0.25
        %2052 = vrot.lane.b32.xlu0 %v2042, 96
        %v2053 = vpop.permute.xlu0 %2052
        %v2055 = vsel %vm1235, %v2050, 0
        %v2057 = vsel %vm1235, %v2053, 0
        %2059 = vmatprep.subr.mxu0 0.0
        %2060 = vmatpush1.xpose.msra.mxu0 %v2057
        %2061 = vmatprep.subr.mxu0 0.0
        %2062 = vmatpush1.xpose.msra.mxu0 0.0
        %2063 = vmatprep.subr.mxu0 0.0
        %2064 = vmatpush1.xpose.msra.mxu0 0.0
        %2065 = vmatprep.subr.mxu0 0.0
        %2066 = vmatpush1.xpose.msra.mxu0 0.0
        %2067 = vmatprep.subr.mxu0 0.0
        %2068 = vmatpush1.xpose.msra.mxu0 0.0
        %2069 = vmatprep.subr.mxu0 0.0
        %2070 = vmatpush1.xpose.msra.mxu0 0.0
        %2071 = vmatprep.subr.mxu0 0.0
        %2072 = vmatpush1.xpose.msra.mxu0 0.0
        %2073 = vmatprep.subr.mxu0 0.0
        %2074 = vmatpush1.xpose.msra.mxu0 0.0
        %2075 = vmatprep.subr.mxu0 0.0
        %2076 = vmatpush1.xpose.msra.mxu0 0.0
        %2077 = vmatprep.subr.mxu0 0.0
        %2078 = vmatpush1.xpose.msra.mxu0 0.0
        %2079 = vmatprep.subr.mxu0 0.0
        %2080 = vmatpush1.xpose.msra.mxu0 0.0
        %2081 = vmatprep.subr.mxu0 0.0
        %2082 = vmatpush1.xpose.msra.mxu0 0.0
        %2083 = vmatprep.subr.mxu0 0.0
        %2084 = vmatpush1.xpose.msra.mxu0 0.0
        %2085 = vmatprep.subr.mxu0 0.0
        %2086 = vmatpush1.xpose.msra.mxu0 0.0
        %2087 = vmatprep.subr.mxu0 0.0
        %2088 = vmatpush1.xpose.msra.mxu0 0.0
        %2089 = vmatprep.subr.mxu0 0.0
        %2090 = vmatpush1.xpose.msra.mxu0 0.0
        %2091 = vmatprep.subr.mxu0 0.0
        %2092 = vmatpush1.xpose.msra.mxu0 0.0
        %2093 = vmatprep.subr.mxu0 0.0
        %2094 = vmatpush1.xpose.msra.mxu0 0.0
        %2095 = vmatprep.subr.mxu0 0.0
        %2096 = vmatpush1.xpose.msra.mxu0 0.0
        %2097 = vmatprep.subr.mxu0 0.0
        %2098 = vmatpush1.xpose.msra.mxu0 0.0
        %2099 = vmatprep.subr.mxu0 0.0
        %2100 = vmatpush1.xpose.msra.mxu0 0.0
        %2101 = vmatprep.subr.mxu0 0.0
        %2102 = vmatpush1.xpose.msra.mxu0 0.0
        %2103 = vmatprep.subr.mxu0 0.0
        %2104 = vmatpush1.xpose.msra.mxu0 0.0
        %2105 = vmatprep.subr.mxu0 0.0
        %2106 = vmatpush1.xpose.msra.mxu0 0.0
        %2107 = vmatprep.subr.mxu0 0.0
        %2108 = vmatpush1.xpose.msra.mxu0 0.0
        %2109 = vmatprep.subr.mxu0 0.0
        %2110 = vmatpush1.xpose.msra.mxu0 0.0
        %2111 = vmatprep.subr.mxu0 0.0
        %2112 = vmatpush1.xpose.msra.mxu0 0.0
        %2113 = vmatprep.subr.mxu0 0.0
        %2114 = vmatpush1.xpose.msra.mxu0 0.0
        %2115 = vmatprep.subr.mxu0 0.0
        %2116 = vmatpush1.xpose.msra.mxu0 0.0
        %2117 = vmatprep.subr.mxu0 0.0
        %2118 = vmatpush1.xpose.msra.mxu0 0.0
        %2119 = vmatprep.subr.mxu0 0.0
        %2120 = vmatpush1.xpose.msra.mxu0 0.0
        %2121 = vmatprep.subr.mxu0 0.0
        %2122 = vmatpush1.xpose.msra.mxu0 0.0
        %2123 = vmatprep.mubr.f32.mxu0 0.0
        %2124 = vmatmul.mubr.f32.gmra.mrb[0].mxu0 %v2055
        %v2125 = vpop.f32.mrb[0].mxu0
        %v2126 = vadd.f32 %v1230, %v2125
        %v2127 = vpop.f32.mrb[0].mxu0
        %2128 = vdwg.mxu0
        %v2129 = vsel %vm1027, %v2126, -inf
        %2130 = vmax.xlane.f32.xlu0 %v2129
        %v2131 = vpop.xlane.xlu0 %2130
        %v2132 = vsub.f32 %v2126, %v2131
        %v2133 = vmul.f32 %v2132, 1.442695
        %v2134 = vpow.pop %v2133
        %v2135 = vsel %vm1027, %v2134, 0.0
        %2136 = vadd.xlane.f32.xlu0 %v2135
        %v2137 = vpop.xlane.xlu0 %2136
        %v2138 = vrcp.pop %v2137
        %v2139 = vmul.f32 %v2134, %v2138
        %2140 = vrot.lane.b32.xlu0 %v2042, 64
        %v2141 = vpop.permute.xlu0 %2140
        %v2144 = vsel %vm1027, %v2139, 0
        %2146 = vmatprep.subr.mxu0 0.0
        %2147 = vmatpush1.msra.mxu0 %v2141
        %2148 = vmatprep.subr.mxu0 0.0
        %2149 = vmatpush1.msra.mxu0 0.0
        %2150 = vmatprep.subr.mxu0 0.0
        %2151 = vmatpush1.msra.mxu0 0.0
        %2152 = vmatprep.subr.mxu0 0.0
        %2153 = vmatpush1.msra.mxu0 0.0
        %2154 = vmatprep.subr.mxu0 0.0
        %2155 = vmatpush1.msra.mxu0 0.0
        %2156 = vmatprep.subr.mxu0 0.0
        %2157 = vmatpush1.msra.mxu0 0.0
        %2158 = vmatprep.subr.mxu0 0.0
        %2159 = vmatpush1.msra.mxu0 0.0
        %2160 = vmatprep.subr.mxu0 0.0
        %2161 = vmatpush1.msra.mxu0 0.0
        %2162 = vmatprep.subr.mxu0 0.0
        %2163 = vmatpush1.msra.mxu0 0.0
        %2164 = vmatprep.subr.mxu0 0.0
        %2165 = vmatpush1.msra.mxu0 0.0
        %2166 = vmatprep.subr.mxu0 0.0
        %2167 = vmatpush1.msra.mxu0 0.0
        %2168 = vmatprep.subr.mxu0 0.0
        %2169 = vmatpush1.msra.mxu0 0.0
        %2170 = vmatprep.subr.mxu0 0.0
        %2171 = vmatpush1.msra.mxu0 0.0
        %2172 = vmatprep.subr.mxu0 0.0
        %2173 = vmatpush1.msra.mxu0 0.0
        %2174 = vmatprep.subr.mxu0 0.0
        %2175 = vmatpush1.msra.mxu0 0.0
        %2176 = vmatprep.subr.mxu0 0.0
        %2177 = vmatpush1.msra.mxu0 0.0
        %2178 = vmatprep.subr.mxu0 0.0
        %2179 = vmatpush1.msra.mxu0 0.0
        %2180 = vmatprep.subr.mxu0 0.0
        %2181 = vmatpush1.msra.mxu0 0.0
        %2182 = vmatprep.subr.mxu0 0.0
        %2183 = vmatpush1.msra.mxu0 0.0
        %2184 = vmatprep.subr.mxu0 0.0
        %2185 = vmatpush1.msra.mxu0 0.0
        %2186 = vmatprep.subr.mxu0 0.0
        %2187 = vmatpush1.msra.mxu0 0.0
        %2188 = vmatprep.subr.mxu0 0.0
        %2189 = vmatpush1.msra.mxu0 0.0
        %2190 = vmatprep.subr.mxu0 0.0
        %2191 = vmatpush1.msra.mxu0 0.0
        %2192 = vmatprep.subr.mxu0 0.0
        %2193 = vmatpush1.msra.mxu0 0.0
        %2194 = vmatprep.subr.mxu0 0.0
        %2195 = vmatpush1.msra.mxu0 0.0
        %2196 = vmatprep.subr.mxu0 0.0
        %2197 = vmatpush1.msra.mxu0 0.0
        %2198 = vmatprep.subr.mxu0 0.0
        %2199 = vmatpush1.msra.mxu0 0.0
        %2200 = vmatprep.subr.mxu0 0.0
        %2201 = vmatpush1.msra.mxu0 0.0
        %2202 = vmatprep.subr.mxu0 0.0
        %2203 = vmatpush1.msra.mxu0 0.0
        %2204 = vmatprep.subr.mxu0 0.0
        %2205 = vmatpush1.msra.mxu0 0.0
        %2206 = vmatprep.subr.mxu0 0.0
        %2207 = vmatpush1.msra.mxu0 0.0
        %2208 = vmatprep.subr.mxu0 0.0
        %2209 = vmatpush1.msra.mxu0 0.0
        %2210 = vmatprep.mubr.f32.mxu0 0.0
        %2211 = vmatmul.mubr.f32.gmra.mrb[0].mxu0 %v2144
        %v2212 = vpop.f32.mrb[0].mxu0
        %v2213 = vadd.f32 0.0, %v2212
        %v2214 = vpop.f32.mrb[0].mxu0
        %2215 = vdwg.mxu0
        %2216 = vrot.lane.b32.xlu0 %v2050, 112
        %v2217 = vpop.permute.xlu0 %2216
        %2218 = vrot.lane.b32.xlu0 %v2042, 80
        %v2219 = vpop.permute.xlu0 %2218
        %v2220 = vsel %vm1235, %v2217, 0
        %v2222 = vsel %vm1235, %v2219, 0
        %2224 = vmatprep.subr.mxu0 0.0
        %2225 = vmatpush1.xpose.msra.mxu0 %v2222
        %2226 = vmatprep.subr.mxu0 0.0
        %2227 = vmatpush1.xpose.msra.mxu0 0.0
        %2228 = vmatprep.subr.mxu0 0.0
        %2229 = vmatpush1.xpose.msra.mxu0 0.0
        %2230 = vmatprep.subr.mxu0 0.0
        %2231 = vmatpush1.xpose.msra.mxu0 0.0
        %2232 = vmatprep.subr.mxu0 0.0
        %2233 = vmatpush1.xpose.msra.mxu0 0.0
        %2234 = vmatprep.subr.mxu0 0.0
        %2235 = vmatpush1.xpose.msra.mxu0 0.0
        %2236 = vmatprep.subr.mxu0 0.0
        %2237 = vmatpush1.xpose.msra.mxu0 0.0
        %2238 = vmatprep.subr.mxu0 0.0
        %2239 = vmatpush1.xpose.msra.mxu0 0.0
        %2240 = vmatprep.subr.mxu0 0.0
        %2241 = vmatpush1.xpose.msra.mxu0 0.0
        %2242 = vmatprep.subr.mxu0 0.0
        %2243 = vmatpush1.xpose.msra.mxu0 0.0
        %2244 = vmatprep.subr.mxu0 0.0
        %2245 = vmatpush1.xpose.msra.mxu0 0.0
        %2246 = vmatprep.subr.mxu0 0.0
        %2247 = vmatpush1.xpose.msra.mxu0 0.0
        %2248 = vmatprep.subr.mxu0 0.0
        %2249 = vmatpush1.xpose.msra.mxu0 0.0
        %2250 = vmatprep.subr.mxu0 0.0
        %2251 = vmatpush1.xpose.msra.mxu0 0.0
        %2252 = vmatprep.subr.mxu0 0.0
        %2253 = vmatpush1.xpose.msra.mxu0 0.0
        %2254 = vmatprep.subr.mxu0 0.0
        %2255 = vmatpush1.xpose.msra.mxu0 0.0
        %2256 = vmatprep.subr.mxu0 0.0
        %2257 = vmatpush1.xpose.msra.mxu0 0.0
        %2258 = vmatprep.subr.mxu0 0.0
        %2259 = vmatpush1.xpose.msra.mxu0 0.0
        %2260 = vmatprep.subr.mxu0 0.0
        %2261 = vmatpush1.xpose.msra.mxu0 0.0
        %2262 = vmatprep.subr.mxu0 0.0
        %2263 = vmatpush1.xpose.msra.mxu0 0.0
        %2264 = vmatprep.subr.mxu0 0.0
        %2265 = vmatpush1.xpose.msra.mxu0 0.0
        %2266 = vmatprep.subr.mxu0 0.0
        %2267 = vmatpush1.xpose.msra.mxu0 0.0
        %2268 = vmatprep.subr.mxu0 0.0
        %2269 = vmatpush1.xpose.msra.mxu0 0.0
        %2270 = vmatprep.subr.mxu0 0.0
        %2271 = vmatpush1.xpose.msra.mxu0 0.0
        %2272 = vmatprep.subr.mxu0 0.0
        %2273 = vmatpush1.xpose.msra.mxu0 0.0
        %2274 = vmatprep.subr.mxu0 0.0
        %2275 = vmatpush1.xpose.msra.mxu0 0.0
        %2276 = vmatprep.subr.mxu0 0.0
        %2277 = vmatpush1.xpose.msra.mxu0 0.0
        %2278 = vmatprep.subr.mxu0 0.0
        %2279 = vmatpush1.xpose.msra.mxu0 0.0
        %2280 = vmatprep.subr.mxu0 0.0
        %2281 = vmatpush1.xpose.msra.mxu0 0.0
        %2282 = vmatprep.subr.mxu0 0.0
        %2283 = vmatpush1.xpose.msra.mxu0 0.0
        %2284 = vmatprep.subr.mxu0 0.0
        %2285 = vmatpush1.xpose.msra.mxu0 0.0
        %2286 = vmatprep.subr.mxu0 0.0
        %2287 = vmatpush1.xpose.msra.mxu0 0.0
        %2288 = vmatprep.mubr.f32.mxu0 0.0
        %2289 = vmatmul.mubr.f32.gmra.mrb[0].mxu0 %v2220
        %v2290 = vpop.f32.mrb[0].mxu0
        %v2291 = vadd.f32 %v1230, %v2290
        %v2292 = vpop.f32.mrb[0].mxu0
        %2293 = vdwg.mxu0
        %v2294 = vsel %vm1027, %v2291, -inf
        %2295 = vmax.xlane.f32.xlu0 %v2294
        %v2296 = vpop.xlane.xlu0 %2295
        %v2297 = vsub.f32 %v2291, %v2296
        %v2298 = vmul.f32 %v2297, 1.442695
        %v2299 = vpow.pop %v2298
        %v2300 = vsel %vm1027, %v2299, 0.0
        %2301 = vadd.xlane.f32.xlu0 %v2300
        %v2302 = vpop.xlane.xlu0 %2301
        %v2303 = vrcp.pop %v2302
        %v2304 = vmul.f32 %v2299, %v2303
        %2305 = vrot.lane.b32.xlu0 %v2042, 48
        %v2306 = vpop.permute.xlu0 %2305
        %v2309 = vsel %vm1027, %v2304, 0
        %2311 = vmatprep.subr.mxu0 0.0
        %2312 = vmatpush1.msra.mxu0 %v2306
        %2313 = vmatprep.subr.mxu0 0.0
        %2314 = vmatpush1.msra.mxu0 0.0
        %2315 = vmatprep.subr.mxu0 0.0
        %2316 = vmatpush1.msra.mxu0 0.0
        %2317 = vmatprep.subr.mxu0 0.0
        %2318 = vmatpush1.msra.mxu0 0.0
        %2319 = vmatprep.subr.mxu0 0.0
        %2320 = vmatpush1.msra.mxu0 0.0
        %2321 = vmatprep.subr.mxu0 0.0
        %2322 = vmatpush1.msra.mxu0 0.0
        %2323 = vmatprep.subr.mxu0 0.0
        %2324 = vmatpush1.msra.mxu0 0.0
        %2325 = vmatprep.subr.mxu0 0.0
        %2326 = vmatpush1.msra.mxu0 0.0
        %2327 = vmatprep.subr.mxu0 0.0
        %2328 = vmatpush1.msra.mxu0 0.0
        %2329 = vmatprep.subr.mxu0 0.0
        %2330 = vmatpush1.msra.mxu0 0.0
        %2331 = vmatprep.subr.mxu0 0.0
        %2332 = vmatpush1.msra.mxu0 0.0
        %2333 = vmatprep.subr.mxu0 0.0
        %2334 = vmatpush1.msra.mxu0 0.0
        %2335 = vmatprep.subr.mxu0 0.0
        %2336 = vmatpush1.msra.mxu0 0.0
        %2337 = vmatprep.subr.mxu0 0.0
        %2338 = vmatpush1.msra.mxu0 0.0
        %2339 = vmatprep.subr.mxu0 0.0
        %2340 = vmatpush1.msra.mxu0 0.0
        %2341 = vmatprep.subr.mxu0 0.0
        %2342 = vmatpush1.msra.mxu0 0.0
        %2343 = vmatprep.subr.mxu0 0.0
        %2344 = vmatpush1.msra.mxu0 0.0
        %2345 = vmatprep.subr.mxu0 0.0
        %2346 = vmatpush1.msra.mxu0 0.0
        %2347 = vmatprep.subr.mxu0 0.0
        %2348 = vmatpush1.msra.mxu0 0.0
        %2349 = vmatprep.subr.mxu0 0.0
        %2350 = vmatpush1.msra.mxu0 0.0
        %2351 = vmatprep.subr.mxu0 0.0
        %2352 = vmatpush1.msra.mxu0 0.0
        %2353 = vmatprep.subr.mxu0 0.0
        %2354 = vmatpush1.msra.mxu0 0.0
        %2355 = vmatprep.subr.mxu0 0.0
        %2356 = vmatpush1.msra.mxu0 0.0
        %2357 = vmatprep.subr.mxu0 0.0
        %2358 = vmatpush1.msra.mxu0 0.0
        %2359 = vmatprep.subr.mxu0 0.0
        %2360 = vmatpush1.msra.mxu0 0.0
        %2361 = vmatprep.subr.mxu0 0.0
        %2362 = vmatpush1.msra.mxu0 0.0
        %2363 = vmatprep.subr.mxu0 0.0
        %2364 = vmatpush1.msra.mxu0 0.0
        %2365 = vmatprep.subr.mxu0 0.0
        %2366 = vmatpush1.msra.mxu0 0.0
        %2367 = vmatprep.subr.mxu0 0.0
        %2368 = vmatpush1.msra.mxu0 0.0
        %2369 = vmatprep.subr.mxu0 0.0
        %2370 = vmatpush1.msra.mxu0 0.0
        %2371 = vmatprep.subr.mxu0 0.0
        %2372 = vmatpush1.msra.mxu0 0.0
        %2373 = vmatprep.subr.mxu0 0.0
        %2374 = vmatpush1.msra.mxu0 0.0
        %2375 = vmatprep.mubr.f32.mxu0 0.0
        %2376 = vmatmul.mubr.f32.gmra.mrb[0].mxu0 %v2309
        %v2377 = vpop.f32.mrb[0].mxu0
        %v2378 = vadd.f32 0.0, %v2377
        %v2379 = vpop.f32.mrb[0].mxu0
        %2380 = vdwg.mxu0
        %v2382 = vsel %vm1235, %v2378, 0
        %2384 = vmatprep.subr.mxu0 0.0
        %2385 = vmatpush1.msra.mxu0 %v2048
        %2386 = vmatprep.subr.mxu0 0.0
        %2387 = vmatpush1.msra.mxu0 %v2049
        %2388 = vmatprep.subr.mxu0 0.0
        %2389 = vmatpush1.msra.mxu0 0.0
        %2390 = vmatprep.subr.mxu0 0.0
        %2391 = vmatpush1.msra.mxu0 0.0
        %2392 = vmatprep.subr.mxu0 0.0
        %2393 = vmatpush1.msra.mxu0 0.0
        %2394 = vmatprep.subr.mxu0 0.0
        %2395 = vmatpush1.msra.mxu0 0.0
        %2396 = vmatprep.subr.mxu0 0.0
        %2397 = vmatpush1.msra.mxu0 0.0
        %2398 = vmatprep.subr.mxu0 0.0
        %2399 = vmatpush1.msra.mxu0 0.0
        %2400 = vmatprep.subr.mxu0 0.0
        %2401 = vmatpush1.msra.mxu0 0.0
        %2402 = vmatprep.subr.mxu0 0.0
        %2403 = vmatpush1.msra.mxu0 0.0
        %2404 = vmatprep.subr.mxu0 0.0
        %2405 = vmatpush1.msra.mxu0 0.0
        %2406 = vmatprep.subr.mxu0 0.0
        %2407 = vmatpush1.msra.mxu0 0.0
        %2408 = vmatprep.subr.mxu0 0.0
        %2409 = vmatpush1.msra.mxu0 0.0
        %2410 = vmatprep.subr.mxu0 0.0
        %2411 = vmatpush1.msra.mxu0 0.0
        %2412 = vmatprep.subr.mxu0 0.0
        %2413 = vmatpush1.msra.mxu0 0.0
        %2414 = vmatprep.subr.mxu0 0.0
        %2415 = vmatpush1.msra.mxu0 0.0
        %2416 = vmatprep.subr.mxu0 0.0
        %2417 = vmatpush1.msra.mxu0 0.0
        %2418 = vmatprep.subr.mxu0 0.0
        %2419 = vmatpush1.msra.mxu0 0.0
        %2420 = vmatprep.subr.mxu0 0.0
        %2421 = vmatpush1.msra.mxu0 0.0
        %2422 = vmatprep.subr.mxu0 0.0
        %2423 = vmatpush1.msra.mxu0 0.0
        %2424 = vmatprep.subr.mxu0 0.0
        %2425 = vmatpush1.msra.mxu0 0.0
        %2426 = vmatprep.subr.mxu0 0.0
        %2427 = vmatpush1.msra.mxu0 0.0
        %2428 = vmatprep.subr.mxu0 0.0
        %2429 = vmatpush1.msra.mxu0 0.0
        %2430 = vmatprep.subr.mxu0 0.0
        %2431 = vmatpush1.msra.mxu0 0.0
        %2432 = vmatprep.subr.mxu0 0.0
        %2433 = vmatpush1.msra.mxu0 0.0
        %2434 = vmatprep.subr.mxu0 0.0
        %2435 = vmatpush1.msra.mxu0 0.0
        %2436 = vmatprep.subr.mxu0 0.0
        %2437 = vmatpush1.msra.mxu0 0.0
        %2438 = vmatprep.subr.mxu0 0.0
        %2439 = vmatpush1.msra.mxu0 0.0
        %2440 = vmatprep.subr.mxu0 0.0
        %2441 = vmatpush1.msra.mxu0 0.0
        %2442 = vmatprep.subr.mxu0 0.0
        %2443 = vmatpush1.msra.mxu0 0.0
        %2444 = vmatprep.subr.mxu0 0.0
        %2445 = vmatpush1.msra.mxu0 0.0
        %2446 = vmatprep.subr.mxu0 0.0
        %2447 = vmatpush1.msra.mxu0 0.0
        %2448 = vmatprep.mubr.f32.mxu0 0.0
        %2449 = vmatmul.mubr.f32.gmra.mrb[0].mxu0 %v2382
        %v2450 = vpop.f32.mrb[0].mxu0
        %v2451 = vadd.f32 0.0, %v2450
        %v2452 = vpop.f32.mrb[0].mxu0
        %2453 = vdwg.mxu0
        %v2455 = vsel %vm1235, %v2213, 0
        %2457 = vmatprep.subr.mxu0 0.0
        %2458 = vmatpush1.msra.mxu0 %v2046
        %2459 = vmatprep.subr.mxu0 0.0
        %2460 = vmatpush1.msra.mxu0 %v2047
        %2461 = vmatprep.subr.mxu0 0.0
        %2462 = vmatpush1.msra.mxu0 0.0
        %2463 = vmatprep.subr.mxu0 0.0
        %2464 = vmatpush1.msra.mxu0 0.0
        %2465 = vmatprep.subr.mxu0 0.0
        %2466 = vmatpush1.msra.mxu0 0.0
        %2467 = vmatprep.subr.mxu0 0.0
        %2468 = vmatpush1.msra.mxu0 0.0
        %2469 = vmatprep.subr.mxu0 0.0
        %2470 = vmatpush1.msra.mxu0 0.0
        %2471 = vmatprep.subr.mxu0 0.0
        %2472 = vmatpush1.msra.mxu0 0.0
        %2473 = vmatprep.subr.mxu0 0.0
        %2474 = vmatpush1.msra.mxu0 0.0
        %2475 = vmatprep.subr.mxu0 0.0
        %2476 = vmatpush1.msra.mxu0 0.0
        %2477 = vmatprep.subr.mxu0 0.0
        %2478 = vmatpush1.msra.mxu0 0.0
        %2479 = vmatprep.subr.mxu0 0.0
        %2480 = vmatpush1.msra.mxu0 0.0
        %2481 = vmatprep.subr.mxu0 0.0
        %2482 = vmatpush1.msra.mxu0 0.0
        %2483 = vmatprep.subr.mxu0 0.0
        %2484 = vmatpush1.msra.mxu0 0.0
        %2485 = vmatprep.subr.mxu0 0.0
        %2486 = vmatpush1.msra.mxu0 0.0
        %2487 = vmatprep.subr.mxu0 0.0
        %2488 = vmatpush1.msra.mxu0 0.0
        %2489 = vmatprep.subr.mxu0 0.0
        %2490 = vmatpush1.msra.mxu0 0.0
        %2491 = vmatprep.subr.mxu0 0.0
        %2492 = vmatpush1.msra.mxu0 0.0
        %2493 = vmatprep.subr.mxu0 0.0
        %2494 = vmatpush1.msra.mxu0 0.0
        %2495 = vmatprep.subr.mxu0 0.0
        %2496 = vmatpush1.msra.mxu0 0.0
        %2497 = vmatprep.subr.mxu0 0.0
        %2498 = vmatpush1.msra.mxu0 0.0
        %2499 = vmatprep.subr.mxu0 0.0
        %2500 = vmatpush1.msra.mxu0 0.0
        %2501 = vmatprep.subr.mxu0 0.0
        %2502 = vmatpush1.msra.mxu0 0.0
        %2503 = vmatprep.subr.mxu0 0.0
        %2504 = vmatpush1.msra.mxu0 0.0
        %2505 = vmatprep.subr.mxu0 0.0
        %2506 = vmatpush1.msra.mxu0 0.0
        %2507 = vmatprep.subr.mxu0 0.0
        %2508 = vmatpush1.msra.mxu0 0.0
        %2509 = vmatprep.subr.mxu0 0.0
        %2510 = vmatpush1.msra.mxu0 0.0
        %2511 = vmatprep.subr.mxu0 0.0
        %2512 = vmatpush1.msra.mxu0 0.0
        %2513 = vmatprep.subr.mxu0 0.0
        %2514 = vmatpush1.msra.mxu0 0.0
        %2515 = vmatprep.subr.mxu0 0.0
        %2516 = vmatpush1.msra.mxu0 0.0
        %2517 = vmatprep.subr.mxu0 0.0
        %2518 = vmatpush1.msra.mxu0 0.0
        %2519 = vmatprep.subr.mxu0 0.0
        %2520 = vmatpush1.msra.mxu0 0.0
        %2521 = vmatprep.mubr.f32.mxu0 0.0
        %2522 = vmatmul.mubr.f32.gmra.mrb[0].mxu0 %v2455
        %v2523 = vpop.f32.mrb[0].mxu0
        %v2524 = vadd.f32 %v2451, %v2523
        %v2525 = vpop.f32.mrb[0].mxu0
        %2526 = vdwg.mxu0
        %s2527 = scalar_lea.vmem [#allocation8], 1
        %v2528 = vld [vmem:[%s2527] sm:$0x1]
        %v2530 = vlaneseq
        %v2531 = vshrl.u32 %v2530, 7
        %v2532 = vsub.s32 0, %v2531
        %v2533 = vrot.slane %v2528, %v2532
        %v2535 = vadd.f32 %v2524, %v2533
        %v2536 = vadd.f32 %v2535, %v1958
        %s2537 = scalar_lea.vmem [#allocation10], 1
        %v2538 = vld [vmem:[%s2537] sm:$0x1]
        %s2539 = scalar_lea.vmem [#allocation11], 1
        %v2540 = vld [vmem:[%s2539] sm:$0x1]
        %v2541 = vsel %vm1104, %v2536, 0.0
        %2542 = vadd.xlane.f32.xlu0 %v2541
        %v2543 = vpop.xlane.xlu0 %2542
        %v2544 = vmul.f32 %v2543, %v1108
        %v2545 = vsub.f32 %v2536, %v2544
        %v2546 = vmul.f32 %v2545, %v2545
        %v2547 = vsel %vm1104, %v2546, 0.0
        %2548 = vadd.xlane.f32.xlu0 %v2547
        %v2549 = vpop.xlane.xlu0 %2548
        %v2550 = vmul.f32 %v2549, %v1108
        %v2551 = vadd.f32 %v2550, 1e-12
        %v2552 = vrsqrt.pop %v2551
        %v2553 = vmul.f32 %v2545, %v2552
        %v2555 = vlaneseq
        %v2556 = vshrl.u32 %v2555, 7
        %v2557 = vsub.s32 0, %v2556
        %v2558 = vrot.slane %v2538, %v2557
        %v2560 = vmul.f32 %v2553, %v2558
        %v2562 = vlaneseq
        %v2563 = vshrl.u32 %v2562, 7
        %v2564 = vsub.s32 0, %v2563
        %v2565 = vrot.slane %v2540, %v2564
        %v2567 = vadd.f32 %v2560, %v2565
        %s2568 = scalar_lea.vmem %s14, 32
        %v2569 = vld [vmem:[%s2568] sm:$0xff]
        %v2570 = vld [vmem:[%s2568 + $0x8] sm:$0xff]
        %v2571 = vld [vmem:[%s2568 + $0x10] sm:$0xff]
        %v2572 = vld [vmem:[%s2568 + $0x18] sm:$0xff]
        %s2573 = scalar_lea.vmem [#allocation13], 1
        %v2574 = vld [vmem:[%s2573] sm:$0x1]
        %v2576 = vlaneseq
        %v2577 = vshrl.u32 %v2576, 7
        %v2578 = vsub.s32 0, %v2577
        %v2579 = vrot.slane %v2574, %v2578
        %v2582 = vsel %vm1104, %v2567, 0
        %2584 = vmatprep.subr.mxu0 0.0
        %2585 = vmatpush1.msra.mxu0 %v2569
        %2586 = vmatprep.subr.mxu0 0.0
        %2587 = vmatpush1.msra.mxu0 %v2570
        %2588 = vmatprep.subr.mxu0 0.0
        %2589 = vmatpush1.msra.mxu0 %v2571
        %2590 = vmatprep.subr.mxu0 0.0
        %2591 = vmatpush1.msra.mxu0 %v2572
        %2592 = vmatprep.subr.mxu0 0.0
        %2593 = vmatpush1.msra.mxu0 0.0
        %2594 = vmatprep.subr.mxu0 0.0
        %2595 = vmatpush1.msra.mxu0 0.0
        %2596 = vmatprep.subr.mxu0 0.0
        %2597 = vmatpush1.msra.mxu0 0.0
        %2598 = vmatprep.subr.mxu0 0.0
        %2599 = vmatpush1.msra.mxu0 0.0
        %2600 = vmatprep.subr.mxu0 0.0
        %2601 = vmatpush1.msra.mxu0 0.0
        %2602 = vmatprep.subr.mxu0 0.0
        %2603 = vmatpush1.msra.mxu0 0.0
        %2604 = vmatprep.subr.mxu0 0.0
        %2605 = vmatpush1.msra.mxu0 0.0
        %2606 = vmatprep.subr.mxu0 0.0
        %2607 = vmatpush1.msra.mxu0 0.0
        %2608 = vmatprep.subr.mxu0 0.0
        %2609 = vmatpush1.msra.mxu0 0.0
        %2610 = vmatprep.subr.mxu0 0.0
        %2611 = vmatpush1.msra.mxu0 0.0
        %2612 = vmatprep.subr.mxu0 0.0
        %2613 = vmatpush1.msra.mxu0 0.0
        %2614 = vmatprep.subr.mxu0 0.0
        %2615 = vmatpush1.msra.mxu0 0.0
        %2616 = vmatprep.subr.mxu0 0.0
        %2617 = vmatpush1.msra.mxu0 0.0
        %2618 = vmatprep.subr.mxu0 0.0
        %2619 = vmatpush1.msra.mxu0 0.0
        %2620 = vmatprep.subr.mxu0 0.0
        %2621 = vmatpush1.msra.mxu0 0.0
        %2622 = vmatprep.subr.mxu0 0.0
        %2623 = vmatpush1.msra.mxu0 0.0
        %2624 = vmatprep.subr.mxu0 0.0
        %2625 = vmatpush1.msra.mxu0 0.0
        %2626 = vmatprep.subr.mxu0 0.0
        %2627 = vmatpush1.msra.mxu0 0.0
        %2628 = vmatprep.subr.mxu0 0.0
        %2629 = vmatpush1.msra.mxu0 0.0
        %2630 = vmatprep.subr.mxu0 0.0
        %2631 = vmatpush1.msra.mxu0 0.0
        %2632 = vmatprep.subr.mxu0 0.0
        %2633 = vmatpush1.msra.mxu0 0.0
        %2634 = vmatprep.subr.mxu0 0.0
        %2635 = vmatpush1.msra.mxu0 0.0
        %2636 = vmatprep.subr.mxu0 0.0
        %2637 = vmatpush1.msra.mxu0 0.0
        %2638 = vmatprep.subr.mxu0 0.0
        %2639 = vmatpush1.msra.mxu0 0.0
        %2640 = vmatprep.subr.mxu0 0.0
        %2641 = vmatpush1.msra.mxu0 0.0
        %2642 = vmatprep.subr.mxu0 0.0
        %2643 = vmatpush1.msra.mxu0 0.0
        %2644 = vmatprep.subr.mxu0 0.0
        %2645 = vmatpush1.msra.mxu0 0.0
        %2646 = vmatprep.subr.mxu0 0.0
        %2647 = vmatpush1.msra.mxu0 0.0
        %2648 = vmatprep.mubr.f32.mxu0 0.0
        %2649 = vmatmul.mubr.f32.gmra.mrb[0].mxu0 %v2582
        %v2650 = vpop.f32.mrb[0].mxu0
        %v2651 = vadd.f32 %v2579, %v2650
        %v2652 = vpop.f32.mrb[0].mxu0
        %2653 = vdwg.mxu0
        %v2654 = vmul.f32 %v2651, %v2651
        %v2655 = vmul.f32 %v2651, %v2654
        %v2656 = vmul.f32 %v2655, 0.044715
        %v2657 = vadd.f32 %v2651, %v2656
        %v2658 = vmul.f32 %v2657, 0.7978846
        %v2659 = vtanh.pop %v2658
        %v2660 = vadd.f32 %v2659, 1.0
        %v2661 = vmul.f32 %v2660, 0.5
        %v2662 = vmul.f32 %v2651, %v2661
        %s2663 = scalar_lea.vmem %s16, 64
        %v2664 = vld [vmem:[%s2663] sm:$0xff]
        %v2665 = vld [vmem:[%s2663 + $0x8] sm:$0xff]
        %v2666 = vld [vmem:[%s2663 + $0x10] sm:$0xff]
        %v2667 = vld [vmem:[%s2663 + $0x18] sm:$0xff]
        %v2668 = vld [vmem:[%s2663 + $0x20] sm:$0xff]
        %v2669 = vld [vmem:[%s2663 + $0x28] sm:$0xff]
        %v2670 = vld [vmem:[%s2663 + $0x30] sm:$0xff]
        %v2671 = vld [vmem:[%s2663 + $0x38] sm:$0xff]
        %s2672 = scalar_lea.vmem [#allocation14], 1
        %v2673 = vld [vmem:[%s2672] sm:$0x1]
        %v2675 = vlaneseq
        %v2676 = vshrl.u32 %v2675, 7
        %v2677 = vsub.s32 0, %v2676
        %v2678 = vrot.slane %v2673, %v2677
        %v2681 = vsel %vm1855, %v2662, 0
        %2683 = vmatprep.subr.mxu0 0.0
        %2684 = vmatpush1.msra.mxu0 %v2664
        %2685 = vmatprep.subr.mxu0 0.0
        %2686 = vmatpush1.msra.mxu0 %v2665
        %2687 = vmatprep.subr.mxu0 0.0
        %2688 = vmatpush1.msra.mxu0 %v2666
        %2689 = vmatprep.subr.mxu0 0.0
        %2690 = vmatpush1.msra.mxu0 %v2667
        %2691 = vmatprep.subr.mxu0 0.0
        %2692 = vmatpush1.msra.mxu0 %v2668
        %2693 = vmatprep.subr.mxu0 0.0
        %2694 = vmatpush1.msra.mxu0 %v2669
        %2695 = vmatprep.subr.mxu0 0.0
        %2696 = vmatpush1.msra.mxu0 %v2670
        %2697 = vmatprep.subr.mxu0 0.0
        %2698 = vmatpush1.msra.mxu0 %v2671
        %2699 = vmatprep.subr.mxu0 0.0
        %2700 = vmatpush1.msra.mxu0 0.0
        %2701 = vmatprep.subr.mxu0 0.0
        %2702 = vmatpush1.msra.mxu0 0.0
        %2703 = vmatprep.subr.mxu0 0.0
        %2704 = vmatpush1.msra.mxu0 0.0
        %2705 = vmatprep.subr.mxu0 0.0
        %2706 = vmatpush1.msra.mxu0 0.0
        %2707 = vmatprep.subr.mxu0 0.0
        %2708 = vmatpush1.msra.mxu0 0.0
        %2709 = vmatprep.subr.mxu0 0.0
        %2710 = vmatpush1.msra.mxu0 0.0
        %2711 = vmatprep.subr.mxu0 0.0
        %2712 = vmatpush1.msra.mxu0 0.0
        %2713 = vmatprep.subr.mxu0 0.0
        %2714 = vmatpush1.msra.mxu0 0.0
        %2715 = vmatprep.subr.mxu0 0.0
        %2716 = vmatpush1.msra.mxu0 0.0
        %2717 = vmatprep.subr.mxu0 0.0
        %2718 = vmatpush1.msra.mxu0 0.0
        %2719 = vmatprep.subr.mxu0 0.0
        %2720 = vmatpush1.msra.mxu0 0.0
        %2721 = vmatprep.subr.mxu0 0.0
        %2722 = vmatpush1.msra.mxu0 0.0
        %2723 = vmatprep.subr.mxu0 0.0
        %2724 = vmatpush1.msra.mxu0 0.0
        %2725 = vmatprep.subr.mxu0 0.0
        %2726 = vmatpush1.msra.mxu0 0.0
        %2727 = vmatprep.subr.mxu0 0.0
        %2728 = vmatpush1.msra.mxu0 0.0
        %2729 = vmatprep.subr.mxu0 0.0
        %2730 = vmatpush1.msra.mxu0 0.0
        %2731 = vmatprep.subr.mxu0 0.0
        %2732 = vmatpush1.msra.mxu0 0.0
        %2733 = vmatprep.subr.mxu0 0.0
        %2734 = vmatpush1.msra.mxu0 0.0
        %2735 = vmatprep.subr.mxu0 0.0
        %2736 = vmatpush1.msra.mxu0 0.0
        %2737 = vmatprep.subr.mxu0 0.0
        %2738 = vmatpush1.msra.mxu0 0.0
        %2739 = vmatprep.subr.mxu0 0.0
        %2740 = vmatpush1.msra.mxu0 0.0
        %2741 = vmatprep.subr.mxu0 0.0
        %2742 = vmatpush1.msra.mxu0 0.0
        %2743 = vmatprep.subr.mxu0 0.0
        %2744 = vmatpush1.msra.mxu0 0.0
        %2745 = vmatprep.subr.mxu0 0.0
        %2746 = vmatpush1.msra.mxu0 0.0
        %2747 = vmatprep.mubr.f32.mxu0 0.0
        %2748 = vmatmul.mubr.f32.gmra.mrb[0].mxu0 %v2681
        %v2749 = vpop.f32.mrb[0].mxu0
        %v2750 = vadd.f32 %v2678, %v2749
        %v2751 = vpop.f32.mrb[0].mxu0
        %2752 = vdwg.mxu0
        %v2753 = vadd.f32 %v2750, %v2567
        %s2754 = scalar_lea.vmem [#allocation16], 1
        %v2755 = vld [vmem:[%s2754] sm:$0x1]
        %s2756 = scalar_lea.vmem [#allocation17], 1
        %v2757 = vld [vmem:[%s2756] sm:$0x1]
        %v2758 = vsel %vm1104, %v2753, 0.0
        %2759 = vadd.xlane.f32.xlu0 %v2758
        %v2760 = vpop.xlane.xlu0 %2759
        %v2761 = vmul.f32 %v2760, %v1108
        %v2762 = vsub.f32 %v2753, %v2761
        %v2763 = vmul.f32 %v2762, %v2762
        %v2764 = vsel %vm1104, %v2763, 0.0
        %2765 = vadd.xlane.f32.xlu0 %v2764
        %v2766 = vpop.xlane.xlu0 %2765
        %v2767 = vmul.f32 %v2766, %v1108
        %v2768 = vadd.f32 %v2767, 1e-12
        %v2769 = vrsqrt.pop %v2768
        %v2770 = vmul.f32 %v2762, %v2769
        %v2772 = vlaneseq
        %v2773 = vshrl.u32 %v2772, 7
        %v2774 = vsub.s32 0, %v2773
        %v2775 = vrot.slane %v2755, %v2774
        %v2777 = vmul.f32 %v2770, %v2775
        %v2779 = vlaneseq
        %v2780 = vshrl.u32 %v2779, 7
        %v2781 = vsub.s32 0, %v2780
        %v2782 = vrot.slane %v2757, %v2781
        %v2784 = vadd.f32 %v2777, %v2782
        %v2785 = vld [vmem:[%s20] sm:$0xff]
        %v2786 = vld [vmem:[%s20 + $0x8] sm:$0xff]
        %v2787 = vld [vmem:[%s20 + $0x10] sm:$0xff]
        %v2788 = vld [vmem:[%s20 + $0x18] sm:$0xff]
        %v2789 = vld [vmem:[#allocation19] sm:$0x1]
        %v2791 = vsel %vm1104, %v2784, 0
        %2793 = vmatprep.subr.mxu0 0.0
        %2794 = vmatpush1.msra.mxu0 %v2785
        %2795 = vmatprep.subr.mxu0 0.0
        %2796 = vmatpush1.msra.mxu0 %v2786
        %2797 = vmatprep.subr.mxu0 0.0
        %2798 = vmatpush1.msra.mxu0 %v2787
        %2799 = vmatprep.subr.mxu0 0.0
        %2800 = vmatpush1.msra.mxu0 %v2788
        %2801 = vmatprep.subr.mxu0 0.0
        %2802 = vmatpush1.msra.mxu0 0.0
        %2803 = vmatprep.subr.mxu0 0.0
        %2804 = vmatpush1.msra.mxu0 0.0
        %2805 = vmatprep.subr.mxu0 0.0
        %2806 = vmatpush1.msra.mxu0 0.0
        %2807 = vmatprep.subr.mxu0 0.0
        %2808 = vmatpush1.msra.mxu0 0.0
        %2809 = vmatprep.subr.mxu0 0.0
        %2810 = vmatpush1.msra.mxu0 0.0
        %2811 = vmatprep.subr.mxu0 0.0
        %2812 = vmatpush1.msra.mxu0 0.0
        %2813 = vmatprep.subr.mxu0 0.0
        %2814 = vmatpush1.msra.mxu0 0.0
        %2815 = vmatprep.subr.mxu0 0.0
        %2816 = vmatpush1.msra.mxu0 0.0
        %2817 = vmatprep.subr.mxu0 0.0
        %2818 = vmatpush1.msra.mxu0 0.0
        %2819 = vmatprep.subr.mxu0 0.0
        %2820 = vmatpush1.msra.mxu0 0.0
        %2821 = vmatprep.subr.mxu0 0.0
        %2822 = vmatpush1.msra.mxu0 0.0
        %2823 = vmatprep.subr.mxu0 0.0
        %2824 = vmatpush1.msra.mxu0 0.0
        %2825 = vmatprep.subr.mxu0 0.0
        %2826 = vmatpush1.msra.mxu0 0.0
        %2827 = vmatprep.subr.mxu0 0.0
        %2828 = vmatpush1.msra.mxu0 0.0
        %2829 = vmatprep.subr.mxu0 0.0
        %2830 = vmatpush1.msra.mxu0 0.0
        %2831 = vmatprep.subr.mxu0 0.0
        %2832 = vmatpush1.msra.mxu0 0.0
        %2833 = vmatprep.subr.mxu0 0.0
        %2834 = vmatpush1.msra.mxu0 0.0
        %2835 = vmatprep.subr.mxu0 0.0
        %2836 = vmatpush1.msra.mxu0 0.0
        %2837 = vmatprep.subr.mxu0 0.0
        %2838 = vmatpush1.msra.mxu0 0.0
        %2839 = vmatprep.subr.mxu0 0.0
        %2840 = vmatpush1.msra.mxu0 0.0
        %2841 = vmatprep.subr.mxu0 0.0
        %2842 = vmatpush1.msra.mxu0 0.0
        %2843 = vmatprep.subr.mxu0 0.0
        %2844 = vmatpush1.msra.mxu0 0.0
        %2845 = vmatprep.subr.mxu0 0.0
        %2846 = vmatpush1.msra.mxu0 0.0
        %2847 = vmatprep.subr.mxu0 0.0
        %2848 = vmatpush1.msra.mxu0 0.0
        %2849 = vmatprep.subr.mxu0 0.0
        %2850 = vmatpush1.msra.mxu0 0.0
        %2851 = vmatprep.subr.mxu0 0.0
        %2852 = vmatpush1.msra.mxu0 0.0
        %2853 = vmatprep.subr.mxu0 0.0
        %2854 = vmatpush1.msra.mxu0 0.0
        %2855 = vmatprep.subr.mxu0 0.0
        %2856 = vmatpush1.msra.mxu0 0.0
        %2857 = vmatprep.mubr.f32.mxu0 0.0
        %2858 = vmatmul.mubr.f32.gmra.mrb[0].mxu0 %v2791
        %v2859 = vpop.f32.mrb[0].mxu0
        %v2860 = vadd.f32 %v2789, %v2859
        %v2861 = vpop.f32.mrb[0].mxu0
        %2862 = vdwg.mxu0
        %v2863 = vtanh.pop %v2860
        %v2864 = vld [vmem:[%s22] sm:$0xff]
        %v2865 = vld [vmem:[%s22 + $0x8] sm:$0xff]
        %v2866 = vld [vmem:[%s22 + $0x10] sm:$0xff]
        %v2867 = vld [vmem:[%s22 + $0x18] sm:$0xff]
        %v2868 = vld [vmem:[#allocation20] sm:$0x1]
        %v2870 = vsel %vm1104, %v2863, 0
        %2872 = vmatprep.subr.mxu0 0.0
        %2873 = vmatpush1.msra.mxu0 %v2864
        %2874 = vmatprep.subr.mxu0 0.0
        %2875 = vmatpush1.msra.mxu0 %v2865
        %2876 = vmatprep.subr.mxu0 0.0
        %2877 = vmatpush1.msra.mxu0 %v2866
        %2878 = vmatprep.subr.mxu0 0.0
        %2879 = vmatpush1.msra.mxu0 %v2867
        %2880 = vmatprep.subr.mxu0 0.0
        %2881 = vmatpush1.msra.mxu0 0.0
        %2882 = vmatprep.subr.mxu0 0.0
        %2883 = vmatpush1.msra.mxu0 0.0
        %2884 = vmatprep.subr.mxu0 0.0
        %2885 = vmatpush1.msra.mxu0 0.0
        %2886 = vmatprep.subr.mxu0 0.0
        %2887 = vmatpush1.msra.mxu0 0.0
        %2888 = vmatprep.subr.mxu0 0.0
        %2889 = vmatpush1.msra.mxu0 0.0
        %2890 = vmatprep.subr.mxu0 0.0
        %2891 = vmatpush1.msra.mxu0 0.0
        %2892 = vmatprep.subr.mxu0 0.0
        %2893 = vmatpush1.msra.mxu0 0.0
        %2894 = vmatprep.subr.mxu0 0.0
        %2895 = vmatpush1.msra.mxu0 0.0
        %2896 = vmatprep.subr.mxu0 0.0
        %2897 = vmatpush1.msra.mxu0 0.0
        %2898 = vmatprep.subr.mxu0 0.0
        %2899 = vmatpush1.msra.mxu0 0.0
        %2900 = vmatprep.subr.mxu0 0.0
        %2901 = vmatpush1.msra.mxu0 0.0
        %2902 = vmatprep.subr.mxu0 0.0
        %2903 = vmatpush1.msra.mxu0 0.0
        %2904 = vmatprep.subr.mxu0 0.0
        %2905 = vmatpush1.msra.mxu0 0.0
        %2906 = vmatprep.subr.mxu0 0.0
        %2907 = vmatpush1.msra.mxu0 0.0
        %2908 = vmatprep.subr.mxu0 0.0
        %2909 = vmatpush1.msra.mxu0 0.0
        %2910 = vmatprep.subr.mxu0 0.0
        %2911 = vmatpush1.msra.mxu0 0.0
        %2912 = vmatprep.subr.mxu0 0.0
        %2913 = vmatpush1.msra.mxu0 0.0
        %2914 = vmatprep.subr.mxu0 0.0
        %2915 = vmatpush1.msra.mxu0 0.0
        %2916 = vmatprep.subr.mxu0 0.0
        %2917 = vmatpush1.msra.mxu0 0.0
        %2918 = vmatprep.subr.mxu0 0.0
        %2919 = vmatpush1.msra.mxu0 0.0
        %2920 = vmatprep.subr.mxu0 0.0
        %2921 = vmatpush1.msra.mxu0 0.0
        %2922 = vmatprep.subr.mxu0 0.0
        %2923 = vmatpush1.msra.mxu0 0.0
        %2924 = vmatprep.subr.mxu0 0.0
        %2925 = vmatpush1.msra.mxu0 0.0
        %2926 = vmatprep.subr.mxu0 0.0
        %2927 = vmatpush1.msra.mxu0 0.0
        %2928 = vmatprep.subr.mxu0 0.0
        %2929 = vmatpush1.msra.mxu0 0.0
        %2930 = vmatprep.subr.mxu0 0.0
        %2931 = vmatpush1.msra.mxu0 0.0
        %2932 = vmatprep.subr.mxu0 0.0
        %2933 = vmatpush1.msra.mxu0 0.0
        %2934 = vmatprep.subr.mxu0 0.0
        %2935 = vmatpush1.msra.mxu0 0.0
        %2936 = vmatprep.mubr.f32.mxu0 0.0
        %2937 = vmatmul.mubr.f32.gmra.mrb[0].mxu0 %v2870
        %v2938 = vpop.f32.mrb[0].mxu0
        %v2939 = vadd.f32 %v2868, %v2938
        %v2940 = vpop.f32.mrb[0].mxu0
        %2941 = vdwg.mxu0
        %v2942 = vxor.u32 %v2939, 2147483648
        %v2943 = vmul.f32 %v2942, 1.442695
        %v2944 = vpow.pop %v2943
        %v2945 = vadd.f32 %v2944, 1.0
        %v2946 = vrcp.pop %v2945
        %v2947 = vmul.f32 1.0, %v2946
        %2948 = vst [vmem:[%s918] sm:$0x1] %v2947
        %s2949 = sand.u32 %s572, 1
        %s2950 = scalar_lea.sflag [#allocation4], %s2949
        %s2951 = sand.u32 %s572, 1
        %s2952 = scalar_lea.vmem [#allocation22], %s2951
        // Predicated region
        $region165: #{bert_multilabel_forward.1} parent=115 // pred_check
          %p2953 = pneg %p582
        $region166: #{bert_multilabel_forward.1} parent=115 // pred_check_branch
          %2955 = sbr.rel (%p2953) target = $region168
        $region167: #{bert_multilabel_forward.1} parent=115 // pred_region
          %s2957 = ssub.s32 16, 16
          %2958 = vsyncadd %s2950, %s2957
          %s2959 = smul.addr %s45, 16
          %s2960 = scalar_lea.hbm %s24, %s2959
          %s2962 = sshll.u32 %s2952, 4
          %s2963 = int_to_ptr.vmem [resolvable:$true] %s2962
          %2965 = dma.vmem_to_hbm [thread:$0]  %s2963, 16, %s2960, %s2950
        $region168: #{bert_multilabel_forward.1} parent=115 // pred_fallthru
          _
      $region116: #{bert_multilabel_forward.1} parent=5 // pred_fallthru
        _
      %p2966 = scmp.le.s32.totalorder 2, %s40
      // Predicated region
      $region169: #{bert_multilabel_forward.1} parent=5 // pred_check
        %p2967 = pneg %p2966
      $region170: #{bert_multilabel_forward.1} parent=5 // pred_check_branch
        %2969 = sbr.rel (%p2967) target = $region172
      $region171: #{bert_multilabel_forward.1} parent=5 // pred_region
        %s2970 = ssub.s32 %s40, 2
        // Predicated region
        $region173: #{bert_multilabel_forward.1} parent=171 // pred_check
          %p2971 = pneg %p588
        $region174: #{bert_multilabel_forward.1} parent=171 // pred_check_branch
          %2973 = sbr.rel (%p2971) target = $region176
        $region175: #{bert_multilabel_forward.1} parent=171 // pred_region
          %s2974 = sand.u32 %s573, 1
          %s2975 = scalar_lea.sflag [#allocation4], %s2974
          %s2976 = sand.u32 %s573, 1
          %s2977 = scalar_lea.vmem [#allocation22], %s2976
          %2978 = dma.done %s2975, 16
        $region176: #{bert_multilabel_forward.1} parent=171 // pred_fallthru
          _
      $region172: #{bert_multilabel_forward.1} parent=5 // pred_fallthru
        _
    $region6: #{bert_multilabel_forward.1} parent=1 // loop_footer
      %s44 = sadd.s32 1, %s40
    $region7: #{bert_multilabel_forward.1} parent=1 // loop_footer_branch
      %39 = sbr.rel target = $region3
    $region8: #{bert_multilabel_forward.1} parent=1 // loop_exit
      _
    %2979 = vsyncpa [#allocation3], 1
    %s2980 = scalar_lea.sflag [#allocation3], 1
    %2981 = vsyncpa %s2980, 1
    %2982 = vsyncpa [#allocation6], 1
    %2983 = vsyncpa [#allocation9], 1
    %2984 = vsyncpa [#allocation12], 1
    %2985 = vsyncpa [#allocation15], 1
    %2986 = vsyncpa [#allocation18], 1
    %2987 = vsyncpa [#allocation21], 1
    %2988 = vsyncpa [#allocation4], 1
    %s2989 = scalar_lea.sflag [#allocation4], 1
    %2990 = vsyncpa %s2989, 1

</llo_original>
